<compile_context>
chip_gen: v7x
topology: tpu7x:2x2x1
jax: 0.10.0
libtpu: 0.0.40
codegen_flags: <defaults>
</compile_context>

<pallas_src>
import jax
import jax.numpy as jnp
from jax import lax
from jax.experimental import pallas as pl
from jax.experimental.pallas import tpu as pltpu

GLOBAL_VARIABLE = 40          # `global_variable` in the PyTorch module (token count for mlp1)
LN_EPS = 1e-5


def _layernorm(x, w, b, eps=LN_EPS):
    mu = jnp.mean(x, axis=-1, keepdims=True)
    var = jnp.mean((x - mu) ** 2, axis=-1, keepdims=True)      # biased, like torch LayerNorm
    return (x - mu) * lax.rsqrt(var + eps) * w + b


def _erf(x):
    # Abramowitz & Stegun 7.1.26 (max abs error 1.5e-7).  Built only from exp / abs /
    # where / divide, which all lower in Mosaic, so no dependence on lax.erf support.
    p = 0.3275911
    a1, a2, a3, a4, a5 = (0.254829592, -0.284496736, 1.421413741, -1.453152027, 1.061405429)
    sign = jnp.where(x >= 0.0, 1.0, -1.0)
    ax = jnp.abs(x)
    t = 1.0 / (1.0 + p * ax)
    poly = ((((a5 * t + a4) * t + a3) * t + a2) * t + a1) * t
    return sign * (1.0 - poly * jnp.exp(-(ax * ax)))


def _gelu_exact(x):
    # F.gelu default = exact (erf) gelu
    return 0.5 * x * (1.0 + _erf(x * 0.7071067811865476))


# --------------------------------------------------------------------------------------
# Kernel
# --------------------------------------------------------------------------------------
def tabmixer_kernel(x_ref,
                    ln1_w_ref, ln1_b_ref,
                    w1a_ref, b1a_ref, w1b_ref, b1b_ref,
                    w2a_ref, b2a_ref, w2b_ref, b2b_ref,
                    ln2_w_ref, ln2_b_ref,
                    o_ref):
    bt, s, d = x_ref.shape                                     # (block_b, 40, D)
    x2d = x_ref[...].reshape(bt * s, d)                        # (bt*40, D) f32

    # LayerNorm1 over the feature axis for all bt*40 rows at once (f32).
    y = _layernorm(x2d, ln1_w_ref[...], ln1_b_ref[...])

    # ---- mlp1 (token mixing).  Weights kept in PyTorch (out, in) orientation and used
    # on the LHS, so the contraction over the 40 tokens needs no in-kernel transposes.
    w1a = w1a_ref[...]                                         # (dff, 40) bf16
    w1b = w1b_ref[...]                                         # (40, dff) bf16
    b1a = b1a_ref[...]                                         # (dff, 1)  f32
    b1b = b1b_ref[...]                                         # (40, 1)   f32
    g_rows = []
    for b in range(bt):                                        # static unroll, bt is small
        y_b = y[b * s:(b + 1) * s, :].astype(jnp.bfloat16)     # (40, D) bf16
        h1 = jnp.maximum(
            jnp.dot(w1a, y_b, preferred_element_type=jnp.float32) + b1a, 0.0)    # (dff, D)
        z1 = jnp.dot(w1b, h1.astype(jnp.bfloat16),
                     preferred_element_type=jnp.float32) + b1b                   # (40, D)
        g_rows.append(z1)
    g = _gelu_exact(jnp.concatenate(g_rows, axis=0))           # (bt*40, D) f32

    # ---- mlp2 (feature mixing): one big matmul pair with M = bt*40 rows.
    y_bf = y.astype(jnp.bfloat16)
    h2 = jnp.maximum(
        jnp.dot(y_bf, w2a_ref[...], preferred_element_type=jnp.float32)
        + b2a_ref[...], 0.0)                                   # (bt*40, dff) f32
    z2 = jnp.dot(h2.astype(jnp.bfloat16), w2b_ref[...],
                 preferred_element_type=jnp.float32) + b2b_ref[...]              # (bt*40, D)

    # ---- combine, LayerNorm2, SiLU (EUP reciprocal), residual.
    m = z2 * g
    n = _layernorm(m, ln2_w_ref[...], ln2_b_ref[...])
    sig = pl.reciprocal(1.0 + jnp.exp(-n), approx=True)        # sigmoid via EUP vrcp
    out = n * sig + x2d
    o_ref[...] = out.reshape(bt, s, d).astype(o_ref.dtype)


# --------------------------------------------------------------------------------------
# pallas_call builder + wrapper
# --------------------------------------------------------------------------------------
def _tabmixer_call(bp, s, d, dff, dtype, block_b):
    grid_b = bp // block_b

    def const_spec(shape):
        # Constant block index => the pipeline DMAs these into VMEM exactly once.
        return pl.BlockSpec(shape, lambda b: (0, 0))

    in_specs = [
        pl.BlockSpec((block_b, s, d), lambda b: (b, 0, 0)),    # x tile
        const_spec((1, d)), const_spec((1, d)),                # LN1 w, b
        const_spec((dff, s)), const_spec((dff, 1)),            # mlp1 layer 1 (W, b)  [PyTorch orientation]
        const_spec((s, dff)), const_spec((s, 1)),              # mlp1 layer 2 (W, b)  [PyTorch orientation]
        const_spec((d, dff)), const_spec((1, dff)),            # mlp2 layer 1 (W^T, b)
        const_spec((dff, d)), const_spec((1, d)),              # mlp2 layer 2 (W^T, b)
        const_spec((1, d)), const_spec((1, d)),                # LN2 w, b
    ]
    out_spec = pl.BlockSpec((block_b, s, d), lambda b: (b, 0, 0))

    flops = 8 * bp * s * d * dff                               # four (40 x D x dff)-class matmuls
    transcendentals = 3 * bp * s * d                           # erf-exp + sigmoid-exp + reciprocal
    bytes_accessed = (2 * bp * s * d * 4                       # x in + out
                      + 2 * (2 * s * dff + 2 * d * dff)        # bf16 weights
                      + 4 * (dff + s + dff + d + 4 * d))       # biases + LN params (f32)

    return pl.pallas_call(
        tabmixer_kernel,
        out_shape=jax.ShapeDtypeStruct((bp, s, d), dtype),
        grid_spec=pltpu.PrefetchScalarGridSpec(
            num_scalar_prefetch=0,
            grid=(grid_b,),
            in_specs=in_specs,
            out_specs=out_spec,
        ),
        compiler_params=pltpu.CompilerParams(
            dimension_semantics=("parallel",),
            vmem_limit_bytes=48 * 1024 * 1024),
        cost_estimate=pl.CostEstimate(flops=flops,
                                      transcendentals=transcendentals,
                                      bytes_accessed=bytes_accessed),
    )


def tabmixer_forward(x, params, *, block_b=4):
    """x: (B, S, D) float32 with S >= 40.  Returns (B, 40, D) float32."""
    B, S0, D = x.shape
    # Glue: PyTorch's transpose / [..., :40] / transpose == truncate the token axis.
    if S0 > GLOBAL_VARIABLE:
        x = x[:, :GLOBAL_VARIABLE, :]
    S = x.shape[1]
    assert S == GLOBAL_VARIABLE, "TabMixer needs at least `global_variable` (=40) tokens"
    dff = params["w2a"].shape[1]

    # Batch tiling: several elements per grid step keep the MXU busy; cap block_b so the
    # grid length stays >= 2 when B >= 2 (both v7x TensorCores get work).
    block_b = max(1, min(block_b, pl.cdiv(B, 2)))
    grid_b = pl.cdiv(B, block_b)
    Bp = grid_b * block_b
    if Bp != B:
        x = jnp.pad(x, ((0, Bp - B), (0, 0), (0, 0)))

    bf16 = jnp.bfloat16
    args = (
        x,
        params["ln1_w"], params["ln1_b"],
        params["w1a"].astype(bf16), params["b1a"],
        params["w1b"].astype(bf16), params["b1b"],
        params["w2a"].astype(bf16), params["b2a"],
        params["w2b"].astype(bf16), params["b2b"],
        params["ln2_w"], params["ln2_b"],
    )
    out = _tabmixer_call(Bp, S, D, dff, x.dtype, block_b)(*args)
    return out[:B]


# --------------------------------------------------------------------------------------
# Pure-JAX reference (mirrors the PyTorch forward)
# --------------------------------------------------------------------------------------
def tabmixer_reference(x, params, *, bf16_matmul=False):
    """If bf16_matmul=True, matmul operands are cast to bf16 (mirrors the kernel's MXU feed)."""
    if x.shape[1] > GLOBAL_VARIABLE:
        x = x[:, :GLOBAL_VARIABLE, :]
    x3 = x
    f32 = jnp.float32
    cast = (lambda a: a.astype(jnp.bfloat16)) if bf16_matmul else (lambda a: a)

    y = _layernorm(x, params["ln1_w"], params["ln1_b"])

    # mlp1 (token mixing), PyTorch-orientation weights on the LHS of the contraction.
    h1 = jnp.maximum(
        jnp.einsum("fs,bsd->bfd", cast(params["w1a"]), cast(y),
                   preferred_element_type=f32) + params["b1a"], 0.0)
    z1 = jnp.einsum("sf,bfd->bsd", cast(params["w1b"]), cast(h1),
                    preferred_element_type=f32) + params["b1b"]
    g = _gelu_exact(z1)

    # mlp2 (feature mixing).
    h2 = jnp.maximum(
        jnp.einsum("bsd,df->bsf", cast(y), cast(params["w2a"]),
                   preferred_element_type=f32) + params["b2a"], 0.0)
    z2 = jnp.einsum("bsf,fd->bsd", cast(h2), cast(params["w2b"]),
                    preferred_element_type=f32) + params["b2b"]

    m = z2 * g
    n = _layernorm(m, params["ln2_w"], params["ln2_b"])
    return n * jax.nn.sigmoid(n) + x3


def init_params(key, dim1, dim_feedforward):
    """Deterministic synthetic parameters (shapes match the nn.Module __init__).

    mlp1 weights are kept in PyTorch (out_features, in_features) orientation (used on the
    LHS inside the kernel); mlp2 weights are stored pre-transposed so the kernel computes
    rows @ W.  Biases are shaped to broadcast in the layout they are used in.
    """
    S, D, F = GLOBAL_VARIABLE, dim1, dim_feedforward
    ks = jax.random.split(key, 4)

    def lin(k, fan_in, w_shape, b_shape):
        bound = 1.0 / (fan_in ** 0.5)
        kw, kb = jax.random.split(k)
        w = jax.random.uniform(kw, w_shape, jnp.float32, -bound, bound)
        b = jax.random.uniform(kb, b_shape, jnp.float32, -bound, bound)
        return w, b

    w1a, b1a = lin(ks[0], S, (F, S), (F, 1))     # mlp1: Linear(40, dff)
    w1b, b1b = lin(ks[1], F, (S, F), (S, 1))     # mlp1: Linear(dff, 40)
    w2a, b2a = lin(ks[2], D, (D, F), (1, F))     # mlp2: Linear(dim1, dff)   (stored as W.T)
    w2b, b2b = lin(ks[3], F, (F, D), (1, D))     # mlp2: Linear(dff, dim1)   (stored as W.T)

    return dict(
        ln1_w=jnp.ones((1, D), jnp.float32), ln1_b=jnp.zeros((1, D), jnp.float32),
        ln2_w=jnp.ones((1, D), jnp.float32), ln2_b=jnp.zeros((1, D), jnp.float32),
        w1a=w1a, b1a=b1a, w1b=w1b, b1b=b1b,
        w2a=w2a, b2a=b2a, w2b=w2b, b2b=b2b,
    )


if __name__ == "__main__":
    # D is a multiple of 128 (lane-dense stores); S > 40 exercises the token truncation.
    B, S, D, DFF = 8, 48, 128, 256
    key = jax.random.PRNGKey(0)
    kx, kp = jax.random.split(key)
    x = jax.random.normal(kx, (B, S, D), jnp.float32)
    params = init_params(kp, dim1=D, dim_feedforward=DFF)

    out = jax.block_until_ready(tabmixer_forward(x, params, block_b=4))
    assert out.shape == (B, GLOBAL_VARIABLE, D), out.shape

    # Tight check against a reference that mirrors the kernel's bf16 MXU operands
    # (remaining gap: EUP approx-reciprocal in the SiLU + accumulation order).
    ref_bf16 = jax.block_until_ready(tabmixer_reference(x, params, bf16_matmul=True))
    assert jnp.allclose(out, ref_bf16, rtol=3e-2, atol=3e-2), \
        float(jnp.max(jnp.abs(out - ref_bf16)))

    # Loose check against the exact f32 module semantics (bf16 MXU operands + approx
    # reciprocal account for the tolerance).
    ref_f32 = jax.block_until_ready(tabmixer_reference(x, params, bf16_matmul=False))
    assert jnp.allclose(out, ref_f32, rtol=1e-1, atol=1e-1), \
        float(jnp.max(jnp.abs(out - ref_f32)))

    print("KERNEL_OK")
</pallas_src>

<mosaic_0001>
module attributes {stable_mosaic.version = 11 : i64} {
  func.func @tabmixer_kernel(%arg0: i32, %arg1: memref<4x40x128xf32, #tpu.memory_space<vmem>>, %arg2: memref<1x128xf32, #tpu.memory_space<vmem>>, %arg3: memref<1x128xf32, #tpu.memory_space<vmem>>, %arg4: memref<256x40xbf16, #tpu.memory_space<vmem>>, %arg5: memref<256x1xf32, #tpu.memory_space<vmem>>, %arg6: memref<40x256xbf16, #tpu.memory_space<vmem>>, %arg7: memref<40x1xf32, #tpu.memory_space<vmem>>, %arg8: memref<128x256xbf16, #tpu.memory_space<vmem>>, %arg9: memref<1x256xf32, #tpu.memory_space<vmem>>, %arg10: memref<256x128xbf16, #tpu.memory_space<vmem>>, %arg11: memref<1x128xf32, #tpu.memory_space<vmem>>, %arg12: memref<1x128xf32, #tpu.memory_space<vmem>>, %arg13: memref<1x128xf32, #tpu.memory_space<vmem>>, %arg14: memref<4x40x128xf32, #tpu.memory_space<vmem>>) attributes {dimension_semantics = [#tpu.dimension_semantics<parallel>], iteration_bounds = array<i64: 2>, scalar_prefetch = 0 : i64, scratch_operands = 0 : i64, tpu.core_type = #tpu.core_type<tc>, window_params = [{transform_indices = @transform_0, window_bounds = array<i64: 4, 40, 128>}, {pipeline_mode = #tpu.pipeline_mode<synchronous>, transform_indices = @transform_1, window_bounds = array<i64: 1, 128>}, {pipeline_mode = #tpu.pipeline_mode<synchronous>, transform_indices = @transform_2, window_bounds = array<i64: 1, 128>}, {pipeline_mode = #tpu.pipeline_mode<synchronous>, transform_indices = @transform_3, window_bounds = array<i64: 256, 40>}, {pipeline_mode = #tpu.pipeline_mode<synchronous>, transform_indices = @transform_4, window_bounds = array<i64: 256, 1>}, {pipeline_mode = #tpu.pipeline_mode<synchronous>, transform_indices = @transform_5, window_bounds = array<i64: 40, 256>}, {pipeline_mode = #tpu.pipeline_mode<synchronous>, transform_indices = @transform_6, window_bounds = array<i64: 40, 1>}, {pipeline_mode = #tpu.pipeline_mode<synchronous>, transform_indices = @transform_7, window_bounds = array<i64: 128, 256>}, {pipeline_mode = #tpu.pipeline_mode<synchronous>, transform_indices = @transform_8, window_bounds = array<i64: 1, 256>}, {pipeline_mode = #tpu.pipeline_mode<synchronous>, transform_indices = @transform_9, window_bounds = array<i64: 256, 128>}, {pipeline_mode = #tpu.pipeline_mode<synchronous>, transform_indices = @transform_10, window_bounds = array<i64: 1, 128>}, {pipeline_mode = #tpu.pipeline_mode<synchronous>, transform_indices = @transform_11, window_bounds = array<i64: 1, 128>}, {pipeline_mode = #tpu.pipeline_mode<synchronous>, transform_indices = @transform_12, window_bounds = array<i64: 1, 128>}, {transform_indices = @transform_13, window_bounds = array<i64: 4, 40, 128>}]} {
    %c0 = arith.constant 0 : index
    %c0_0 = arith.constant 0 : index
    %c0_1 = arith.constant 0 : index
    %0 = vector.load %arg1[%c0, %c0_0, %c0_1] : memref<4x40x128xf32, #tpu.memory_space<vmem>>, vector<4x40x128xf32>
    %1 = vector.shape_cast %0 : vector<4x40x128xf32> to vector<160x128xf32>
    %c0_2 = arith.constant 0 : index
    %c0_3 = arith.constant 0 : index
    %2 = vector.load %arg2[%c0_2, %c0_3] : memref<1x128xf32, #tpu.memory_space<vmem>>, vector<1x128xf32>
    %c0_4 = arith.constant 0 : index
    %c0_5 = arith.constant 0 : index
    %3 = vector.load %arg3[%c0_4, %c0_5] : memref<1x128xf32, #tpu.memory_space<vmem>>, vector<1x128xf32>
    %cst = arith.constant dense<0.000000e+00> : vector<160xf32>
    %4 = vector.multi_reduction <add>, %1, %cst [1] : vector<160x128xf32> to vector<160xf32>
    %5 = vector.shape_cast %4 : vector<160xf32> to vector<160x1xf32>
    %cst_6 = arith.constant 1.280000e+02 : f32
    %6 = vector.broadcast %cst_6 : f32 to vector<160x1xf32>
    %7 = arith.divf %5, %6 : vector<160x1xf32>
    %8 = vector.broadcast %7 : vector<160x1xf32> to vector<160x128xf32>
    %9 = arith.subf %1, %8 : vector<160x128xf32>
    %10 = arith.mulf %9, %9 : vector<160x128xf32>
    %cst_7 = arith.constant dense<0.000000e+00> : vector<160xf32>
    %11 = vector.multi_reduction <add>, %10, %cst_7 [1] : vector<160x128xf32> to vector<160xf32>
    %12 = vector.shape_cast %11 : vector<160xf32> to vector<160x1xf32>
    %cst_8 = arith.constant 1.280000e+02 : f32
    %13 = vector.broadcast %cst_8 : f32 to vector<160x1xf32>
    %14 = arith.divf %12, %13 : vector<160x1xf32>
    %15 = vector.broadcast %7 : vector<160x1xf32> to vector<160x128xf32>
    %16 = arith.subf %1, %15 : vector<160x128xf32>
    %cst_9 = arith.constant 9.99999974E-6 : f32
    %17 = vector.broadcast %cst_9 : f32 to vector<160x1xf32>
    %18 = arith.addf %14, %17 : vector<160x1xf32>
    %19 = math.rsqrt %18 : vector<160x1xf32>
    %20 = vector.broadcast %19 : vector<160x1xf32> to vector<160x128xf32>
    %21 = arith.mulf %16, %20 : vector<160x128xf32>
    %22 = vector.broadcast %2 : vector<1x128xf32> to vector<160x128xf32>
    %23 = arith.mulf %21, %22 : vector<160x128xf32>
    %24 = vector.broadcast %3 : vector<1x128xf32> to vector<160x128xf32>
    %25 = arith.addf %23, %24 : vector<160x128xf32>
    %c0_10 = arith.constant 0 : index
    %c0_11 = arith.constant 0 : index
    %26 = vector.load %arg4[%c0_10, %c0_11] : memref<256x40xbf16, #tpu.memory_space<vmem>>, vector<256x40xbf16>
    %c0_12 = arith.constant 0 : index
    %c0_13 = arith.constant 0 : index
    %27 = vector.load %arg6[%c0_12, %c0_13] : memref<40x256xbf16, #tpu.memory_space<vmem>>, vector<40x256xbf16>
    %c0_14 = arith.constant 0 : index
    %c0_15 = arith.constant 0 : index
    %28 = vector.load %arg5[%c0_14, %c0_15] : memref<256x1xf32, #tpu.memory_space<vmem>>, vector<256x1xf32>
    %c0_16 = arith.constant 0 : index
    %c0_17 = arith.constant 0 : index
    %29 = vector.load %arg7[%c0_16, %c0_17] : memref<40x1xf32, #tpu.memory_space<vmem>>, vector<40x1xf32>
    %30 = vector.extract_strided_slice %25 {offsets = [0, 0], sizes = [40, 128], strides = [1, 1]} : vector<160x128xf32> to vector<40x128xf32>
    %31 = arith.truncf %30 : vector<40x128xf32> to vector<40x128xbf16>
    %cst_18 = arith.constant dense<0.000000e+00> : vector<256x128xf32>
    %32 = tpu.matmul %26, %31, %cst_18 {dimension_numbers = #tpu.dot_dimension_numbers<[1], [0], [0], [1], [0, 0, 1, 1], [], []>} : vector<256x40xbf16>, vector<40x128xbf16>, vector<256x128xf32> -> vector<256x128xf32>
    %33 = vector.broadcast %28 : vector<256x1xf32> to vector<256x128xf32>
    %34 = arith.addf %32, %33 : vector<256x128xf32>
    %cst_19 = arith.constant 0.000000e+00 : f32
    %35 = vector.broadcast %cst_19 : f32 to vector<256x128xf32>
    %36 = arith.maximumf %34, %35 : vector<256x128xf32>
    %37 = arith.truncf %36 : vector<256x128xf32> to vector<256x128xbf16>
    %cst_20 = arith.constant dense<0.000000e+00> : vector<40x128xf32>
    %38 = tpu.matmul %27, %37, %cst_20 {dimension_numbers = #tpu.dot_dimension_numbers<[1], [0], [0], [1], [0, 0, 1, 1], [], []>} : vector<40x256xbf16>, vector<256x128xbf16>, vector<40x128xf32> -> vector<40x128xf32>
    %39 = vector.broadcast %29 : vector<40x1xf32> to vector<40x128xf32>
    %40 = arith.addf %38, %39 : vector<40x128xf32>
    %41 = vector.extract_strided_slice %25 {offsets = [40, 0], sizes = [40, 128], strides = [1, 1]} : vector<160x128xf32> to vector<40x128xf32>
    %42 = arith.truncf %41 : vector<40x128xf32> to vector<40x128xbf16>
    %cst_21 = arith.constant dense<0.000000e+00> : vector<256x128xf32>
    %43 = tpu.matmul %26, %42, %cst_21 {dimension_numbers = #tpu.dot_dimension_numbers<[1], [0], [0], [1], [0, 0, 1, 1], [], []>} : vector<256x40xbf16>, vector<40x128xbf16>, vector<256x128xf32> -> vector<256x128xf32>
    %44 = vector.broadcast %28 : vector<256x1xf32> to vector<256x128xf32>
    %45 = arith.addf %43, %44 : vector<256x128xf32>
    %cst_22 = arith.constant 0.000000e+00 : f32
    %46 = vector.broadcast %cst_22 : f32 to vector<256x128xf32>
    %47 = arith.maximumf %45, %46 : vector<256x128xf32>
    %48 = arith.truncf %47 : vector<256x128xf32> to vector<256x128xbf16>
    %cst_23 = arith.constant dense<0.000000e+00> : vector<40x128xf32>
    %49 = tpu.matmul %27, %48, %cst_23 {dimension_numbers = #tpu.dot_dimension_numbers<[1], [0], [0], [1], [0, 0, 1, 1], [], []>} : vector<40x256xbf16>, vector<256x128xbf16>, vector<40x128xf32> -> vector<40x128xf32>
    %50 = vector.broadcast %29 : vector<40x1xf32> to vector<40x128xf32>
    %51 = arith.addf %49, %50 : vector<40x128xf32>
    %52 = vector.extract_strided_slice %25 {offsets = [80, 0], sizes = [40, 128], strides = [1, 1]} : vector<160x128xf32> to vector<40x128xf32>
    %53 = arith.truncf %52 : vector<40x128xf32> to vector<40x128xbf16>
    %cst_24 = arith.constant dense<0.000000e+00> : vector<256x128xf32>
    %54 = tpu.matmul %26, %53, %cst_24 {dimension_numbers = #tpu.dot_dimension_numbers<[1], [0], [0], [1], [0, 0, 1, 1], [], []>} : vector<256x40xbf16>, vector<40x128xbf16>, vector<256x128xf32> -> vector<256x128xf32>
    %55 = vector.broadcast %28 : vector<256x1xf32> to vector<256x128xf32>
    %56 = arith.addf %54, %55 : vector<256x128xf32>
    %cst_25 = arith.constant 0.000000e+00 : f32
    %57 = vector.broadcast %cst_25 : f32 to vector<256x128xf32>
    %58 = arith.maximumf %56, %57 : vector<256x128xf32>
    %59 = arith.truncf %58 : vector<256x128xf32> to vector<256x128xbf16>
    %cst_26 = arith.constant dense<0.000000e+00> : vector<40x128xf32>
    %60 = tpu.matmul %27, %59, %cst_26 {dimension_numbers = #tpu.dot_dimension_numbers<[1], [0], [0], [1], [0, 0, 1, 1], [], []>} : vector<40x256xbf16>, vector<256x128xbf16>, vector<40x128xf32> -> vector<40x128xf32>
    %61 = vector.broadcast %29 : vector<40x1xf32> to vector<40x128xf32>
    %62 = arith.addf %60, %61 : vector<40x128xf32>
    %63 = vector.extract_strided_slice %25 {offsets = [120, 0], sizes = [40, 128], strides = [1, 1]} : vector<160x128xf32> to vector<40x128xf32>
    %64 = arith.truncf %63 : vector<40x128xf32> to vector<40x128xbf16>
    %cst_27 = arith.constant dense<0.000000e+00> : vector<256x128xf32>
    %65 = tpu.matmul %26, %64, %cst_27 {dimension_numbers = #tpu.dot_dimension_numbers<[1], [0], [0], [1], [0, 0, 1, 1], [], []>} : vector<256x40xbf16>, vector<40x128xbf16>, vector<256x128xf32> -> vector<256x128xf32>
    %66 = vector.broadcast %28 : vector<256x1xf32> to vector<256x128xf32>
    %67 = arith.addf %65, %66 : vector<256x128xf32>
    %cst_28 = arith.constant 0.000000e+00 : f32
    %68 = vector.broadcast %cst_28 : f32 to vector<256x128xf32>
    %69 = arith.maximumf %67, %68 : vector<256x128xf32>
    %70 = arith.truncf %69 : vector<256x128xf32> to vector<256x128xbf16>
    %cst_29 = arith.constant dense<0.000000e+00> : vector<40x128xf32>
    %71 = tpu.matmul %27, %70, %cst_29 {dimension_numbers = #tpu.dot_dimension_numbers<[1], [0], [0], [1], [0, 0, 1, 1], [], []>} : vector<40x256xbf16>, vector<256x128xbf16>, vector<40x128xf32> -> vector<40x128xf32>
    %72 = vector.broadcast %29 : vector<40x1xf32> to vector<40x128xf32>
    %73 = arith.addf %71, %72 : vector<40x128xf32>
    %74 = tpu.concatenate %40, %51, %62, %73 in 0 : vector<40x128xf32>, vector<40x128xf32>, vector<40x128xf32>, vector<40x128xf32> -> vector<160x128xf32>
    %cst_30 = arith.constant 5.000000e-01 : f32
    %75 = vector.broadcast %cst_30 : f32 to vector<160x128xf32>
    %76 = arith.mulf %75, %74 : vector<160x128xf32>
    %cst_31 = arith.constant 0.707106769 : f32
    %77 = vector.broadcast %cst_31 : f32 to vector<160x128xf32>
    %78 = arith.mulf %74, %77 : vector<160x128xf32>
    %cst_32 = arith.constant 0.000000e+00 : f32
    %79 = vector.broadcast %cst_32 : f32 to vector<160x128xf32>
    %80 = arith.cmpf oge, %78, %79 : vector<160x128xf32>
    %cst_33 = arith.constant 1.000000e+00 : f32
    %cst_34 = arith.constant -1.000000e+00 : f32
    %81 = vector.broadcast %cst_33 : f32 to vector<160x128xf32>
    %82 = vector.broadcast %cst_34 : f32 to vector<160x128xf32>
    %83 = arith.select %80, %81, %82 : vector<160x128xi1>, vector<160x128xf32>
    %84 = math.absf %78 : vector<160x128xf32>
    %cst_35 = arith.constant 0.327591091 : f32
    %85 = vector.broadcast %cst_35 : f32 to vector<160x128xf32>
    %86 = arith.mulf %85, %84 : vector<160x128xf32>
    %cst_36 = arith.constant 1.000000e+00 : f32
    %87 = vector.broadcast %cst_36 : f32 to vector<160x128xf32>
    %88 = arith.addf %87, %86 : vector<160x128xf32>
    %cst_37 = arith.constant 1.000000e+00 : f32
    %89 = vector.broadcast %cst_37 : f32 to vector<160x128xf32>
    %90 = arith.divf %89, %88 : vector<160x128xf32>
    %cst_38 = arith.constant 1.06140542 : f32
    %91 = vector.broadcast %cst_38 : f32 to vector<160x128xf32>
    %92 = arith.mulf %91, %90 : vector<160x128xf32>
    %cst_39 = arith.constant -1.45315206 : f32
    %93 = vector.broadcast %cst_39 : f32 to vector<160x128xf32>
    %94 = arith.addf %92, %93 : vector<160x128xf32>
    %95 = arith.mulf %94, %90 : vector<160x128xf32>
    %cst_40 = arith.constant 1.42141378 : f32
    %96 = vector.broadcast %cst_40 : f32 to vector<160x128xf32>
    %97 = arith.addf %95, %96 : vector<160x128xf32>
    %98 = arith.mulf %97, %90 : vector<160x128xf32>
    %cst_41 = arith.constant -0.284496725 : f32
    %99 = vector.broadcast %cst_41 : f32 to vector<160x128xf32>
    %100 = arith.addf %98, %99 : vector<160x128xf32>
    %101 = arith.mulf %100, %90 : vector<160x128xf32>
    %cst_42 = arith.constant 0.254829586 : f32
    %102 = vector.broadcast %cst_42 : f32 to vector<160x128xf32>
    %103 = arith.addf %101, %102 : vector<160x128xf32>
    %104 = arith.mulf %103, %90 : vector<160x128xf32>
    %105 = arith.mulf %84, %84 : vector<160x128xf32>
    %cst_43 = arith.constant 0.000000e+00 : f32
    %106 = vector.broadcast %cst_43 : f32 to vector<160x128xf32>
    %107 = arith.subf %106, %105 : vector<160x128xf32>
    %108 = math.exp %107 : vector<160x128xf32>
    %109 = arith.mulf %104, %108 : vector<160x128xf32>
    %cst_44 = arith.constant 1.000000e+00 : f32
    %110 = vector.broadcast %cst_44 : f32 to vector<160x128xf32>
    %111 = arith.subf %110, %109 : vector<160x128xf32>
    %112 = arith.mulf %83, %111 : vector<160x128xf32>
    %cst_45 = arith.constant 1.000000e+00 : f32
    %113 = vector.broadcast %cst_45 : f32 to vector<160x128xf32>
    %114 = arith.addf %113, %112 : vector<160x128xf32>
    %115 = arith.mulf %76, %114 : vector<160x128xf32>
    %116 = arith.truncf %25 : vector<160x128xf32> to vector<160x128xbf16>
    %c0_46 = arith.constant 0 : index
    %c0_47 = arith.constant 0 : index
    %117 = vector.load %arg8[%c0_46, %c0_47] : memref<128x256xbf16, #tpu.memory_space<vmem>>, vector<128x256xbf16>
    %cst_48 = arith.constant dense<0.000000e+00> : vector<160x256xf32>
    %118 = tpu.matmul %116, %117, %cst_48 {dimension_numbers = #tpu.dot_dimension_numbers<[1], [0], [0], [1], [0, 0, 1, 1], [], []>} : vector<160x128xbf16>, vector<128x256xbf16>, vector<160x256xf32> -> vector<160x256xf32>
    %c0_49 = arith.constant 0 : index
    %c0_50 = arith.constant 0 : index
    %119 = vector.load %arg9[%c0_49, %c0_50] : memref<1x256xf32, #tpu.memory_space<vmem>>, vector<1x256xf32>
    %120 = vector.broadcast %119 : vector<1x256xf32> to vector<160x256xf32>
    %121 = arith.addf %118, %120 : vector<160x256xf32>
    %cst_51 = arith.constant 0.000000e+00 : f32
    %122 = vector.broadcast %cst_51 : f32 to vector<160x256xf32>
    %123 = arith.maximumf %121, %122 : vector<160x256xf32>
    %124 = arith.truncf %123 : vector<160x256xf32> to vector<160x256xbf16>
    %c0_52 = arith.constant 0 : index
    %c0_53 = arith.constant 0 : index
    %125 = vector.load %arg10[%c0_52, %c0_53] : memref<256x128xbf16, #tpu.memory_space<vmem>>, vector<256x128xbf16>
    %cst_54 = arith.constant dense<0.000000e+00> : vector<160x128xf32>
    %126 = tpu.matmul %124, %125, %cst_54 {dimension_numbers = #tpu.dot_dimension_numbers<[1], [0], [0], [1], [0, 0, 1, 1], [], []>} : vector<160x256xbf16>, vector<256x128xbf16>, vector<160x128xf32> -> vector<160x128xf32>
    %c0_55 = arith.constant 0 : index
    %c0_56 = arith.constant 0 : index
    %127 = vector.load %arg11[%c0_55, %c0_56] : memref<1x128xf32, #tpu.memory_space<vmem>>, vector<1x128xf32>
    %128 = vector.broadcast %127 : vector<1x128xf32> to vector<160x128xf32>
    %129 = arith.addf %126, %128 : vector<160x128xf32>
    %130 = arith.mulf %129, %115 : vector<160x128xf32>
    %c0_57 = arith.constant 0 : index
    %c0_58 = arith.constant 0 : index
    %131 = vector.load %arg12[%c0_57, %c0_58] : memref<1x128xf32, #tpu.memory_space<vmem>>, vector<1x128xf32>
    %c0_59 = arith.constant 0 : index
    %c0_60 = arith.constant 0 : index
    %132 = vector.load %arg13[%c0_59, %c0_60] : memref<1x128xf32, #tpu.memory_space<vmem>>, vector<1x128xf32>
    %cst_61 = arith.constant dense<0.000000e+00> : vector<160xf32>
    %133 = vector.multi_reduction <add>, %130, %cst_61 [1] : vector<160x128xf32> to vector<160xf32>
    %134 = vector.shape_cast %133 : vector<160xf32> to vector<160x1xf32>
    %cst_62 = arith.constant 1.280000e+02 : f32
    %135 = vector.broadcast %cst_62 : f32 to vector<160x1xf32>
    %136 = arith.divf %134, %135 : vector<160x1xf32>
    %137 = vector.broadcast %136 : vector<160x1xf32> to vector<160x128xf32>
    %138 = arith.subf %130, %137 : vector<160x128xf32>
    %139 = arith.mulf %138, %138 : vector<160x128xf32>
    %cst_63 = arith.constant dense<0.000000e+00> : vector<160xf32>
    %140 = vector.multi_reduction <add>, %139, %cst_63 [1] : vector<160x128xf32> to vector<160xf32>
    %141 = vector.shape_cast %140 : vector<160xf32> to vector<160x1xf32>
    %cst_64 = arith.constant 1.280000e+02 : f32
    %142 = vector.broadcast %cst_64 : f32 to vector<160x1xf32>
    %143 = arith.divf %141, %142 : vector<160x1xf32>
    %144 = vector.broadcast %136 : vector<160x1xf32> to vector<160x128xf32>
    %145 = arith.subf %130, %144 : vector<160x128xf32>
    %cst_65 = arith.constant 9.99999974E-6 : f32
    %146 = vector.broadcast %cst_65 : f32 to vector<160x1xf32>
    %147 = arith.addf %143, %146 : vector<160x1xf32>
    %148 = math.rsqrt %147 : vector<160x1xf32>
    %149 = vector.broadcast %148 : vector<160x1xf32> to vector<160x128xf32>
    %150 = arith.mulf %145, %149 : vector<160x128xf32>
    %151 = vector.broadcast %131 : vector<1x128xf32> to vector<160x128xf32>
    %152 = arith.mulf %150, %151 : vector<160x128xf32>
    %153 = vector.broadcast %132 : vector<1x128xf32> to vector<160x128xf32>
    %154 = arith.addf %152, %153 : vector<160x128xf32>
    %cst_66 = arith.constant 0.000000e+00 : f32
    %155 = vector.broadcast %cst_66 : f32 to vector<160x128xf32>
    %156 = arith.subf %155, %154 : vector<160x128xf32>
    %157 = math.exp %156 : vector<160x128xf32>
    %cst_67 = arith.constant 1.000000e+00 : f32
    %158 = vector.broadcast %cst_67 : f32 to vector<160x128xf32>
    %159 = arith.addf %158, %157 : vector<160x128xf32>
    %160 = tpu.reciprocal %159 {approx = true} : vector<160x128xf32> -> vector<160x128xf32>
    %161 = arith.mulf %154, %160 : vector<160x128xf32>
    %162 = arith.addf %161, %1 : vector<160x128xf32>
    %163 = vector.shape_cast %162 : vector<160x128xf32> to vector<4x40x128xf32>
    %c0_68 = arith.constant 0 : index
    %c0_69 = arith.constant 0 : index
    %c0_70 = arith.constant 0 : index
    %164 = vector.load %arg14[%c0_68, %c0_69, %c0_70] : memref<4x40x128xf32, #tpu.memory_space<vmem>>, vector<4x40x128xf32>
    tpu.vector_store %arg14[%c0_68, %c0_69, %c0_70], %163 {strides = array<i32>} : memref<4x40x128xf32, #tpu.memory_space<vmem>>, vector<4x40x128xf32>,
    return
  }
  func.func @transform_0(%arg0: i32) -> (i32, i32, i32) {
    %c0_i32 = arith.constant 0 : i32
    %c0_i32_0 = arith.constant 0 : i32
    %c0_i32_1 = arith.constant 0 : i32
    return %arg0, %c0_i32, %c0_i32_0 : i32, i32, i32
  }
  func.func @transform_1(%arg0: i32) -> (i32, i32) {
    %c0_i32 = arith.constant 0 : i32
    %c0_i32_0 = arith.constant 0 : i32
    %c0_i32_1 = arith.constant 0 : i32
    return %c0_i32, %c0_i32_0 : i32, i32
  }
  func.func @transform_2(%arg0: i32) -> (i32, i32) {
    %c0_i32 = arith.constant 0 : i32
    %c0_i32_0 = arith.constant 0 : i32
    %c0_i32_1 = arith.constant 0 : i32
    return %c0_i32, %c0_i32_0 : i32, i32
  }
  func.func @transform_3(%arg0: i32) -> (i32, i32) {
    %c0_i32 = arith.constant 0 : i32
    %c0_i32_0 = arith.constant 0 : i32
    %c0_i32_1 = arith.constant 0 : i32
    return %c0_i32, %c0_i32_0 : i32, i32
  }
  func.func @transform_4(%arg0: i32) -> (i32, i32) {
    %c0_i32 = arith.constant 0 : i32
    %c0_i32_0 = arith.constant 0 : i32
    %c0_i32_1 = arith.constant 0 : i32
    return %c0_i32, %c0_i32_0 : i32, i32
  }
  func.func @transform_5(%arg0: i32) -> (i32, i32) {
    %c0_i32 = arith.constant 0 : i32
    %c0_i32_0 = arith.constant 0 : i32
    %c0_i32_1 = arith.constant 0 : i32
    return %c0_i32, %c0_i32_0 : i32, i32
  }
  func.func @transform_6(%arg0: i32) -> (i32, i32) {
    %c0_i32 = arith.constant 0 : i32
    %c0_i32_0 = arith.constant 0 : i32
    %c0_i32_1 = arith.constant 0 : i32
    return %c0_i32, %c0_i32_0 : i32, i32
  }
  func.func @transform_7(%arg0: i32) -> (i32, i32) {
    %c0_i32 = arith.constant 0 : i32
    %c0_i32_0 = arith.constant 0 : i32
    %c0_i32_1 = arith.constant 0 : i32
    return %c0_i32, %c0_i32_0 : i32, i32
  }
  func.func @transform_8(%arg0: i32) -> (i32, i32) {
    %c0_i32 = arith.constant 0 : i32
    %c0_i32_0 = arith.constant 0 : i32
    %c0_i32_1 = arith.constant 0 : i32
    return %c0_i32, %c0_i32_0 : i32, i32
  }
  func.func @transform_9(%arg0: i32) -> (i32, i32) {
    %c0_i32 = arith.constant 0 : i32
    %c0_i32_0 = arith.constant 0 : i32
    %c0_i32_1 = arith.constant 0 : i32
    return %c0_i32, %c0_i32_0 : i32, i32
  }
  func.func @transform_10(%arg0: i32) -> (i32, i32) {
    %c0_i32 = arith.constant 0 : i32
    %c0_i32_0 = arith.constant 0 : i32
    %c0_i32_1 = arith.constant 0 : i32
    return %c0_i32, %c0_i32_0 : i32, i32
  }
  func.func @transform_11(%arg0: i32) -> (i32, i32) {
    %c0_i32 = arith.constant 0 : i32
    %c0_i32_0 = arith.constant 0 : i32
    %c0_i32_1 = arith.constant 0 : i32
    return %c0_i32, %c0_i32_0 : i32, i32
  }
  func.func @transform_12(%arg0: i32) -> (i32, i32) {
    %c0_i32 = arith.constant 0 : i32
    %c0_i32_0 = arith.constant 0 : i32
    %c0_i32_1 = arith.constant 0 : i32
    return %c0_i32, %c0_i32_0 : i32, i32
  }
  func.func @transform_13(%arg0: i32) -> (i32, i32, i32) {
    %c0_i32 = arith.constant 0 : i32
    %c0_i32_0 = arith.constant 0 : i32
    %c0_i32_1 = arith.constant 0 : i32
    return %arg0, %c0_i32, %c0_i32_0 : i32, i32, i32
  }
}

</mosaic_0001>

<llo_original>
// kernel: tpu_custom_call.1
$region0: #{tpu_custom_call.1}
  #allocation0 [shape = 'u32[]', space=smem, size = 0x4, offset = 0x4, fixed_abs, tag = 'smem constant byte address 0x4 - core index']
  #allocation1 [shape = 'u32[144,128]{1,0:T(1,128)}', space=vmem, size = 0x12000, scoped, tag = 'internal scratch']
  %s0 = inlined_call_operand.vmem [shape: f32[8,40,128], index: 0, kind: input, shape index: {}]
  %s1 = inlined_call_operand.vmem [shape: f32[1,128], index: 1, kind: input, shape index: {}]
  %s2 = inlined_call_operand.vmem [shape: f32[1,128], index: 2, kind: input, shape index: {}]
  %s3 = inlined_call_operand.vmem [shape: bf16[256,40], index: 3, kind: input, shape index: {}]
  %s4 = inlined_call_operand.vmem [shape: f32[256,1], index: 4, kind: input, shape index: {}]
  %s5 = inlined_call_operand.hbm [shape: bf16[40,256], index: 5, kind: input, shape index: {}]
  %s6 = inlined_call_operand.vmem [shape: f32[40,1], index: 6, kind: input, shape index: {}]
  %s7 = inlined_call_operand.vmem [shape: bf16[128,256], index: 7, kind: input, shape index: {}]
  %s8 = inlined_call_operand.vmem [shape: f32[1,256], index: 8, kind: input, shape index: {}]
  %s9 = inlined_call_operand.hbm [shape: bf16[256,128], index: 9, kind: input, shape index: {}]
  %s10 = inlined_call_operand.vmem [shape: f32[1,128], index: 10, kind: input, shape index: {}]
  %s11 = inlined_call_operand.vmem [shape: f32[1,128], index: 11, kind: input, shape index: {}]
  %s12 = inlined_call_operand.vmem [shape: f32[1,128], index: 12, kind: input, shape index: {}]
  %s13 = inlined_call_operand.hbm [shape: f32[8,40,128], index: 13, kind: output, shape index: {}]
  %s14 = sld [smem:[#allocation0]]
  $region93: #{tpu_custom_call.1} parent=0
    _
  %s16 = ssub.s32 1, %s14
  %s17 = scalar_select 0, %s16, %s14
  $region1: #{tpu_custom_call.1} parent=0
    #allocation2 [shape = 'u8[20480]{0}', space=vmem, size = 0x5000, scoped, tag = 'input window, operand 5, single buffered']
    #allocation3 [shape = 's32[2]{0}', space=sflag, size = 0x8, scoped, tag = 'scoped memory for tpu_custom_call.1']
    #allocation4 [shape = 's32[2]{0}', space=sflag, size = 0x8, scoped, tag = 'scoped memory for tpu_custom_call.1']
    #allocation5 [shape = 'u8[65536]{0}', space=vmem, size = 0x10000, scoped, tag = 'input window, operand 9, single buffered']
    #allocation6 [shape = 's32[1]{0}', space=sflag, size = 0x4, scoped, tag = 'scoped memory for tpu_custom_call.1']
    #allocation7 [shape = 'u8[163840]{0}', space=vmem, size = 0x28000, scoped, tag = 'output window, operand 0']
    %18 = vsyncpa [#allocation3], 0
    %19 = vsyncpa [#allocation6], 0
    %20 = vsyncpa [#allocation4], 0
    %s21 = scalar_lea.sflag [#allocation4], 1
    %22 = vsyncpa %s21, 0
    loop: start=0, step=1, limit=4
    $region2: #{tpu_custom_call.1} parent=1 // loop_pre_header
      _
    $region3: #{tpu_custom_call.1} parent=1 // loop_header
      %s24 = sphi 0, %s28
      %p25 = scmp.ge.s32.totalorder %s24, 4
      %s34 = sphi 0, %s36
      %s37 = sphi 0, %s34
      %s38 = sphi 0, %s37
      %s54 = sphi 0, %s38
      %s58 = sphi 0, %s58
      %s60 = sphi 0, %s58
      %s61 = sphi 0, %s60
      %s75 = sphi 0, %s61
      %s79 = sphi 0, %s79
      %s81 = sphi 0, %s79
      %s82 = sphi 0, %s81
      %s96 = sphi 0, %s82
      %s100 = sphi 0, %s100
      %s102 = sphi 0, %s100
      %s103 = sphi 0, %s102
      %s117 = sphi 0, %s103
      %s121 = sphi 0, %s121
      %s123 = sphi 0, %s121
      %s124 = sphi 0, %s123
      %s138 = sphi 0, %s124
      %s142 = sphi 0, %s142
      %s144 = sphi 0, %s142
      %s145 = sphi 0, %s144
      %s159 = sphi 0, %s145
      %s163 = sphi 0, %s163
      %s165 = sphi 0, %s163
      %s166 = sphi 0, %s165
      %s180 = sphi 0, %s166
      %s184 = sphi 0, %s184
      %s186 = sphi 0, %s184
      %s187 = sphi 0, %s186
      %s201 = sphi 0, %s187
      %s205 = sphi 0, %s205
      %s207 = sphi 0, %s205
      %s208 = sphi 0, %s207
      %s222 = sphi 0, %s208
      %s226 = sphi 0, %s226
      %s228 = sphi 0, %s226
      %s229 = sphi 0, %s228
      %s243 = sphi 0, %s229
      %s247 = sphi 0, %s247
      %s249 = sphi 0, %s247
      %s250 = sphi 0, %s249
      %s264 = sphi 0, %s250
      %s268 = sphi 0, %s268
      %s270 = sphi 0, %s268
      %s271 = sphi 0, %s270
      %s285 = sphi 0, %s271
      %s289 = sphi 0, %s289
      %s291 = sphi 0, %s289
      %s292 = sphi 0, %s291
      %s306 = sphi 0, %s292
      %s312 = sphi 0, %s314
      %s315 = sphi 0, %s312
      %s316 = sphi 0, %s315
      %s332 = sphi 0, %s316
    $region4: #{tpu_custom_call.1} parent=1 // loop_header_branch
      %27 = sbr.rel (%p25) target = $region8
    $region5: #{tpu_custom_call.1} parent=1 // loop_body
      %s29 = ssub.s32 %s24, 1
      %s30 = ssub.s32 %s24, 2
      %s31 = sadd.s32 %s24, 1
      %s32 = ssub.s32 %s24, %s31
      %p33 = scmp.eq.s32.totalorder %s32, 0
      %s35 = sadd.s32 %s34, 1
      %s36 = scalar_select %p33, %s34, %s35
      %p39 = pneg %p33
      %p40 = scmp.eq.s32.totalorder %s24, 1
      %p41 = por %p39, %p40
      %p42 = scmp.ne.s32.totalorder %s34, %s37
      %p43 = scmp.eq.s32.totalorder %s24, 0
      %p44 = por %p42, %p43
      %p45 = scmp.ne.s32.totalorder %s34, %s37
      %p46 = scmp.eq.s32.totalorder %s29, 1
      %p47 = por %p45, %p46
      %p48 = scmp.ne.s32.totalorder %s37, %s38
      %p49 = scmp.eq.s32.totalorder %s29, 0
      %p50 = por %p48, %p49
      %p51 = scmp.ne.s32.totalorder %s37, %s38
      %p52 = scmp.eq.s32.totalorder %s30, 1
      %p53 = por %p51, %p52
      %p55 = scmp.ne.s32.totalorder %s38, %s54
      %p56 = scmp.eq.s32.totalorder %s30, 0
      %p57 = por %p55, %p56
      %s59 = sadd.s32 %s58, 1
      %p62 = scmp.eq.s32.totalorder %s24, 1
      %p63 = scmp.ne.s32.totalorder %s58, %s60
      %p64 = scmp.eq.s32.totalorder %s24, 0
      %p65 = por %p63, %p64
      %p66 = scmp.ne.s32.totalorder %s58, %s60
      %p67 = scmp.eq.s32.totalorder %s29, 1
      %p68 = por %p66, %p67
      %p69 = scmp.ne.s32.totalorder %s60, %s61
      %p70 = scmp.eq.s32.totalorder %s29, 0
      %p71 = por %p69, %p70
      %p72 = scmp.ne.s32.totalorder %s60, %s61
      %p73 = scmp.eq.s32.totalorder %s30, 1
      %p74 = por %p72, %p73
      %p76 = scmp.ne.s32.totalorder %s61, %s75
      %p77 = scmp.eq.s32.totalorder %s30, 0
      %p78 = por %p76, %p77
      %s80 = sadd.s32 %s79, 1
      %p83 = scmp.eq.s32.totalorder %s24, 1
      %p84 = scmp.ne.s32.totalorder %s79, %s81
      %p85 = scmp.eq.s32.totalorder %s24, 0
      %p86 = por %p84, %p85
      %p87 = scmp.ne.s32.totalorder %s79, %s81
      %p88 = scmp.eq.s32.totalorder %s29, 1
      %p89 = por %p87, %p88
      %p90 = scmp.ne.s32.totalorder %s81, %s82
      %p91 = scmp.eq.s32.totalorder %s29, 0
      %p92 = por %p90, %p91
      %p93 = scmp.ne.s32.totalorder %s81, %s82
      %p94 = scmp.eq.s32.totalorder %s30, 1
      %p95 = por %p93, %p94
      %p97 = scmp.ne.s32.totalorder %s82, %s96
      %p98 = scmp.eq.s32.totalorder %s30, 0
      %p99 = por %p97, %p98
      %s101 = sadd.s32 %s100, 1
      %p104 = scmp.eq.s32.totalorder %s24, 1
      %p105 = scmp.ne.s32.totalorder %s100, %s102
      %p106 = scmp.eq.s32.totalorder %s24, 0
      %p107 = por %p105, %p106
      %p108 = scmp.ne.s32.totalorder %s100, %s102
      %p109 = scmp.eq.s32.totalorder %s29, 1
      %p110 = por %p108, %p109
      %p111 = scmp.ne.s32.totalorder %s102, %s103
      %p112 = scmp.eq.s32.totalorder %s29, 0
      %p113 = por %p111, %p112
      %p114 = scmp.ne.s32.totalorder %s102, %s103
      %p115 = scmp.eq.s32.totalorder %s30, 1
      %p116 = por %p114, %p115
      %p118 = scmp.ne.s32.totalorder %s103, %s117
      %p119 = scmp.eq.s32.totalorder %s30, 0
      %p120 = por %p118, %p119
      %s122 = sadd.s32 %s121, 1
      %p125 = scmp.eq.s32.totalorder %s24, 1
      %p126 = scmp.ne.s32.totalorder %s121, %s123
      %p127 = scmp.eq.s32.totalorder %s24, 0
      %p128 = por %p126, %p127
      %p129 = scmp.ne.s32.totalorder %s121, %s123
      %p130 = scmp.eq.s32.totalorder %s29, 1
      %p131 = por %p129, %p130
      %p132 = scmp.ne.s32.totalorder %s123, %s124
      %p133 = scmp.eq.s32.totalorder %s29, 0
      %p134 = por %p132, %p133
      %p135 = scmp.ne.s32.totalorder %s123, %s124
      %p136 = scmp.eq.s32.totalorder %s30, 1
      %p137 = por %p135, %p136
      %p139 = scmp.ne.s32.totalorder %s124, %s138
      %p140 = scmp.eq.s32.totalorder %s30, 0
      %p141 = por %p139, %p140
      %s143 = sadd.s32 %s142, 1
      %p146 = scmp.eq.s32.totalorder %s24, 1
      %p147 = scmp.ne.s32.totalorder %s142, %s144
      %p148 = scmp.eq.s32.totalorder %s24, 0
      %p149 = por %p147, %p148
      %p150 = scmp.ne.s32.totalorder %s142, %s144
      %p151 = scmp.eq.s32.totalorder %s29, 1
      %p152 = por %p150, %p151
      %p153 = scmp.ne.s32.totalorder %s144, %s145
      %p154 = scmp.eq.s32.totalorder %s29, 0
      %p155 = por %p153, %p154
      %p156 = scmp.ne.s32.totalorder %s144, %s145
      %p157 = scmp.eq.s32.totalorder %s30, 1
      %p158 = por %p156, %p157
      %p160 = scmp.ne.s32.totalorder %s145, %s159
      %p161 = scmp.eq.s32.totalorder %s30, 0
      %p162 = por %p160, %p161
      %s164 = sadd.s32 %s163, 1
      %p167 = scmp.eq.s32.totalorder %s24, 1
      %p168 = scmp.ne.s32.totalorder %s163, %s165
      %p169 = scmp.eq.s32.totalorder %s24, 0
      %p170 = por %p168, %p169
      %p171 = scmp.ne.s32.totalorder %s163, %s165
      %p172 = scmp.eq.s32.totalorder %s29, 1
      %p173 = por %p171, %p172
      %p174 = scmp.ne.s32.totalorder %s165, %s166
      %p175 = scmp.eq.s32.totalorder %s29, 0
      %p176 = por %p174, %p175
      %p177 = scmp.ne.s32.totalorder %s165, %s166
      %p178 = scmp.eq.s32.totalorder %s30, 1
      %p179 = por %p177, %p178
      %p181 = scmp.ne.s32.totalorder %s166, %s180
      %p182 = scmp.eq.s32.totalorder %s30, 0
      %p183 = por %p181, %p182
      %s185 = sadd.s32 %s184, 1
      %p188 = scmp.eq.s32.totalorder %s24, 1
      %p189 = scmp.ne.s32.totalorder %s184, %s186
      %p190 = scmp.eq.s32.totalorder %s24, 0
      %p191 = por %p189, %p190
      %p192 = scmp.ne.s32.totalorder %s184, %s186
      %p193 = scmp.eq.s32.totalorder %s29, 1
      %p194 = por %p192, %p193
      %p195 = scmp.ne.s32.totalorder %s186, %s187
      %p196 = scmp.eq.s32.totalorder %s29, 0
      %p197 = por %p195, %p196
      %p198 = scmp.ne.s32.totalorder %s186, %s187
      %p199 = scmp.eq.s32.totalorder %s30, 1
      %p200 = por %p198, %p199
      %p202 = scmp.ne.s32.totalorder %s187, %s201
      %p203 = scmp.eq.s32.totalorder %s30, 0
      %p204 = por %p202, %p203
      %s206 = sadd.s32 %s205, 1
      %p209 = scmp.eq.s32.totalorder %s24, 1
      %p210 = scmp.ne.s32.totalorder %s205, %s207
      %p211 = scmp.eq.s32.totalorder %s24, 0
      %p212 = por %p210, %p211
      %p213 = scmp.ne.s32.totalorder %s205, %s207
      %p214 = scmp.eq.s32.totalorder %s29, 1
      %p215 = por %p213, %p214
      %p216 = scmp.ne.s32.totalorder %s207, %s208
      %p217 = scmp.eq.s32.totalorder %s29, 0
      %p218 = por %p216, %p217
      %p219 = scmp.ne.s32.totalorder %s207, %s208
      %p220 = scmp.eq.s32.totalorder %s30, 1
      %p221 = por %p219, %p220
      %p223 = scmp.ne.s32.totalorder %s208, %s222
      %p224 = scmp.eq.s32.totalorder %s30, 0
      %p225 = por %p223, %p224
      %s227 = sadd.s32 %s226, 1
      %p230 = scmp.eq.s32.totalorder %s24, 1
      %p231 = scmp.ne.s32.totalorder %s226, %s228
      %p232 = scmp.eq.s32.totalorder %s24, 0
      %p233 = por %p231, %p232
      %p234 = scmp.ne.s32.totalorder %s226, %s228
      %p235 = scmp.eq.s32.totalorder %s29, 1
      %p236 = por %p234, %p235
      %p237 = scmp.ne.s32.totalorder %s228, %s229
      %p238 = scmp.eq.s32.totalorder %s29, 0
      %p239 = por %p237, %p238
      %p240 = scmp.ne.s32.totalorder %s228, %s229
      %p241 = scmp.eq.s32.totalorder %s30, 1
      %p242 = por %p240, %p241
      %p244 = scmp.ne.s32.totalorder %s229, %s243
      %p245 = scmp.eq.s32.totalorder %s30, 0
      %p246 = por %p244, %p245
      %s248 = sadd.s32 %s247, 1
      %p251 = scmp.eq.s32.totalorder %s24, 1
      %p252 = scmp.ne.s32.totalorder %s247, %s249
      %p253 = scmp.eq.s32.totalorder %s24, 0
      %p254 = por %p252, %p253
      %p255 = scmp.ne.s32.totalorder %s247, %s249
      %p256 = scmp.eq.s32.totalorder %s29, 1
      %p257 = por %p255, %p256
      %p258 = scmp.ne.s32.totalorder %s249, %s250
      %p259 = scmp.eq.s32.totalorder %s29, 0
      %p260 = por %p258, %p259
      %p261 = scmp.ne.s32.totalorder %s249, %s250
      %p262 = scmp.eq.s32.totalorder %s30, 1
      %p263 = por %p261, %p262
      %p265 = scmp.ne.s32.totalorder %s250, %s264
      %p266 = scmp.eq.s32.totalorder %s30, 0
      %p267 = por %p265, %p266
      %s269 = sadd.s32 %s268, 1
      %p272 = scmp.eq.s32.totalorder %s24, 1
      %p273 = scmp.ne.s32.totalorder %s268, %s270
      %p274 = scmp.eq.s32.totalorder %s24, 0
      %p275 = por %p273, %p274
      %p276 = scmp.ne.s32.totalorder %s268, %s270
      %p277 = scmp.eq.s32.totalorder %s29, 1
      %p278 = por %p276, %p277
      %p279 = scmp.ne.s32.totalorder %s270, %s271
      %p280 = scmp.eq.s32.totalorder %s29, 0
      %p281 = por %p279, %p280
      %p282 = scmp.ne.s32.totalorder %s270, %s271
      %p283 = scmp.eq.s32.totalorder %s30, 1
      %p284 = por %p282, %p283
      %p286 = scmp.ne.s32.totalorder %s271, %s285
      %p287 = scmp.eq.s32.totalorder %s30, 0
      %p288 = por %p286, %p287
      %s290 = sadd.s32 %s289, 1
      %p293 = scmp.eq.s32.totalorder %s24, 1
      %p294 = scmp.ne.s32.totalorder %s289, %s291
      %p295 = scmp.eq.s32.totalorder %s24, 0
      %p296 = por %p294, %p295
      %p297 = scmp.ne.s32.totalorder %s289, %s291
      %p298 = scmp.eq.s32.totalorder %s29, 1
      %p299 = por %p297, %p298
      %p300 = scmp.ne.s32.totalorder %s291, %s292
      %p301 = scmp.eq.s32.totalorder %s29, 0
      %p302 = por %p300, %p301
      %p303 = scmp.ne.s32.totalorder %s291, %s292
      %p304 = scmp.eq.s32.totalorder %s30, 1
      %p305 = por %p303, %p304
      %p307 = scmp.ne.s32.totalorder %s292, %s306
      %p308 = scmp.eq.s32.totalorder %s30, 0
      %p309 = por %p307, %p308
      %s310 = ssub.s32 %s24, %s31
      %p311 = scmp.eq.s32.totalorder %s310, 0
      %s313 = sadd.s32 %s312, 1
      %s314 = scalar_select %p311, %s312, %s313
      %p317 = pneg %p311
      %p318 = scmp.eq.s32.totalorder %s24, 1
      %p319 = por %p317, %p318
      %p320 = scmp.ne.s32.totalorder %s312, %s315
      %p321 = scmp.eq.s32.totalorder %s24, 0
      %p322 = por %p320, %p321
      %p323 = scmp.ne.s32.totalorder %s312, %s315
      %p324 = scmp.eq.s32.totalorder %s29, 1
      %p325 = por %p323, %p324
      %p326 = scmp.ne.s32.totalorder %s315, %s316
      %p327 = scmp.eq.s32.totalorder %s29, 0
      %p328 = por %p326, %p327
      %p329 = scmp.ne.s32.totalorder %s315, %s316
      %p330 = scmp.eq.s32.totalorder %s30, 1
      %p331 = por %p329, %p330
      %p333 = scmp.ne.s32.totalorder %s316, %s332
      %p334 = scmp.eq.s32.totalorder %s30, 0
      %p335 = por %p333, %p334
      %p336 = scmp.le.s32.totalorder 1, %s24
      %p337 = scmp.lt.s32.totalorder %s24, 3
      %p338 = pnand %p336, %p337
      %p339 = pneg %p338
      // Predicated region
      $region9: #{tpu_custom_call.1} parent=5 // pred_check
        _
      $region10: #{tpu_custom_call.1} parent=5 // pred_check_branch
        %341 = sbr.rel (%p338) target = $region12
      $region11: #{tpu_custom_call.1} parent=5 // pred_region
        %s342 = ssub.s32 %s24, 1
        // Predicated region
        $region13: #{tpu_custom_call.1} parent=11 // pred_check
          %p343 = pneg %p71
        $region14: #{tpu_custom_call.1} parent=11 // pred_check_branch
          %345 = sbr.rel (%p343) target = $region16
        $region15: #{tpu_custom_call.1} parent=11 // pred_region
          _
        $region16: #{tpu_custom_call.1} parent=11 // pred_fallthru
          _
        // Predicated region
        $region17: #{tpu_custom_call.1} parent=11 // pred_check
          %p346 = pneg %p92
        $region18: #{tpu_custom_call.1} parent=11 // pred_check_branch
          %348 = sbr.rel (%p346) target = $region20
        $region19: #{tpu_custom_call.1} parent=11 // pred_region
          _
        $region20: #{tpu_custom_call.1} parent=11 // pred_fallthru
          _
        // Predicated region
        $region21: #{tpu_custom_call.1} parent=11 // pred_check
          %p349 = pneg %p113
        $region22: #{tpu_custom_call.1} parent=11 // pred_check_branch
          %351 = sbr.rel (%p349) target = $region24
        $region23: #{tpu_custom_call.1} parent=11 // pred_region
          _
        $region24: #{tpu_custom_call.1} parent=11 // pred_fallthru
          _
        // Predicated region
        $region25: #{tpu_custom_call.1} parent=11 // pred_check
          %p352 = pneg %p134
        $region26: #{tpu_custom_call.1} parent=11 // pred_check_branch
          %354 = sbr.rel (%p352) target = $region28
        $region27: #{tpu_custom_call.1} parent=11 // pred_region
          _
        $region28: #{tpu_custom_call.1} parent=11 // pred_fallthru
          _
        // Predicated region
        $region29: #{tpu_custom_call.1} parent=11 // pred_check
          %p355 = pneg %p155
        $region30: #{tpu_custom_call.1} parent=11 // pred_check_branch
          %357 = sbr.rel (%p355) target = $region32
        $region31: #{tpu_custom_call.1} parent=11 // pred_region
          %s359 = ssub.s32 640, 640
          %360 = vsyncadd [#allocation3], %s359
          %s361 = sshll.u32 [#allocation2], 4
          %s362 = int_to_ptr.vmem [resolvable:$true] %s361
          %367 = dma.hbm_to_vmem [thread:$0]  %s5, 640, %s362, [#allocation3], 128, 128, 8
        $region32: #{tpu_custom_call.1} parent=11 // pred_fallthru
          _
        // Predicated region
        $region33: #{tpu_custom_call.1} parent=11 // pred_check
          %p368 = pneg %p176
        $region34: #{tpu_custom_call.1} parent=11 // pred_check_branch
          %370 = sbr.rel (%p368) target = $region36
        $region35: #{tpu_custom_call.1} parent=11 // pred_region
          _
        $region36: #{tpu_custom_call.1} parent=11 // pred_fallthru
          _
        // Predicated region
        $region37: #{tpu_custom_call.1} parent=11 // pred_check
          %p371 = pneg %p197
        $region38: #{tpu_custom_call.1} parent=11 // pred_check_branch
          %373 = sbr.rel (%p371) target = $region40
        $region39: #{tpu_custom_call.1} parent=11 // pred_region
          _
        $region40: #{tpu_custom_call.1} parent=11 // pred_fallthru
          _
        // Predicated region
        $region41: #{tpu_custom_call.1} parent=11 // pred_check
          %p374 = pneg %p218
        $region42: #{tpu_custom_call.1} parent=11 // pred_check_branch
          %376 = sbr.rel (%p374) target = $region44
        $region43: #{tpu_custom_call.1} parent=11 // pred_region
          _
        $region44: #{tpu_custom_call.1} parent=11 // pred_fallthru
          _
        // Predicated region
        $region45: #{tpu_custom_call.1} parent=11 // pred_check
          %p377 = pneg %p239
        $region46: #{tpu_custom_call.1} parent=11 // pred_check_branch
          %379 = sbr.rel (%p377) target = $region48
        $region47: #{tpu_custom_call.1} parent=11 // pred_region
          %s381 = ssub.s32 2048, 2048
          %382 = vsyncadd [#allocation6], %s381
          %s383 = sshll.u32 [#allocation5], 4
          %s384 = int_to_ptr.vmem [resolvable:$true] %s383
          %389 = dma.hbm_to_vmem [thread:$0]  %s9, 2048, %s384, [#allocation6], 64, 64, 4
        $region48: #{tpu_custom_call.1} parent=11 // pred_fallthru
          _
        // Predicated region
        $region49: #{tpu_custom_call.1} parent=11 // pred_check
          %p390 = pneg %p260
        $region50: #{tpu_custom_call.1} parent=11 // pred_check_branch
          %392 = sbr.rel (%p390) target = $region52
        $region51: #{tpu_custom_call.1} parent=11 // pred_region
          _
        $region52: #{tpu_custom_call.1} parent=11 // pred_fallthru
          _
        // Predicated region
        $region53: #{tpu_custom_call.1} parent=11 // pred_check
          %p393 = pneg %p281
        $region54: #{tpu_custom_call.1} parent=11 // pred_check_branch
          %395 = sbr.rel (%p393) target = $region56
        $region55: #{tpu_custom_call.1} parent=11 // pred_region
          _
        $region56: #{tpu_custom_call.1} parent=11 // pred_fallthru
          _
        // Predicated region
        $region57: #{tpu_custom_call.1} parent=11 // pred_check
          %p396 = pneg %p302
        $region58: #{tpu_custom_call.1} parent=11 // pred_check_branch
          %398 = sbr.rel (%p396) target = $region60
        $region59: #{tpu_custom_call.1} parent=11 // pred_region
          _
        $region60: #{tpu_custom_call.1} parent=11 // pred_fallthru
          _
      $region12: #{tpu_custom_call.1} parent=5 // pred_fallthru
        _
      %p399 = scmp.lt.s32.totalorder %s24, 2
      // Predicated region
      $region61: #{tpu_custom_call.1} parent=5 // pred_check
        %p400 = pneg %p399
      $region62: #{tpu_custom_call.1} parent=5 // pred_check_branch
        %402 = sbr.rel (%p400) target = $region64
      $region63: #{tpu_custom_call.1} parent=5 // pred_region
        // Predicated region
        $region65: #{tpu_custom_call.1} parent=63 // pred_check
          %p403 = pneg %p44
        $region66: #{tpu_custom_call.1} parent=63 // pred_check_branch
          %405 = sbr.rel (%p403) target = $region68
        $region67: #{tpu_custom_call.1} parent=63 // pred_region
          %s406 = smul.u32 4, %s24
          %p407 = scmp.lt.s32.totalorder %s406, 7
          %s408 = scalar_select %p407, %s406, 7
          %s409 = smul.addr %s408, 5
          %s410 = smul.addr %s409, 8
          %s411 = scalar_lea.vmem %s0, %s410
          %s412 = smul.u32 4, %s24
        $region68: #{tpu_custom_call.1} parent=63 // pred_fallthru
          _
      $region64: #{tpu_custom_call.1} parent=5 // pred_fallthru
        _
      %p413 = scmp.le.s32.totalorder 1, %s24
      %p414 = scmp.lt.s32.totalorder %s24, 3
      %p415 = pnand %p413, %p414
      %p416 = pneg %p415
      // Predicated region
      $region69: #{tpu_custom_call.1} parent=5 // pred_check
        _
      $region70: #{tpu_custom_call.1} parent=5 // pred_check_branch
        %418 = sbr.rel (%p415) target = $region72
      $region71: #{tpu_custom_call.1} parent=5 // pred_region
        %s419 = ssub.s32 %s24, 1
        // Predicated region
        $region73: #{tpu_custom_call.1} parent=71 // pred_check
          %p420 = pneg %p155
        $region74: #{tpu_custom_call.1} parent=71 // pred_check_branch
          %422 = sbr.rel (%p420) target = $region76
        $region75: #{tpu_custom_call.1} parent=71 // pred_region
          %423 = dma.done [#allocation3], 640
        $region76: #{tpu_custom_call.1} parent=71 // pred_fallthru
          _
        // Predicated region
        $region77: #{tpu_custom_call.1} parent=71 // pred_check
          %p424 = pneg %p239
        $region78: #{tpu_custom_call.1} parent=71 // pred_check_branch
          %426 = sbr.rel (%p424) target = $region80
        $region79: #{tpu_custom_call.1} parent=71 // pred_region
          %427 = dma.done [#allocation6], 2048
        $region80: #{tpu_custom_call.1} parent=71 // pred_fallthru
          _
        %s428 = smul.u32 4, %s29
        %p429 = scmp.lt.s32.totalorder %s428, 7
        %s430 = scalar_select %p429, %s428, 7
        %s431 = smul.addr %s430, 5
        %s432 = smul.addr %s431, 8
        %s433 = scalar_lea.vmem %s0, %s432
        %p434 = pneg %p50
        %p435 = pneg %p47
        %p436 = pneg %p71
        %p437 = pneg %p68
        %p438 = pneg %p92
        %p439 = pneg %p89
        %p440 = pneg %p113
        %p441 = pneg %p110
        %p442 = pneg %p134
        %p443 = pneg %p131
        %p444 = pneg %p155
        %p445 = pneg %p152
        %p446 = pneg %p176
        %p447 = pneg %p173
        %p448 = pneg %p197
        %p449 = pneg %p194
        %p450 = pneg %p218
        %p451 = pneg %p215
        %p452 = pneg %p239
        %p453 = pneg %p236
        %p454 = pneg %p260
        %p455 = pneg %p257
        %p456 = pneg %p281
        %p457 = pneg %p278
        %p458 = pneg %p302
        %p459 = pneg %p299
        %p460 = pneg %p328
        %p461 = pneg %p325
        %s462 = sand.u32 %s315, 1
        %s463 = scalar_lea.sflag [#allocation4], %s462
        %s464 = sand.u32 %s315, 1
        %s465 = smul.addr %s464, 160
        %s466 = scalar_lea.vmem [#allocation7], %s465
        %s467 = smul.u32 4, %s29
        %p468 = scmp.lt.s32.totalorder %s467, 7
        %s469 = scalar_select %p468, %s467, 7
        %s470 = smul.addr %s469, 5
        %s471 = smul.addr %s470, 8
        %s472 = scalar_lea.vmem %s0, %s471
        %s473 = smul.u32 4, %s29
        %s474 = smul.u32 4, %s29
        %v476 = vld [vmem:[%s472] sm:$0xff]
        %v477 = vld [vmem:[%s472 + $0x8] sm:$0xff]
        %v478 = vld [vmem:[%s472 + $0x10] sm:$0xff]
        %v479 = vld [vmem:[%s472 + $0x18] sm:$0xff]
        %v480 = vld [vmem:[%s472 + $0x20] sm:$0xff]
        %v481 = vld [vmem:[%s472 + $0x28] sm:$0xff]
        %v482 = vld [vmem:[%s472 + $0x30] sm:$0xff]
        %v483 = vld [vmem:[%s472 + $0x38] sm:$0xff]
        %v484 = vld [vmem:[%s472 + $0x40] sm:$0xff]
        %v485 = vld [vmem:[%s472 + $0x48] sm:$0xff]
        %v486 = vld [vmem:[%s472 + $0x50] sm:$0xff]
        %v487 = vld [vmem:[%s472 + $0x58] sm:$0xff]
        %v488 = vld [vmem:[%s472 + $0x60] sm:$0xff]
        %v489 = vld [vmem:[%s472 + $0x68] sm:$0xff]
        %v490 = vld [vmem:[%s472 + $0x70] sm:$0xff]
        %v491 = vld [vmem:[%s472 + $0x78] sm:$0xff]
        %v492 = vld [vmem:[%s472 + $0x80] sm:$0xff]
        %v493 = vld [vmem:[%s472 + $0x88] sm:$0xff]
        %v494 = vld [vmem:[%s472 + $0x90] sm:$0xff]
        %v495 = vld [vmem:[%s472 + $0x98] sm:$0xff]
        %v496 = vld [vmem:[%s1] sm:$0x1]
        %v497 = vld [vmem:[%s2] sm:$0x1]
        %498 = vadd.xlane.f32.xlu0 %v476
        %v499 = vpop.xlane.xlu0 %498
        %500 = vadd.xlane.f32.xlu0 %v477
        %v501 = vpop.xlane.xlu0 %500
        %502 = vadd.xlane.f32.xlu0 %v478
        %v503 = vpop.xlane.xlu0 %502
        %504 = vadd.xlane.f32.xlu0 %v479
        %v505 = vpop.xlane.xlu0 %504
        %506 = vadd.xlane.f32.xlu0 %v480
        %v507 = vpop.xlane.xlu0 %506
        %508 = vadd.xlane.f32.xlu0 %v481
        %v509 = vpop.xlane.xlu0 %508
        %510 = vadd.xlane.f32.xlu0 %v482
        %v511 = vpop.xlane.xlu0 %510
        %512 = vadd.xlane.f32.xlu0 %v483
        %v513 = vpop.xlane.xlu0 %512
        %514 = vadd.xlane.f32.xlu0 %v484
        %v515 = vpop.xlane.xlu0 %514
        %516 = vadd.xlane.f32.xlu0 %v485
        %v517 = vpop.xlane.xlu0 %516
        %518 = vadd.xlane.f32.xlu0 %v486
        %v519 = vpop.xlane.xlu0 %518
        %520 = vadd.xlane.f32.xlu0 %v487
        %v521 = vpop.xlane.xlu0 %520
        %522 = vadd.xlane.f32.xlu0 %v488
        %v523 = vpop.xlane.xlu0 %522
        %524 = vadd.xlane.f32.xlu0 %v489
        %v525 = vpop.xlane.xlu0 %524
        %526 = vadd.xlane.f32.xlu0 %v490
        %v527 = vpop.xlane.xlu0 %526
        %528 = vadd.xlane.f32.xlu0 %v491
        %v529 = vpop.xlane.xlu0 %528
        %530 = vadd.xlane.f32.xlu0 %v492
        %v531 = vpop.xlane.xlu0 %530
        %532 = vadd.xlane.f32.xlu0 %v493
        %v533 = vpop.xlane.xlu0 %532
        %534 = vadd.xlane.f32.xlu0 %v494
        %v535 = vpop.xlane.xlu0 %534
        %536 = vadd.xlane.f32.xlu0 %v495
        %v537 = vpop.xlane.xlu0 %536
        %v538 = vrcp.pop 128.0
        %v539 = vmul.f32 %v499, %v538
        %v540 = vmul.f32 %v501, %v538
        %v541 = vmul.f32 %v503, %v538
        %v542 = vmul.f32 %v505, %v538
        %v543 = vmul.f32 %v507, %v538
        %v544 = vmul.f32 %v509, %v538
        %v545 = vmul.f32 %v511, %v538
        %v546 = vmul.f32 %v513, %v538
        %v547 = vmul.f32 %v515, %v538
        %v548 = vmul.f32 %v517, %v538
        %v549 = vmul.f32 %v519, %v538
        %v550 = vmul.f32 %v521, %v538
        %v551 = vmul.f32 %v523, %v538
        %v552 = vmul.f32 %v525, %v538
        %v553 = vmul.f32 %v527, %v538
        %v554 = vmul.f32 %v529, %v538
        %v555 = vmul.f32 %v531, %v538
        %v556 = vmul.f32 %v533, %v538
        %v557 = vmul.f32 %v535, %v538
        %v558 = vmul.f32 %v537, %v538
        %v559 = vsub.f32 %v476, %v539
        %v560 = vsub.f32 %v477, %v540
        %v561 = vsub.f32 %v478, %v541
        %v562 = vsub.f32 %v479, %v542
        %v563 = vsub.f32 %v480, %v543
        %v564 = vsub.f32 %v481, %v544
        %v565 = vsub.f32 %v482, %v545
        %v566 = vsub.f32 %v483, %v546
        %v567 = vsub.f32 %v484, %v547
        %v568 = vsub.f32 %v485, %v548
        %v569 = vsub.f32 %v486, %v549
        %v570 = vsub.f32 %v487, %v550
        %v571 = vsub.f32 %v488, %v551
        %v572 = vsub.f32 %v489, %v552
        %v573 = vsub.f32 %v490, %v553
        %v574 = vsub.f32 %v491, %v554
        %v575 = vsub.f32 %v492, %v555
        %v576 = vsub.f32 %v493, %v556
        %v577 = vsub.f32 %v494, %v557
        %v578 = vsub.f32 %v495, %v558
        %v579 = vmul.f32 %v559, %v559
        %v580 = vmul.f32 %v560, %v560
        %v581 = vmul.f32 %v561, %v561
        %v582 = vmul.f32 %v562, %v562
        %v583 = vmul.f32 %v563, %v563
        %v584 = vmul.f32 %v564, %v564
        %v585 = vmul.f32 %v565, %v565
        %v586 = vmul.f32 %v566, %v566
        %v587 = vmul.f32 %v567, %v567
        %v588 = vmul.f32 %v568, %v568
        %v589 = vmul.f32 %v569, %v569
        %v590 = vmul.f32 %v570, %v570
        %v591 = vmul.f32 %v571, %v571
        %v592 = vmul.f32 %v572, %v572
        %v593 = vmul.f32 %v573, %v573
        %v594 = vmul.f32 %v574, %v574
        %v595 = vmul.f32 %v575, %v575
        %v596 = vmul.f32 %v576, %v576
        %v597 = vmul.f32 %v577, %v577
        %v598 = vmul.f32 %v578, %v578
        %599 = vadd.xlane.f32.xlu0 %v579
        %v600 = vpop.xlane.xlu0 %599
        %601 = vadd.xlane.f32.xlu0 %v580
        %v602 = vpop.xlane.xlu0 %601
        %603 = vadd.xlane.f32.xlu0 %v581
        %v604 = vpop.xlane.xlu0 %603
        %605 = vadd.xlane.f32.xlu0 %v582
        %v606 = vpop.xlane.xlu0 %605
        %607 = vadd.xlane.f32.xlu0 %v583
        %v608 = vpop.xlane.xlu0 %607
        %609 = vadd.xlane.f32.xlu0 %v584
        %v610 = vpop.xlane.xlu0 %609
        %611 = vadd.xlane.f32.xlu0 %v585
        %v612 = vpop.xlane.xlu0 %611
        %613 = vadd.xlane.f32.xlu0 %v586
        %v614 = vpop.xlane.xlu0 %613
        %615 = vadd.xlane.f32.xlu0 %v587
        %v616 = vpop.xlane.xlu0 %615
        %617 = vadd.xlane.f32.xlu0 %v588
        %v618 = vpop.xlane.xlu0 %617
        %619 = vadd.xlane.f32.xlu0 %v589
        %v620 = vpop.xlane.xlu0 %619
        %621 = vadd.xlane.f32.xlu0 %v590
        %v622 = vpop.xlane.xlu0 %621
        %623 = vadd.xlane.f32.xlu0 %v591
        %v624 = vpop.xlane.xlu0 %623
        %625 = vadd.xlane.f32.xlu0 %v592
        %v626 = vpop.xlane.xlu0 %625
        %627 = vadd.xlane.f32.xlu0 %v593
        %v628 = vpop.xlane.xlu0 %627
        %629 = vadd.xlane.f32.xlu0 %v594
        %v630 = vpop.xlane.xlu0 %629
        %631 = vadd.xlane.f32.xlu0 %v595
        %v632 = vpop.xlane.xlu0 %631
        %633 = vadd.xlane.f32.xlu0 %v596
        %v634 = vpop.xlane.xlu0 %633
        %635 = vadd.xlane.f32.xlu0 %v597
        %v636 = vpop.xlane.xlu0 %635
        %637 = vadd.xlane.f32.xlu0 %v598
        %v638 = vpop.xlane.xlu0 %637
        %v639 = vmul.f32 %v600, %v538
        %v640 = vmul.f32 %v602, %v538
        %v641 = vmul.f32 %v604, %v538
        %v642 = vmul.f32 %v606, %v538
        %v643 = vmul.f32 %v608, %v538
        %v644 = vmul.f32 %v610, %v538
        %v645 = vmul.f32 %v612, %v538
        %v646 = vmul.f32 %v614, %v538
        %v647 = vmul.f32 %v616, %v538
        %v648 = vmul.f32 %v618, %v538
        %v649 = vmul.f32 %v620, %v538
        %v650 = vmul.f32 %v622, %v538
        %v651 = vmul.f32 %v624, %v538
        %v652 = vmul.f32 %v626, %v538
        %v653 = vmul.f32 %v628, %v538
        %v654 = vmul.f32 %v630, %v538
        %v655 = vmul.f32 %v632, %v538
        %v656 = vmul.f32 %v634, %v538
        %v657 = vmul.f32 %v636, %v538
        %v658 = vmul.f32 %v638, %v538
        %v659 = vadd.f32 %v639, 1e-05
        %v660 = vadd.f32 %v640, 1e-05
        %v661 = vadd.f32 %v641, 1e-05
        %v662 = vadd.f32 %v642, 1e-05
        %v663 = vadd.f32 %v643, 1e-05
        %v664 = vadd.f32 %v644, 1e-05
        %v665 = vadd.f32 %v645, 1e-05
        %v666 = vadd.f32 %v646, 1e-05
        %v667 = vadd.f32 %v647, 1e-05
        %v668 = vadd.f32 %v648, 1e-05
        %v669 = vadd.f32 %v649, 1e-05
        %v670 = vadd.f32 %v650, 1e-05
        %v671 = vadd.f32 %v651, 1e-05
        %v672 = vadd.f32 %v652, 1e-05
        %v673 = vadd.f32 %v653, 1e-05
        %v674 = vadd.f32 %v654, 1e-05
        %v675 = vadd.f32 %v655, 1e-05
        %v676 = vadd.f32 %v656, 1e-05
        %v677 = vadd.f32 %v657, 1e-05
        %v678 = vadd.f32 %v658, 1e-05
        %v679 = vrsqrt.pop %v659
        %v680 = vrsqrt.pop %v660
        %v681 = vrsqrt.pop %v661
        %v682 = vrsqrt.pop %v662
        %v683 = vrsqrt.pop %v663
        %v684 = vrsqrt.pop %v664
        %v685 = vrsqrt.pop %v665
        %v686 = vrsqrt.pop %v666
        %v687 = vrsqrt.pop %v667
        %v688 = vrsqrt.pop %v668
        %v689 = vrsqrt.pop %v669
        %v690 = vrsqrt.pop %v670
        %v691 = vrsqrt.pop %v671
        %v692 = vrsqrt.pop %v672
        %v693 = vrsqrt.pop %v673
        %v694 = vrsqrt.pop %v674
        %v695 = vrsqrt.pop %v675
        %v696 = vrsqrt.pop %v676
        %v697 = vrsqrt.pop %v677
        %v698 = vrsqrt.pop %v678
        %v699 = vmul.f32 %v559, %v679
        %v700 = vmul.f32 %v560, %v680
        %v701 = vmul.f32 %v561, %v681
        %v702 = vmul.f32 %v562, %v682
        %v703 = vmul.f32 %v563, %v683
        %v704 = vmul.f32 %v564, %v684
        %v705 = vmul.f32 %v565, %v685
        %v706 = vmul.f32 %v566, %v686
        %v707 = vmul.f32 %v567, %v687
        %v708 = vmul.f32 %v568, %v688
        %v709 = vmul.f32 %v569, %v689
        %v710 = vmul.f32 %v570, %v690
        %v711 = vmul.f32 %v571, %v691
        %v712 = vmul.f32 %v572, %v692
        %v713 = vmul.f32 %v573, %v693
        %v714 = vmul.f32 %v574, %v694
        %v715 = vmul.f32 %v575, %v695
        %v716 = vmul.f32 %v576, %v696
        %v717 = vmul.f32 %v577, %v697
        %v718 = vmul.f32 %v578, %v698
        %v720 = vlaneseq
        %v721 = vshrl.u32 %v720, 7
        %v722 = vsub.s32 0, %v721
        %v723 = vrot.slane %v496, %v722
        %v725 = vmul.f32 %v699, %v723
        %v726 = vmul.f32 %v700, %v723
        %v727 = vmul.f32 %v701, %v723
        %v728 = vmul.f32 %v702, %v723
        %v729 = vmul.f32 %v703, %v723
        %v730 = vmul.f32 %v704, %v723
        %v731 = vmul.f32 %v705, %v723
        %v732 = vmul.f32 %v706, %v723
        %v733 = vmul.f32 %v707, %v723
        %v734 = vmul.f32 %v708, %v723
        %v735 = vmul.f32 %v709, %v723
        %v736 = vmul.f32 %v710, %v723
        %v737 = vmul.f32 %v711, %v723
        %v738 = vmul.f32 %v712, %v723
        %v739 = vmul.f32 %v713, %v723
        %v740 = vmul.f32 %v714, %v723
        %v741 = vmul.f32 %v715, %v723
        %v742 = vmul.f32 %v716, %v723
        %v743 = vmul.f32 %v717, %v723
        %v744 = vmul.f32 %v718, %v723
        %v746 = vlaneseq
        %v747 = vshrl.u32 %v746, 7
        %v748 = vsub.s32 0, %v747
        %v749 = vrot.slane %v497, %v748
        %v751 = vadd.f32 %v725, %v749
        %v752 = vadd.f32 %v726, %v749
        %v753 = vadd.f32 %v727, %v749
        %v754 = vadd.f32 %v728, %v749
        %v755 = vadd.f32 %v729, %v749
        %v756 = vadd.f32 %v730, %v749
        %v757 = vadd.f32 %v731, %v749
        %v758 = vadd.f32 %v732, %v749
        %v759 = vadd.f32 %v733, %v749
        %v760 = vadd.f32 %v734, %v749
        %v761 = vadd.f32 %v735, %v749
        %v762 = vadd.f32 %v736, %v749
        %v763 = vadd.f32 %v737, %v749
        %v764 = vadd.f32 %v738, %v749
        %v765 = vadd.f32 %v739, %v749
        %v766 = vadd.f32 %v740, %v749
        %v767 = vadd.f32 %v741, %v749
        %v768 = vadd.f32 %v742, %v749
        %v769 = vadd.f32 %v743, %v749
        %v770 = vadd.f32 %v744, %v749
        %v771 = vld [vmem:[%s3] sm:$0xf]
        %v772 = vld [vmem:[%s3 + $0x4] sm:$0xf]
        %v773 = vld [vmem:[%s3 + $0x8] sm:$0xf]
        %v774 = vld [vmem:[%s3 + $0xc] sm:$0xf]
        %v775 = vld [vmem:[%s3 + $0x10] sm:$0xf]
        %v776 = vld [vmem:[%s3 + $0x14] sm:$0xf]
        %v777 = vld [vmem:[%s3 + $0x18] sm:$0xf]
        %v778 = vld [vmem:[%s3 + $0x1c] sm:$0xf]
        %v779 = vld [vmem:[%s3 + $0x20] sm:$0xf]
        %v780 = vld [vmem:[%s3 + $0x24] sm:$0xf]
        %v781 = vld [vmem:[%s3 + $0x28] sm:$0xf]
        %v782 = vld [vmem:[%s3 + $0x2c] sm:$0xf]
        %v783 = vld [vmem:[%s3 + $0x30] sm:$0xf]
        %v784 = vld [vmem:[%s3 + $0x34] sm:$0xf]
        %v785 = vld [vmem:[%s3 + $0x38] sm:$0xf]
        %v786 = vld [vmem:[%s3 + $0x3c] sm:$0xf]
        %v787 = vld [vmem:[%s3 + $0x40] sm:$0xf]
        %v788 = vld [vmem:[%s3 + $0x44] sm:$0xf]
        %v789 = vld [vmem:[%s3 + $0x48] sm:$0xf]
        %v790 = vld [vmem:[%s3 + $0x4c] sm:$0xf]
        %v791 = vld [vmem:[%s3 + $0x50] sm:$0xf]
        %v792 = vld [vmem:[%s3 + $0x54] sm:$0xf]
        %v793 = vld [vmem:[%s3 + $0x58] sm:$0xf]
        %v794 = vld [vmem:[%s3 + $0x5c] sm:$0xf]
        %v795 = vld [vmem:[%s3 + $0x60] sm:$0xf]
        %v796 = vld [vmem:[%s3 + $0x64] sm:$0xf]
        %v797 = vld [vmem:[%s3 + $0x68] sm:$0xf]
        %v798 = vld [vmem:[%s3 + $0x6c] sm:$0xf]
        %v799 = vld [vmem:[%s3 + $0x70] sm:$0xf]
        %v800 = vld [vmem:[%s3 + $0x74] sm:$0xf]
        %v801 = vld [vmem:[%s3 + $0x78] sm:$0xf]
        %v802 = vld [vmem:[%s3 + $0x7c] sm:$0xf]
        %v803 = vld [vmem:[#allocation2] sm:$0xff]
        %v804 = vld [vmem:[#allocation2 + $0x8] sm:$0xff]
        %v805 = vld [vmem:[#allocation2 + $0x10] sm:$0xff]
        %v806 = vld [vmem:[#allocation2 + $0x18] sm:$0xff]
        %v807 = vld [vmem:[#allocation2 + $0x20] sm:$0xff]
        %v808 = vld [vmem:[%s4] sm:$0xff]
        %v809 = vld [vmem:[%s4 + $0x8] sm:$0xff]
        %v810 = vld [vmem:[%s4 + $0x10] sm:$0xff]
        %v811 = vld [vmem:[%s4 + $0x18] sm:$0xff]
        %v812 = vld [vmem:[%s4 + $0x20] sm:$0xff]
        %v813 = vld [vmem:[%s4 + $0x28] sm:$0xff]
        %v814 = vld [vmem:[%s4 + $0x30] sm:$0xff]
        %v815 = vld [vmem:[%s4 + $0x38] sm:$0xff]
        %v816 = vld [vmem:[%s4 + $0x40] sm:$0xff]
        %v817 = vld [vmem:[%s4 + $0x48] sm:$0xff]
        %v818 = vld [vmem:[%s4 + $0x50] sm:$0xff]
        %v819 = vld [vmem:[%s4 + $0x58] sm:$0xff]
        %v820 = vld [vmem:[%s4 + $0x60] sm:$0xff]
        %v821 = vld [vmem:[%s4 + $0x68] sm:$0xff]
        %v822 = vld [vmem:[%s4 + $0x70] sm:$0xff]
        %v823 = vld [vmem:[%s4 + $0x78] sm:$0xff]
        %v824 = vld [vmem:[%s4 + $0x80] sm:$0xff]
        %v825 = vld [vmem:[%s4 + $0x88] sm:$0xff]
        %v826 = vld [vmem:[%s4 + $0x90] sm:$0xff]
        %v827 = vld [vmem:[%s4 + $0x98] sm:$0xff]
        %v828 = vld [vmem:[%s4 + $0xa0] sm:$0xff]
        %v829 = vld [vmem:[%s4 + $0xa8] sm:$0xff]
        %v830 = vld [vmem:[%s4 + $0xb0] sm:$0xff]
        %v831 = vld [vmem:[%s4 + $0xb8] sm:$0xff]
        %v832 = vld [vmem:[%s4 + $0xc0] sm:$0xff]
        %v833 = vld [vmem:[%s4 + $0xc8] sm:$0xff]
        %v834 = vld [vmem:[%s4 + $0xd0] sm:$0xff]
        %v835 = vld [vmem:[%s4 + $0xd8] sm:$0xff]
        %v836 = vld [vmem:[%s4 + $0xe0] sm:$0xff]
        %v837 = vld [vmem:[%s4 + $0xe8] sm:$0xff]
        %v838 = vld [vmem:[%s4 + $0xf0] sm:$0xff]
        %v839 = vld [vmem:[%s4 + $0xf8] sm:$0xff]
        %v840 = vld [vmem:[%s6] sm:$0xff]
        %v841 = vld [vmem:[%s6 + $0x8] sm:$0xff]
        %v842 = vld [vmem:[%s6 + $0x10] sm:$0xff]
        %v843 = vld [vmem:[%s6 + $0x18] sm:$0xff]
        %v844 = vld [vmem:[%s6 + $0x20] sm:$0xff]
        %v845 = vpack.c.bf16 %v752, %v751
        %v846 = vpack.c.bf16 %v754, %v753
        %v847 = vpack.c.bf16 %v755, %v755
        %849 = vset.pattern.permute.xlu0 0
        %850 = vperm.xlu0 %849, %v808
        %v851 = vpop.permute.xlu0 %850
        %854 = vset.pattern.permute.xlu0 0
        %855 = vperm.xlu0 %854, %v809
        %v856 = vpop.permute.xlu0 %855
        %859 = vset.pattern.permute.xlu0 0
        %860 = vperm.xlu0 %859, %v810
        %v861 = vpop.permute.xlu0 %860
        %864 = vset.pattern.permute.xlu0 0
        %865 = vperm.xlu0 %864, %v811
        %v866 = vpop.permute.xlu0 %865
        %869 = vset.pattern.permute.xlu0 0
        %870 = vperm.xlu0 %869, %v812
        %v871 = vpop.permute.xlu0 %870
        %874 = vset.pattern.permute.xlu0 0
        %875 = vperm.xlu0 %874, %v813
        %v876 = vpop.permute.xlu0 %875
        %879 = vset.pattern.permute.xlu0 0
        %880 = vperm.xlu0 %879, %v814
        %v881 = vpop.permute.xlu0 %880
        %884 = vset.pattern.permute.xlu0 0
        %885 = vperm.xlu0 %884, %v815
        %v886 = vpop.permute.xlu0 %885
        %889 = vset.pattern.permute.xlu0 0
        %890 = vperm.xlu0 %889, %v816
        %v891 = vpop.permute.xlu0 %890
        %894 = vset.pattern.permute.xlu0 0
        %895 = vperm.xlu0 %894, %v817
        %v896 = vpop.permute.xlu0 %895
        %899 = vset.pattern.permute.xlu0 0
        %900 = vperm.xlu0 %899, %v818
        %v901 = vpop.permute.xlu0 %900
        %904 = vset.pattern.permute.xlu0 0
        %905 = vperm.xlu0 %904, %v819
        %v906 = vpop.permute.xlu0 %905
        %909 = vset.pattern.permute.xlu0 0
        %910 = vperm.xlu0 %909, %v820
        %v911 = vpop.permute.xlu0 %910
        %914 = vset.pattern.permute.xlu0 0
        %915 = vperm.xlu0 %914, %v821
        %v916 = vpop.permute.xlu0 %915
        %919 = vset.pattern.permute.xlu0 0
        %920 = vperm.xlu0 %919, %v822
        %v921 = vpop.permute.xlu0 %920
        %924 = vset.pattern.permute.xlu0 0
        %925 = vperm.xlu0 %924, %v823
        %v926 = vpop.permute.xlu0 %925
        %929 = vset.pattern.permute.xlu0 0
        %930 = vperm.xlu0 %929, %v824
        %v931 = vpop.permute.xlu0 %930
        %934 = vset.pattern.permute.xlu0 0
        %935 = vperm.xlu0 %934, %v825
        %v936 = vpop.permute.xlu0 %935
        %939 = vset.pattern.permute.xlu0 0
        %940 = vperm.xlu0 %939, %v826
        %v941 = vpop.permute.xlu0 %940
        %944 = vset.pattern.permute.xlu0 0
        %945 = vperm.xlu0 %944, %v827
        %v946 = vpop.permute.xlu0 %945
        %949 = vset.pattern.permute.xlu0 0
        %950 = vperm.xlu0 %949, %v828
        %v951 = vpop.permute.xlu0 %950
        %954 = vset.pattern.permute.xlu0 0
        %955 = vperm.xlu0 %954, %v829
        %v956 = vpop.permute.xlu0 %955
        %959 = vset.pattern.permute.xlu0 0
        %960 = vperm.xlu0 %959, %v830
        %v961 = vpop.permute.xlu0 %960
        %964 = vset.pattern.permute.xlu0 0
        %965 = vperm.xlu0 %964, %v831
        %v966 = vpop.permute.xlu0 %965
        %969 = vset.pattern.permute.xlu0 0
        %970 = vperm.xlu0 %969, %v832
        %v971 = vpop.permute.xlu0 %970
        %974 = vset.pattern.permute.xlu0 0
        %975 = vperm.xlu0 %974, %v833
        %v976 = vpop.permute.xlu0 %975
        %979 = vset.pattern.permute.xlu0 0
        %980 = vperm.xlu0 %979, %v834
        %v981 = vpop.permute.xlu0 %980
        %984 = vset.pattern.permute.xlu0 0
        %985 = vperm.xlu0 %984, %v835
        %v986 = vpop.permute.xlu0 %985
        %989 = vset.pattern.permute.xlu0 0
        %990 = vperm.xlu0 %989, %v836
        %v991 = vpop.permute.xlu0 %990
        %994 = vset.pattern.permute.xlu0 0
        %995 = vperm.xlu0 %994, %v837
        %v996 = vpop.permute.xlu0 %995
        %999 = vset.pattern.permute.xlu0 0
        %1000 = vperm.xlu0 %999, %v838
        %v1001 = vpop.permute.xlu0 %1000
        %1004 = vset.pattern.permute.xlu0 0
        %1005 = vperm.xlu0 %1004, %v839
        %v1006 = vpop.permute.xlu0 %1005
        %v1040 = vunpack.c.l.b16 %v771
        %v1041 = vunpack.c.l.b16 %v772
        %v1042 = vunpack.c.l.b16 %v773
        %v1043 = vunpack.c.l.b16 %v774
        %v1044 = vunpack.c.l.b16 %v775
        %v1045 = vunpack.c.l.b16 %v776
        %v1046 = vunpack.c.l.b16 %v777
        %v1047 = vunpack.c.l.b16 %v778
        %v1048 = vunpack.c.l.b16 %v779
        %v1049 = vunpack.c.l.b16 %v780
        %v1050 = vunpack.c.l.b16 %v781
        %v1051 = vunpack.c.l.b16 %v782
        %v1052 = vunpack.c.l.b16 %v783
        %v1053 = vunpack.c.l.b16 %v784
        %v1054 = vunpack.c.l.b16 %v785
        %v1055 = vunpack.c.l.b16 %v786
        %v1056 = vunpack.c.l.b16 %v787
        %v1057 = vunpack.c.l.b16 %v788
        %v1058 = vunpack.c.l.b16 %v789
        %v1059 = vunpack.c.l.b16 %v790
        %v1060 = vunpack.c.l.b16 %v791
        %v1061 = vunpack.c.l.b16 %v792
        %v1062 = vunpack.c.l.b16 %v793
        %v1063 = vunpack.c.l.b16 %v794
        %v1064 = vunpack.c.l.b16 %v795
        %v1065 = vunpack.c.l.b16 %v796
        %v1066 = vunpack.c.l.b16 %v797
        %v1067 = vunpack.c.l.b16 %v798
        %v1068 = vunpack.c.l.b16 %v799
        %v1069 = vunpack.c.l.b16 %v800
        %v1070 = vunpack.c.l.b16 %v801
        %v1071 = vunpack.c.l.b16 %v802
        %v1072 = vpack.c.b16 %v1041, %v1040
        %v1073 = vpack.c.b16 %v1043, %v1042
        %v1074 = vpack.c.b16 %v1045, %v1044
        %v1075 = vpack.c.b16 %v1047, %v1046
        %v1076 = vpack.c.b16 %v1049, %v1048
        %v1077 = vpack.c.b16 %v1051, %v1050
        %v1078 = vpack.c.b16 %v1053, %v1052
        %v1079 = vpack.c.b16 %v1055, %v1054
        %v1080 = vpack.c.b16 %v1057, %v1056
        %v1081 = vpack.c.b16 %v1059, %v1058
        %v1082 = vpack.c.b16 %v1061, %v1060
        %v1083 = vpack.c.b16 %v1063, %v1062
        %v1084 = vpack.c.b16 %v1065, %v1064
        %v1085 = vpack.c.b16 %v1067, %v1066
        %v1086 = vpack.c.b16 %v1069, %v1068
        %v1087 = vpack.c.b16 %v1071, %v1070
        %vm1088 = vcmask 326656
        %v1090 = vsel %vm1088, %v1072, 0
        %v1093 = vsel %vm1088, %v1073, 0
        %v1096 = vsel %vm1088, %v1074, 0
        %v1099 = vsel %vm1088, %v1075, 0
        %v1102 = vsel %vm1088, %v1076, 0
        %v1105 = vsel %vm1088, %v1077, 0
        %v1108 = vsel %vm1088, %v1078, 0
        %v1111 = vsel %vm1088, %v1079, 0
        %v1114 = vsel %vm1088, %v1080, 0
        %v1117 = vsel %vm1088, %v1081, 0
        %v1120 = vsel %vm1088, %v1082, 0
        %v1123 = vsel %vm1088, %v1083, 0
        %v1126 = vsel %vm1088, %v1084, 0
        %v1129 = vsel %vm1088, %v1085, 0
        %v1132 = vsel %vm1088, %v1086, 0
        %v1135 = vsel %vm1088, %v1087, 0
        %vm1137 = vcmask 1043456
        %v1139 = vsel %vm1137, %v847, 0
        %1141 = vmatprep.subr.bf16.mxu0 0
        %1142 = vmatpush1.bf16.msra.mxu0 %v845
        %1143 = vmatprep.subr.bf16.mxu0 0
        %1144 = vmatpush1.bf16.msra.mxu0 %v846
        %1145 = vmatprep.subr.bf16.mxu0 0
        %1146 = vmatpush1.bf16.msra.mxu0 %v1139
        %1147 = vmatprep.subr.bf16.mxu0 0
        %1148 = vmatpush1.bf16.msra.mxu0 0
        %1149 = vmatprep.subr.bf16.mxu0 0
        %1150 = vmatpush1.bf16.msra.mxu0 0
        %1151 = vmatprep.subr.bf16.mxu0 0
        %1152 = vmatpush1.bf16.msra.mxu0 0
        %1153 = vmatprep.subr.bf16.mxu0 0
        %1154 = vmatpush1.bf16.msra.mxu0 0
        %1155 = vmatprep.subr.bf16.mxu0 0
        %1156 = vmatpush1.bf16.msra.mxu0 0
        %1157 = vmatprep.subr.bf16.mxu0 0
        %1158 = vmatpush1.bf16.msra.mxu0 0
        %1159 = vmatprep.subr.bf16.mxu0 0
        %1160 = vmatpush1.bf16.msra.mxu0 0
        %1161 = vmatprep.subr.bf16.mxu0 0
        %1162 = vmatpush1.bf16.msra.mxu0 0
        %1163 = vmatprep.subr.bf16.mxu0 0
        %1164 = vmatpush1.bf16.msra.mxu0 0
        %1165 = vmatprep.subr.bf16.mxu0 0
        %1166 = vmatpush1.bf16.msra.mxu0 0
        %1167 = vmatprep.subr.bf16.mxu0 0
        %1168 = vmatpush1.bf16.msra.mxu0 0
        %1169 = vmatprep.subr.bf16.mxu0 0
        %1170 = vmatpush1.bf16.msra.mxu0 0
        %1171 = vmatprep.subr.bf16.mxu0 0
        %1172 = vmatpush1.bf16.msra.mxu0 0
        %1173 = vmatprep.mubr.bf16.mxu0 0
        %1174 = vmatmul.mubr.bf16.gmra.mrb[0].mxu0 %v1090
        %v1175 = vpop.f32.mrb[0].mxu0
        %v1176 = vadd.f32 %v851, %v1175
        %v1177 = vpop.f32.mrb[0].mxu0
        %v1178 = vpop.f32.mrb[0].mxu0
        %v1179 = vadd.f32 %v856, %v1178
        %v1180 = vpop.f32.mrb[0].mxu0
        %1181 = vmatprep.mubr.bf16.mxu0 0
        %1182 = vmatmul.mubr.bf16.gmra.mrb[0].mxu0 %v1093
        %v1183 = vpop.f32.mrb[0].mxu0
        %v1184 = vadd.f32 %v861, %v1183
        %v1185 = vpop.f32.mrb[0].mxu0
        %v1186 = vpop.f32.mrb[0].mxu0
        %v1187 = vadd.f32 %v866, %v1186
        %v1188 = vpop.f32.mrb[0].mxu0
        %1189 = vmatprep.mubr.bf16.mxu0 0
        %1190 = vmatmul.mubr.bf16.gmra.mrb[0].mxu0 %v1096
        %v1191 = vpop.f32.mrb[0].mxu0
        %v1192 = vadd.f32 %v871, %v1191
        %v1193 = vpop.f32.mrb[0].mxu0
        %v1194 = vpop.f32.mrb[0].mxu0
        %v1195 = vadd.f32 %v876, %v1194
        %v1196 = vpop.f32.mrb[0].mxu0
        %1197 = vmatprep.mubr.bf16.mxu0 0
        %1198 = vmatmul.mubr.bf16.gmra.mrb[0].mxu0 %v1099
        %v1199 = vpop.f32.mrb[0].mxu0
        %v1200 = vadd.f32 %v881, %v1199
        %v1201 = vpop.f32.mrb[0].mxu0
        %v1202 = vpop.f32.mrb[0].mxu0
        %v1203 = vadd.f32 %v886, %v1202
        %v1204 = vpop.f32.mrb[0].mxu0
        %1205 = vmatprep.mubr.bf16.mxu0 0
        %1206 = vmatmul.mubr.bf16.gmra.mrb[0].mxu0 %v1102
        %v1207 = vpop.f32.mrb[0].mxu0
        %v1208 = vadd.f32 %v891, %v1207
        %v1209 = vpop.f32.mrb[0].mxu0
        %v1210 = vpop.f32.mrb[0].mxu0
        %v1211 = vadd.f32 %v896, %v1210
        %v1212 = vpop.f32.mrb[0].mxu0
        %1213 = vmatprep.mubr.bf16.mxu0 0
        %1214 = vmatmul.mubr.bf16.gmra.mrb[0].mxu0 %v1105
        %v1215 = vpop.f32.mrb[0].mxu0
        %v1216 = vadd.f32 %v901, %v1215
        %v1217 = vpop.f32.mrb[0].mxu0
        %v1218 = vpop.f32.mrb[0].mxu0
        %v1219 = vadd.f32 %v906, %v1218
        %v1220 = vpop.f32.mrb[0].mxu0
        %1221 = vmatprep.mubr.bf16.mxu0 0
        %1222 = vmatmul.mubr.bf16.gmra.mrb[0].mxu0 %v1108
        %v1223 = vpop.f32.mrb[0].mxu0
        %v1224 = vadd.f32 %v911, %v1223
        %v1225 = vpop.f32.mrb[0].mxu0
        %v1226 = vpop.f32.mrb[0].mxu0
        %v1227 = vadd.f32 %v916, %v1226
        %v1228 = vpop.f32.mrb[0].mxu0
        %1229 = vmatprep.mubr.bf16.mxu0 0
        %1230 = vmatmul.mubr.bf16.gmra.mrb[0].mxu0 %v1111
        %v1231 = vpop.f32.mrb[0].mxu0
        %v1232 = vadd.f32 %v921, %v1231
        %v1233 = vpop.f32.mrb[0].mxu0
        %v1234 = vpop.f32.mrb[0].mxu0
        %v1235 = vadd.f32 %v926, %v1234
        %v1236 = vpop.f32.mrb[0].mxu0
        %1237 = vmatprep.mubr.bf16.mxu0 0
        %1238 = vmatmul.mubr.bf16.gmra.mrb[0].mxu0 %v1114
        %v1239 = vpop.f32.mrb[0].mxu0
        %v1240 = vadd.f32 %v931, %v1239
        %v1241 = vpop.f32.mrb[0].mxu0
        %v1242 = vpop.f32.mrb[0].mxu0
        %v1243 = vadd.f32 %v936, %v1242
        %v1244 = vpop.f32.mrb[0].mxu0
        %1245 = vmatprep.mubr.bf16.mxu0 0
        %1246 = vmatmul.mubr.bf16.gmra.mrb[0].mxu0 %v1117
        %v1247 = vpop.f32.mrb[0].mxu0
        %v1248 = vadd.f32 %v941, %v1247
        %v1249 = vpop.f32.mrb[0].mxu0
        %v1250 = vpop.f32.mrb[0].mxu0
        %v1251 = vadd.f32 %v946, %v1250
        %v1252 = vpop.f32.mrb[0].mxu0
        %1253 = vmatprep.mubr.bf16.mxu0 0
        %1254 = vmatmul.mubr.bf16.gmra.mrb[0].mxu0 %v1120
        %v1255 = vpop.f32.mrb[0].mxu0
        %v1256 = vadd.f32 %v951, %v1255
        %v1257 = vpop.f32.mrb[0].mxu0
        %v1258 = vpop.f32.mrb[0].mxu0
        %v1259 = vadd.f32 %v956, %v1258
        %v1260 = vpop.f32.mrb[0].mxu0
        %1261 = vmatprep.mubr.bf16.mxu0 0
        %1262 = vmatmul.mubr.bf16.gmra.mrb[0].mxu0 %v1123
        %v1263 = vpop.f32.mrb[0].mxu0
        %v1264 = vadd.f32 %v961, %v1263
        %v1265 = vpop.f32.mrb[0].mxu0
        %v1266 = vpop.f32.mrb[0].mxu0
        %v1267 = vadd.f32 %v966, %v1266
        %v1268 = vpop.f32.mrb[0].mxu0
        %1269 = vmatprep.mubr.bf16.mxu0 0
        %1270 = vmatmul.mubr.bf16.gmra.mrb[0].mxu0 %v1126
        %v1271 = vpop.f32.mrb[0].mxu0
        %v1272 = vadd.f32 %v971, %v1271
        %v1273 = vpop.f32.mrb[0].mxu0
        %v1274 = vpop.f32.mrb[0].mxu0
        %v1275 = vadd.f32 %v976, %v1274
        %v1276 = vpop.f32.mrb[0].mxu0
        %1277 = vmatprep.mubr.bf16.mxu0 0
        %1278 = vmatmul.mubr.bf16.gmra.mrb[0].mxu0 %v1129
        %v1279 = vpop.f32.mrb[0].mxu0
        %v1280 = vadd.f32 %v981, %v1279
        %v1281 = vpop.f32.mrb[0].mxu0
        %v1282 = vpop.f32.mrb[0].mxu0
        %v1283 = vadd.f32 %v986, %v1282
        %v1284 = vpop.f32.mrb[0].mxu0
        %1285 = vmatprep.mubr.bf16.mxu0 0
        %1286 = vmatmul.mubr.bf16.gmra.mrb[0].mxu0 %v1132
        %v1287 = vpop.f32.mrb[0].mxu0
        %v1288 = vadd.f32 %v991, %v1287
        %v1289 = vpop.f32.mrb[0].mxu0
        %v1290 = vpop.f32.mrb[0].mxu0
        %v1291 = vadd.f32 %v996, %v1290
        %v1292 = vpop.f32.mrb[0].mxu0
        %1293 = vmatprep.mubr.bf16.mxu0 0
        %1294 = vmatmul.mubr.bf16.gmra.mrb[0].mxu0 %v1135
        %v1295 = vpop.f32.mrb[0].mxu0
        %v1296 = vadd.f32 %v1001, %v1295
        %v1297 = vpop.f32.mrb[0].mxu0
        %v1298 = vpop.f32.mrb[0].mxu0
        %v1299 = vadd.f32 %v1006, %v1298
        %v1300 = vpop.f32.mrb[0].mxu0
        %1301 = vdwg.mxu0
        %v1302 = vmax.f32 %v1176, 0.0
        %v1303 = vmax.f32 %v1179, 0.0
        %v1304 = vmax.f32 %v1184, 0.0
        %v1305 = vmax.f32 %v1187, 0.0
        %v1306 = vmax.f32 %v1192, 0.0
        %v1307 = vmax.f32 %v1195, 0.0
        %v1308 = vmax.f32 %v1200, 0.0
        %v1309 = vmax.f32 %v1203, 0.0
        %v1310 = vmax.f32 %v1208, 0.0
        %v1311 = vmax.f32 %v1211, 0.0
        %v1312 = vmax.f32 %v1216, 0.0
        %v1313 = vmax.f32 %v1219, 0.0
        %v1314 = vmax.f32 %v1224, 0.0
        %v1315 = vmax.f32 %v1227, 0.0
        %v1316 = vmax.f32 %v1232, 0.0
        %v1317 = vmax.f32 %v1235, 0.0
        %v1318 = vmax.f32 %v1240, 0.0
        %v1319 = vmax.f32 %v1243, 0.0
        %v1320 = vmax.f32 %v1248, 0.0
        %v1321 = vmax.f32 %v1251, 0.0
        %v1322 = vmax.f32 %v1256, 0.0
        %v1323 = vmax.f32 %v1259, 0.0
        %v1324 = vmax.f32 %v1264, 0.0
        %v1325 = vmax.f32 %v1267, 0.0
        %v1326 = vmax.f32 %v1272, 0.0
        %v1327 = vmax.f32 %v1275, 0.0
        %v1328 = vmax.f32 %v1280, 0.0
        %v1329 = vmax.f32 %v1283, 0.0
        %v1330 = vmax.f32 %v1288, 0.0
        %v1331 = vmax.f32 %v1291, 0.0
        %v1332 = vmax.f32 %v1296, 0.0
        %v1333 = vmax.f32 %v1299, 0.0
        %v1334 = vpack.c.bf16 %v1303, %v1302
        %v1335 = vpack.c.bf16 %v1305, %v1304
        %v1336 = vpack.c.bf16 %v1307, %v1306
        %v1337 = vpack.c.bf16 %v1309, %v1308
        %v1338 = vpack.c.bf16 %v1311, %v1310
        %v1339 = vpack.c.bf16 %v1313, %v1312
        %v1340 = vpack.c.bf16 %v1315, %v1314
        %v1341 = vpack.c.bf16 %v1317, %v1316
        %v1342 = vpack.c.bf16 %v1319, %v1318
        %v1343 = vpack.c.bf16 %v1321, %v1320
        %v1344 = vpack.c.bf16 %v1323, %v1322
        %v1345 = vpack.c.bf16 %v1325, %v1324
        %v1346 = vpack.c.bf16 %v1327, %v1326
        %v1347 = vpack.c.bf16 %v1329, %v1328
        %v1348 = vpack.c.bf16 %v1331, %v1330
        %v1349 = vpack.c.bf16 %v1333, %v1332
        %1351 = vset.pattern.permute.xlu0 0
        %1352 = vperm.xlu0 %1351, %v840
        %v1353 = vpop.permute.xlu0 %1352
        %1356 = vset.pattern.permute.xlu0 0
        %1357 = vperm.xlu0 %1356, %v841
        %v1358 = vpop.permute.xlu0 %1357
        %1361 = vset.pattern.permute.xlu0 0
        %1362 = vperm.xlu0 %1361, %v842
        %v1363 = vpop.permute.xlu0 %1362
        %1366 = vset.pattern.permute.xlu0 0
        %1367 = vperm.xlu0 %1366, %v843
        %v1368 = vpop.permute.xlu0 %1367
        %1371 = vset.pattern.permute.xlu0 0
        %1372 = vperm.xlu0 %1371, %v844
        %v1373 = vpop.permute.xlu0 %1372
        %v1380 = vunpack.c.l.b16 %v803
        %v1381 = vunpack.c.h.b16 %v803
        %v1382 = vunpack.c.l.b16 %v804
        %v1383 = vunpack.c.h.b16 %v804
        %v1384 = vunpack.c.l.b16 %v805
        %v1385 = vunpack.c.h.b16 %v805
        %v1386 = vunpack.c.l.b16 %v806
        %v1387 = vunpack.c.h.b16 %v806
        %v1388 = vunpack.c.l.b16 %v807
        %v1389 = vunpack.c.h.b16 %v807
        %v1390 = vpack.c.b16 %v1382, %v1380
        %v1391 = vpack.c.b16 %v1383, %v1381
        %v1392 = vpack.c.b16 %v1386, %v1384
        %v1393 = vpack.c.b16 %v1387, %v1385
        %v1394 = vpack.c.b16 %v1388, %v1388
        %v1395 = vpack.c.b16 %v1389, %v1389
        %1402 = vmatprep.subr.bf16.mxu0 0
        %1403 = vmatpush1.bf16.msra.mxu0 %v1334
        %1404 = vmatprep.subr.bf16.mxu0 0
        %1405 = vmatpush1.bf16.msra.mxu0 %v1335
        %1406 = vmatprep.subr.bf16.mxu0 0
        %1407 = vmatpush1.bf16.msra.mxu0 %v1336
        %1408 = vmatprep.subr.bf16.mxu0 0
        %1409 = vmatpush1.bf16.msra.mxu0 %v1337
        %1410 = vmatprep.subr.bf16.mxu0 0
        %1411 = vmatpush1.bf16.msra.mxu0 %v1338
        %1412 = vmatprep.subr.bf16.mxu0 0
        %1413 = vmatpush1.bf16.msra.mxu0 %v1339
        %1414 = vmatprep.subr.bf16.mxu0 0
        %1415 = vmatpush1.bf16.msra.mxu0 %v1340
        %1416 = vmatprep.subr.bf16.mxu0 0
        %1417 = vmatpush1.bf16.msra.mxu0 %v1341
        %1418 = vmatprep.subr.bf16.mxu0 0
        %1419 = vmatpush1.bf16.msra.mxu0 %v1342
        %1420 = vmatprep.subr.bf16.mxu0 0
        %1421 = vmatpush1.bf16.msra.mxu0 %v1343
        %1422 = vmatprep.subr.bf16.mxu0 0
        %1423 = vmatpush1.bf16.msra.mxu0 %v1344
        %1424 = vmatprep.subr.bf16.mxu0 0
        %1425 = vmatpush1.bf16.msra.mxu0 %v1345
        %1426 = vmatprep.subr.bf16.mxu0 0
        %1427 = vmatpush1.bf16.msra.mxu0 %v1346
        %1428 = vmatprep.subr.bf16.mxu0 0
        %1429 = vmatpush1.bf16.msra.mxu0 %v1347
        %1430 = vmatprep.subr.bf16.mxu0 0
        %1431 = vmatpush1.bf16.msra.mxu0 %v1348
        %1432 = vmatprep.subr.bf16.mxu0 0
        %1433 = vmatpush1.bf16.msra.mxu0 %v1349
        %1434 = vmatprep.mubr.bf16.mxu0 %v1391
        %1435 = vmatmul.mubr.bf16.gmra.mrb[0].mxu0 %v1390
        %v1436 = vpop.f32.mrb[0].mxu0
        %v1437 = vadd.f32 %v1353, %v1436
        %v1438 = vpop.f32.mrb[0].mxu0
        %v1439 = vpop.f32.mrb[0].mxu0
        %v1440 = vadd.f32 %v1358, %v1439
        %v1441 = vpop.f32.mrb[0].mxu0
        %1442 = vmatprep.mubr.bf16.mxu0 %v1393
        %1443 = vmatmul.mubr.bf16.gmra.mrb[0].mxu0 %v1392
        %v1444 = vpop.f32.mrb[0].mxu0
        %v1445 = vadd.f32 %v1363, %v1444
        %v1446 = vpop.f32.mrb[0].mxu0
        %v1447 = vpop.f32.mrb[0].mxu0
        %v1448 = vadd.f32 %v1368, %v1447
        %v1449 = vpop.f32.mrb[0].mxu0
        %1450 = vmatprep.mubr.bf16.mxu0 %v1395
        %1451 = vmatmul.mubr.bf16.gmra.mrb[0].mxu0 %v1394
        %v1452 = vpop.f32.mrb[0].mxu0
        %v1453 = vadd.f32 %v1373, %v1452
        %v1454 = vpop.f32.mrb[0].mxu0
        %v1455 = vpop.f32.mrb[0].mxu0
        %v1456 = vpop.f32.mrb[0].mxu0
        %1457 = vdwg.mxu0
        %v1458 = vpack.c.bf16 %v757, %v756
        %v1459 = vpack.c.bf16 %v759, %v758
        %v1460 = vpack.c.bf16 %v760, %v760
        %v1462 = vsel %vm1137, %v1460, 0
        %1464 = vmatprep.subr.bf16.mxu0 0
        %1465 = vmatpush1.bf16.msra.mxu0 %v1458
        %1466 = vmatprep.subr.bf16.mxu0 0
        %1467 = vmatpush1.bf16.msra.mxu0 %v1459
        %1468 = vmatprep.subr.bf16.mxu0 0
        %1469 = vmatpush1.bf16.msra.mxu0 %v1462
        %1470 = vmatprep.subr.bf16.mxu0 0
        %1471 = vmatpush1.bf16.msra.mxu0 0
        %1472 = vmatprep.subr.bf16.mxu0 0
        %1473 = vmatpush1.bf16.msra.mxu0 0
        %1474 = vmatprep.subr.bf16.mxu0 0
        %1475 = vmatpush1.bf16.msra.mxu0 0
        %1476 = vmatprep.subr.bf16.mxu0 0
        %1477 = vmatpush1.bf16.msra.mxu0 0
        %1478 = vmatprep.subr.bf16.mxu0 0
        %1479 = vmatpush1.bf16.msra.mxu0 0
        %1480 = vmatprep.subr.bf16.mxu0 0
        %1481 = vmatpush1.bf16.msra.mxu0 0
        %1482 = vmatprep.subr.bf16.mxu0 0
        %1483 = vmatpush1.bf16.msra.mxu0 0
        %1484 = vmatprep.subr.bf16.mxu0 0
        %1485 = vmatpush1.bf16.msra.mxu0 0
        %1486 = vmatprep.subr.bf16.mxu0 0
        %1487 = vmatpush1.bf16.msra.mxu0 0
        %1488 = vmatprep.subr.bf16.mxu0 0
        %1489 = vmatpush1.bf16.msra.mxu0 0
        %1490 = vmatprep.subr.bf16.mxu0 0
        %1491 = vmatpush1.bf16.msra.mxu0 0
        %1492 = vmatprep.subr.bf16.mxu0 0
        %1493 = vmatpush1.bf16.msra.mxu0 0
        %1494 = vmatprep.subr.bf16.mxu0 0
        %1495 = vmatpush1.bf16.msra.mxu0 0
        %1496 = vmatprep.mubr.bf16.mxu0 0
        %1497 = vmatmul.mubr.bf16.gmra.mrb[0].mxu0 %v1090
        %v1498 = vpop.f32.mrb[0].mxu0
        %v1499 = vadd.f32 %v851, %v1498
        %v1500 = vpop.f32.mrb[0].mxu0
        %v1501 = vpop.f32.mrb[0].mxu0
        %v1502 = vadd.f32 %v856, %v1501
        %v1503 = vpop.f32.mrb[0].mxu0
        %1504 = vmatprep.mubr.bf16.mxu0 0
        %1505 = vmatmul.mubr.bf16.gmra.mrb[0].mxu0 %v1093
        %v1506 = vpop.f32.mrb[0].mxu0
        %v1507 = vadd.f32 %v861, %v1506
        %v1508 = vpop.f32.mrb[0].mxu0
        %v1509 = vpop.f32.mrb[0].mxu0
        %v1510 = vadd.f32 %v866, %v1509
        %v1511 = vpop.f32.mrb[0].mxu0
        %1512 = vmatprep.mubr.bf16.mxu0 0
        %1513 = vmatmul.mubr.bf16.gmra.mrb[0].mxu0 %v1096
        %v1514 = vpop.f32.mrb[0].mxu0
        %v1515 = vadd.f32 %v871, %v1514
        %v1516 = vpop.f32.mrb[0].mxu0
        %v1517 = vpop.f32.mrb[0].mxu0
        %v1518 = vadd.f32 %v876, %v1517
        %v1519 = vpop.f32.mrb[0].mxu0
        %1520 = vmatprep.mubr.bf16.mxu0 0
        %1521 = vmatmul.mubr.bf16.gmra.mrb[0].mxu0 %v1099
        %v1522 = vpop.f32.mrb[0].mxu0
        %v1523 = vadd.f32 %v881, %v1522
        %v1524 = vpop.f32.mrb[0].mxu0
        %v1525 = vpop.f32.mrb[0].mxu0
        %v1526 = vadd.f32 %v886, %v1525
        %v1527 = vpop.f32.mrb[0].mxu0
        %1528 = vmatprep.mubr.bf16.mxu0 0
        %1529 = vmatmul.mubr.bf16.gmra.mrb[0].mxu0 %v1102
        %v1530 = vpop.f32.mrb[0].mxu0
        %v1531 = vadd.f32 %v891, %v1530
        %v1532 = vpop.f32.mrb[0].mxu0
        %v1533 = vpop.f32.mrb[0].mxu0
        %v1534 = vadd.f32 %v896, %v1533
        %v1535 = vpop.f32.mrb[0].mxu0
        %1536 = vmatprep.mubr.bf16.mxu0 0
        %1537 = vmatmul.mubr.bf16.gmra.mrb[0].mxu0 %v1105
        %v1538 = vpop.f32.mrb[0].mxu0
        %v1539 = vadd.f32 %v901, %v1538
        %v1540 = vpop.f32.mrb[0].mxu0
        %v1541 = vpop.f32.mrb[0].mxu0
        %v1542 = vadd.f32 %v906, %v1541
        %v1543 = vpop.f32.mrb[0].mxu0
        %1544 = vmatprep.mubr.bf16.mxu0 0
        %1545 = vmatmul.mubr.bf16.gmra.mrb[0].mxu0 %v1108
        %v1546 = vpop.f32.mrb[0].mxu0
        %v1547 = vadd.f32 %v911, %v1546
        %v1548 = vpop.f32.mrb[0].mxu0
        %v1549 = vpop.f32.mrb[0].mxu0
        %v1550 = vadd.f32 %v916, %v1549
        %v1551 = vpop.f32.mrb[0].mxu0
        %1552 = vmatprep.mubr.bf16.mxu0 0
        %1553 = vmatmul.mubr.bf16.gmra.mrb[0].mxu0 %v1111
        %v1554 = vpop.f32.mrb[0].mxu0
        %v1555 = vadd.f32 %v921, %v1554
        %v1556 = vpop.f32.mrb[0].mxu0
        %v1557 = vpop.f32.mrb[0].mxu0
        %v1558 = vadd.f32 %v926, %v1557
        %v1559 = vpop.f32.mrb[0].mxu0
        %1560 = vmatprep.mubr.bf16.mxu0 0
        %1561 = vmatmul.mubr.bf16.gmra.mrb[0].mxu0 %v1114
        %v1562 = vpop.f32.mrb[0].mxu0
        %v1563 = vadd.f32 %v931, %v1562
        %v1564 = vpop.f32.mrb[0].mxu0
        %v1565 = vpop.f32.mrb[0].mxu0
        %v1566 = vadd.f32 %v936, %v1565
        %v1567 = vpop.f32.mrb[0].mxu0
        %1568 = vmatprep.mubr.bf16.mxu0 0
        %1569 = vmatmul.mubr.bf16.gmra.mrb[0].mxu0 %v1117
        %v1570 = vpop.f32.mrb[0].mxu0
        %v1571 = vadd.f32 %v941, %v1570
        %v1572 = vpop.f32.mrb[0].mxu0
        %v1573 = vpop.f32.mrb[0].mxu0
        %v1574 = vadd.f32 %v946, %v1573
        %v1575 = vpop.f32.mrb[0].mxu0
        %1576 = vmatprep.mubr.bf16.mxu0 0
        %1577 = vmatmul.mubr.bf16.gmra.mrb[0].mxu0 %v1120
        %v1578 = vpop.f32.mrb[0].mxu0
        %v1579 = vadd.f32 %v951, %v1578
        %v1580 = vpop.f32.mrb[0].mxu0
        %v1581 = vpop.f32.mrb[0].mxu0
        %v1582 = vadd.f32 %v956, %v1581
        %v1583 = vpop.f32.mrb[0].mxu0
        %1584 = vmatprep.mubr.bf16.mxu0 0
        %1585 = vmatmul.mubr.bf16.gmra.mrb[0].mxu0 %v1123
        %v1586 = vpop.f32.mrb[0].mxu0
        %v1587 = vadd.f32 %v961, %v1586
        %v1588 = vpop.f32.mrb[0].mxu0
        %v1589 = vpop.f32.mrb[0].mxu0
        %v1590 = vadd.f32 %v966, %v1589
        %v1591 = vpop.f32.mrb[0].mxu0
        %1592 = vmatprep.mubr.bf16.mxu0 0
        %1593 = vmatmul.mubr.bf16.gmra.mrb[0].mxu0 %v1126
        %v1594 = vpop.f32.mrb[0].mxu0
        %v1595 = vadd.f32 %v971, %v1594
        %v1596 = vpop.f32.mrb[0].mxu0
        %v1597 = vpop.f32.mrb[0].mxu0
        %v1598 = vadd.f32 %v976, %v1597
        %v1599 = vpop.f32.mrb[0].mxu0
        %1600 = vmatprep.mubr.bf16.mxu0 0
        %1601 = vmatmul.mubr.bf16.gmra.mrb[0].mxu0 %v1129
        %v1602 = vpop.f32.mrb[0].mxu0
        %v1603 = vadd.f32 %v981, %v1602
        %v1604 = vpop.f32.mrb[0].mxu0
        %v1605 = vpop.f32.mrb[0].mxu0
        %v1606 = vadd.f32 %v986, %v1605
        %v1607 = vpop.f32.mrb[0].mxu0
        %1608 = vmatprep.mubr.bf16.mxu0 0
        %1609 = vmatmul.mubr.bf16.gmra.mrb[0].mxu0 %v1132
        %v1610 = vpop.f32.mrb[0].mxu0
        %v1611 = vadd.f32 %v991, %v1610
        %v1612 = vpop.f32.mrb[0].mxu0
        %v1613 = vpop.f32.mrb[0].mxu0
        %v1614 = vadd.f32 %v996, %v1613
        %v1615 = vpop.f32.mrb[0].mxu0
        %1616 = vmatprep.mubr.bf16.mxu0 0
        %1617 = vmatmul.mubr.bf16.gmra.mrb[0].mxu0 %v1135
        %v1618 = vpop.f32.mrb[0].mxu0
        %v1619 = vadd.f32 %v1001, %v1618
        %v1620 = vpop.f32.mrb[0].mxu0
        %v1621 = vpop.f32.mrb[0].mxu0
        %v1622 = vadd.f32 %v1006, %v1621
        %v1623 = vpop.f32.mrb[0].mxu0
        %1624 = vdwg.mxu0
        %v1625 = vmax.f32 %v1499, 0.0
        %v1626 = vmax.f32 %v1502, 0.0
        %v1627 = vmax.f32 %v1507, 0.0
        %v1628 = vmax.f32 %v1510, 0.0
        %v1629 = vmax.f32 %v1515, 0.0
        %v1630 = vmax.f32 %v1518, 0.0
        %v1631 = vmax.f32 %v1523, 0.0
        %v1632 = vmax.f32 %v1526, 0.0
        %v1633 = vmax.f32 %v1531, 0.0
        %v1634 = vmax.f32 %v1534, 0.0
        %v1635 = vmax.f32 %v1539, 0.0
        %v1636 = vmax.f32 %v1542, 0.0
        %v1637 = vmax.f32 %v1547, 0.0
        %v1638 = vmax.f32 %v1550, 0.0
        %v1639 = vmax.f32 %v1555, 0.0
        %v1640 = vmax.f32 %v1558, 0.0
        %v1641 = vmax.f32 %v1563, 0.0
        %v1642 = vmax.f32 %v1566, 0.0
        %v1643 = vmax.f32 %v1571, 0.0
        %v1644 = vmax.f32 %v1574, 0.0
        %v1645 = vmax.f32 %v1579, 0.0
        %v1646 = vmax.f32 %v1582, 0.0
        %v1647 = vmax.f32 %v1587, 0.0
        %v1648 = vmax.f32 %v1590, 0.0
        %v1649 = vmax.f32 %v1595, 0.0
        %v1650 = vmax.f32 %v1598, 0.0
        %v1651 = vmax.f32 %v1603, 0.0
        %v1652 = vmax.f32 %v1606, 0.0
        %v1653 = vmax.f32 %v1611, 0.0
        %v1654 = vmax.f32 %v1614, 0.0
        %v1655 = vmax.f32 %v1619, 0.0
        %v1656 = vmax.f32 %v1622, 0.0
        %v1657 = vpack.c.bf16 %v1626, %v1625
        %v1658 = vpack.c.bf16 %v1628, %v1627
        %v1659 = vpack.c.bf16 %v1630, %v1629
        %v1660 = vpack.c.bf16 %v1632, %v1631
        %v1661 = vpack.c.bf16 %v1634, %v1633
        %v1662 = vpack.c.bf16 %v1636, %v1635
        %v1663 = vpack.c.bf16 %v1638, %v1637
        %v1664 = vpack.c.bf16 %v1640, %v1639
        %v1665 = vpack.c.bf16 %v1642, %v1641
        %v1666 = vpack.c.bf16 %v1644, %v1643
        %v1667 = vpack.c.bf16 %v1646, %v1645
        %v1668 = vpack.c.bf16 %v1648, %v1647
        %v1669 = vpack.c.bf16 %v1650, %v1649
        %v1670 = vpack.c.bf16 %v1652, %v1651
        %v1671 = vpack.c.bf16 %v1654, %v1653
        %v1672 = vpack.c.bf16 %v1656, %v1655
        %1673 = vmatprep.subr.bf16.mxu0 0
        %1674 = vmatpush1.bf16.msra.mxu0 %v1657
        %1675 = vmatprep.subr.bf16.mxu0 0
        %1676 = vmatpush1.bf16.msra.mxu0 %v1658
        %1677 = vmatprep.subr.bf16.mxu0 0
        %1678 = vmatpush1.bf16.msra.mxu0 %v1659
        %1679 = vmatprep.subr.bf16.mxu0 0
        %1680 = vmatpush1.bf16.msra.mxu0 %v1660
        %1681 = vmatprep.subr.bf16.mxu0 0
        %1682 = vmatpush1.bf16.msra.mxu0 %v1661
        %1683 = vmatprep.subr.bf16.mxu0 0
        %1684 = vmatpush1.bf16.msra.mxu0 %v1662
        %1685 = vmatprep.subr.bf16.mxu0 0
        %1686 = vmatpush1.bf16.msra.mxu0 %v1663
        %1687 = vmatprep.subr.bf16.mxu0 0
        %1688 = vmatpush1.bf16.msra.mxu0 %v1664
        %1689 = vmatprep.subr.bf16.mxu0 0
        %1690 = vmatpush1.bf16.msra.mxu0 %v1665
        %1691 = vmatprep.subr.bf16.mxu0 0
        %1692 = vmatpush1.bf16.msra.mxu0 %v1666
        %1693 = vmatprep.subr.bf16.mxu0 0
        %1694 = vmatpush1.bf16.msra.mxu0 %v1667
        %1695 = vmatprep.subr.bf16.mxu0 0
        %1696 = vmatpush1.bf16.msra.mxu0 %v1668
        %1697 = vmatprep.subr.bf16.mxu0 0
        %1698 = vmatpush1.bf16.msra.mxu0 %v1669
        %1699 = vmatprep.subr.bf16.mxu0 0
        %1700 = vmatpush1.bf16.msra.mxu0 %v1670
        %1701 = vmatprep.subr.bf16.mxu0 0
        %1702 = vmatpush1.bf16.msra.mxu0 %v1671
        %1703 = vmatprep.subr.bf16.mxu0 0
        %1704 = vmatpush1.bf16.msra.mxu0 %v1672
        %1705 = vmatprep.mubr.bf16.mxu0 %v1391
        %1706 = vmatmul.mubr.bf16.gmra.mrb[0].mxu0 %v1390
        %v1707 = vpop.f32.mrb[0].mxu0
        %v1708 = vadd.f32 %v1353, %v1707
        %v1709 = vpop.f32.mrb[0].mxu0
        %v1710 = vpop.f32.mrb[0].mxu0
        %v1711 = vadd.f32 %v1358, %v1710
        %v1712 = vpop.f32.mrb[0].mxu0
        %1713 = vmatprep.mubr.bf16.mxu0 %v1393
        %1714 = vmatmul.mubr.bf16.gmra.mrb[0].mxu0 %v1392
        %v1715 = vpop.f32.mrb[0].mxu0
        %v1716 = vadd.f32 %v1363, %v1715
        %v1717 = vpop.f32.mrb[0].mxu0
        %v1718 = vpop.f32.mrb[0].mxu0
        %v1719 = vadd.f32 %v1368, %v1718
        %v1720 = vpop.f32.mrb[0].mxu0
        %1721 = vmatprep.mubr.bf16.mxu0 %v1395
        %1722 = vmatmul.mubr.bf16.gmra.mrb[0].mxu0 %v1394
        %v1723 = vpop.f32.mrb[0].mxu0
        %v1724 = vadd.f32 %v1373, %v1723
        %v1725 = vpop.f32.mrb[0].mxu0
        %v1726 = vpop.f32.mrb[0].mxu0
        %v1727 = vpop.f32.mrb[0].mxu0
        %1728 = vdwg.mxu0
        %v1729 = vpack.c.bf16 %v762, %v761
        %v1730 = vpack.c.bf16 %v764, %v763
        %v1731 = vpack.c.bf16 %v765, %v765
        %v1733 = vsel %vm1137, %v1731, 0
        %1735 = vmatprep.subr.bf16.mxu0 0
        %1736 = vmatpush1.bf16.msra.mxu0 %v1729
        %1737 = vmatprep.subr.bf16.mxu0 0
        %1738 = vmatpush1.bf16.msra.mxu0 %v1730
        %1739 = vmatprep.subr.bf16.mxu0 0
        %1740 = vmatpush1.bf16.msra.mxu0 %v1733
        %1741 = vmatprep.subr.bf16.mxu0 0
        %1742 = vmatpush1.bf16.msra.mxu0 0
        %1743 = vmatprep.subr.bf16.mxu0 0
        %1744 = vmatpush1.bf16.msra.mxu0 0
        %1745 = vmatprep.subr.bf16.mxu0 0
        %1746 = vmatpush1.bf16.msra.mxu0 0
        %1747 = vmatprep.subr.bf16.mxu0 0
        %1748 = vmatpush1.bf16.msra.mxu0 0
        %1749 = vmatprep.subr.bf16.mxu0 0
        %1750 = vmatpush1.bf16.msra.mxu0 0
        %1751 = vmatprep.subr.bf16.mxu0 0
        %1752 = vmatpush1.bf16.msra.mxu0 0
        %1753 = vmatprep.subr.bf16.mxu0 0
        %1754 = vmatpush1.bf16.msra.mxu0 0
        %1755 = vmatprep.subr.bf16.mxu0 0
        %1756 = vmatpush1.bf16.msra.mxu0 0
        %1757 = vmatprep.subr.bf16.mxu0 0
        %1758 = vmatpush1.bf16.msra.mxu0 0
        %1759 = vmatprep.subr.bf16.mxu0 0
        %1760 = vmatpush1.bf16.msra.mxu0 0
        %1761 = vmatprep.subr.bf16.mxu0 0
        %1762 = vmatpush1.bf16.msra.mxu0 0
        %1763 = vmatprep.subr.bf16.mxu0 0
        %1764 = vmatpush1.bf16.msra.mxu0 0
        %1765 = vmatprep.subr.bf16.mxu0 0
        %1766 = vmatpush1.bf16.msra.mxu0 0
        %1767 = vmatprep.mubr.bf16.mxu0 0
        %1768 = vmatmul.mubr.bf16.gmra.mrb[0].mxu0 %v1090
        %v1769 = vpop.f32.mrb[0].mxu0
        %v1770 = vadd.f32 %v851, %v1769
        %v1771 = vpop.f32.mrb[0].mxu0
        %v1772 = vpop.f32.mrb[0].mxu0
        %v1773 = vadd.f32 %v856, %v1772
        %v1774 = vpop.f32.mrb[0].mxu0
        %1775 = vmatprep.mubr.bf16.mxu0 0
        %1776 = vmatmul.mubr.bf16.gmra.mrb[0].mxu0 %v1093
        %v1777 = vpop.f32.mrb[0].mxu0
        %v1778 = vadd.f32 %v861, %v1777
        %v1779 = vpop.f32.mrb[0].mxu0
        %v1780 = vpop.f32.mrb[0].mxu0
        %v1781 = vadd.f32 %v866, %v1780
        %v1782 = vpop.f32.mrb[0].mxu0
        %1783 = vmatprep.mubr.bf16.mxu0 0
        %1784 = vmatmul.mubr.bf16.gmra.mrb[0].mxu0 %v1096
        %v1785 = vpop.f32.mrb[0].mxu0
        %v1786 = vadd.f32 %v871, %v1785
        %v1787 = vpop.f32.mrb[0].mxu0
        %v1788 = vpop.f32.mrb[0].mxu0
        %v1789 = vadd.f32 %v876, %v1788
        %v1790 = vpop.f32.mrb[0].mxu0
        %1791 = vmatprep.mubr.bf16.mxu0 0
        %1792 = vmatmul.mubr.bf16.gmra.mrb[0].mxu0 %v1099
        %v1793 = vpop.f32.mrb[0].mxu0
        %v1794 = vadd.f32 %v881, %v1793
        %v1795 = vpop.f32.mrb[0].mxu0
        %v1796 = vpop.f32.mrb[0].mxu0
        %v1797 = vadd.f32 %v886, %v1796
        %v1798 = vpop.f32.mrb[0].mxu0
        %1799 = vmatprep.mubr.bf16.mxu0 0
        %1800 = vmatmul.mubr.bf16.gmra.mrb[0].mxu0 %v1102
        %v1801 = vpop.f32.mrb[0].mxu0
        %v1802 = vadd.f32 %v891, %v1801
        %v1803 = vpop.f32.mrb[0].mxu0
        %v1804 = vpop.f32.mrb[0].mxu0
        %v1805 = vadd.f32 %v896, %v1804
        %v1806 = vpop.f32.mrb[0].mxu0
        %1807 = vmatprep.mubr.bf16.mxu0 0
        %1808 = vmatmul.mubr.bf16.gmra.mrb[0].mxu0 %v1105
        %v1809 = vpop.f32.mrb[0].mxu0
        %v1810 = vadd.f32 %v901, %v1809
        %v1811 = vpop.f32.mrb[0].mxu0
        %v1812 = vpop.f32.mrb[0].mxu0
        %v1813 = vadd.f32 %v906, %v1812
        %v1814 = vpop.f32.mrb[0].mxu0
        %1815 = vmatprep.mubr.bf16.mxu0 0
        %1816 = vmatmul.mubr.bf16.gmra.mrb[0].mxu0 %v1108
        %v1817 = vpop.f32.mrb[0].mxu0
        %v1818 = vadd.f32 %v911, %v1817
        %v1819 = vpop.f32.mrb[0].mxu0
        %v1820 = vpop.f32.mrb[0].mxu0
        %v1821 = vadd.f32 %v916, %v1820
        %v1822 = vpop.f32.mrb[0].mxu0
        %1823 = vmatprep.mubr.bf16.mxu0 0
        %1824 = vmatmul.mubr.bf16.gmra.mrb[0].mxu0 %v1111
        %v1825 = vpop.f32.mrb[0].mxu0
        %v1826 = vadd.f32 %v921, %v1825
        %v1827 = vpop.f32.mrb[0].mxu0
        %v1828 = vpop.f32.mrb[0].mxu0
        %v1829 = vadd.f32 %v926, %v1828
        %v1830 = vpop.f32.mrb[0].mxu0
        %1831 = vmatprep.mubr.bf16.mxu0 0
        %1832 = vmatmul.mubr.bf16.gmra.mrb[0].mxu0 %v1114
        %v1833 = vpop.f32.mrb[0].mxu0
        %v1834 = vadd.f32 %v931, %v1833
        %v1835 = vpop.f32.mrb[0].mxu0
        %v1836 = vpop.f32.mrb[0].mxu0
        %v1837 = vadd.f32 %v936, %v1836
        %v1838 = vpop.f32.mrb[0].mxu0
        %1839 = vmatprep.mubr.bf16.mxu0 0
        %1840 = vmatmul.mubr.bf16.gmra.mrb[0].mxu0 %v1117
        %v1841 = vpop.f32.mrb[0].mxu0
        %v1842 = vadd.f32 %v941, %v1841
        %v1843 = vpop.f32.mrb[0].mxu0
        %v1844 = vpop.f32.mrb[0].mxu0
        %v1845 = vadd.f32 %v946, %v1844
        %v1846 = vpop.f32.mrb[0].mxu0
        %1847 = vmatprep.mubr.bf16.mxu0 0
        %1848 = vmatmul.mubr.bf16.gmra.mrb[0].mxu0 %v1120
        %v1849 = vpop.f32.mrb[0].mxu0
        %v1850 = vadd.f32 %v951, %v1849
        %v1851 = vpop.f32.mrb[0].mxu0
        %v1852 = vpop.f32.mrb[0].mxu0
        %v1853 = vadd.f32 %v956, %v1852
        %v1854 = vpop.f32.mrb[0].mxu0
        %1855 = vmatprep.mubr.bf16.mxu0 0
        %1856 = vmatmul.mubr.bf16.gmra.mrb[0].mxu0 %v1123
        %v1857 = vpop.f32.mrb[0].mxu0
        %v1858 = vadd.f32 %v961, %v1857
        %v1859 = vpop.f32.mrb[0].mxu0
        %v1860 = vpop.f32.mrb[0].mxu0
        %v1861 = vadd.f32 %v966, %v1860
        %v1862 = vpop.f32.mrb[0].mxu0
        %1863 = vmatprep.mubr.bf16.mxu0 0
        %1864 = vmatmul.mubr.bf16.gmra.mrb[0].mxu0 %v1126
        %v1865 = vpop.f32.mrb[0].mxu0
        %v1866 = vadd.f32 %v971, %v1865
        %v1867 = vpop.f32.mrb[0].mxu0
        %v1868 = vpop.f32.mrb[0].mxu0
        %v1869 = vadd.f32 %v976, %v1868
        %v1870 = vpop.f32.mrb[0].mxu0
        %1871 = vmatprep.mubr.bf16.mxu0 0
        %1872 = vmatmul.mubr.bf16.gmra.mrb[0].mxu0 %v1129
        %v1873 = vpop.f32.mrb[0].mxu0
        %v1874 = vadd.f32 %v981, %v1873
        %v1875 = vpop.f32.mrb[0].mxu0
        %v1876 = vpop.f32.mrb[0].mxu0
        %v1877 = vadd.f32 %v986, %v1876
        %v1878 = vpop.f32.mrb[0].mxu0
        %1879 = vmatprep.mubr.bf16.mxu0 0
        %1880 = vmatmul.mubr.bf16.gmra.mrb[0].mxu0 %v1132
        %v1881 = vpop.f32.mrb[0].mxu0
        %v1882 = vadd.f32 %v991, %v1881
        %v1883 = vpop.f32.mrb[0].mxu0
        %v1884 = vpop.f32.mrb[0].mxu0
        %v1885 = vadd.f32 %v996, %v1884
        %v1886 = vpop.f32.mrb[0].mxu0
        %1887 = vmatprep.mubr.bf16.mxu0 0
        %1888 = vmatmul.mubr.bf16.gmra.mrb[0].mxu0 %v1135
        %v1889 = vpop.f32.mrb[0].mxu0
        %v1890 = vadd.f32 %v1001, %v1889
        %v1891 = vpop.f32.mrb[0].mxu0
        %v1892 = vpop.f32.mrb[0].mxu0
        %v1893 = vadd.f32 %v1006, %v1892
        %v1894 = vpop.f32.mrb[0].mxu0
        %1895 = vdwg.mxu0
        %v1896 = vmax.f32 %v1770, 0.0
        %v1897 = vmax.f32 %v1773, 0.0
        %v1898 = vmax.f32 %v1778, 0.0
        %v1899 = vmax.f32 %v1781, 0.0
        %v1900 = vmax.f32 %v1786, 0.0
        %v1901 = vmax.f32 %v1789, 0.0
        %v1902 = vmax.f32 %v1794, 0.0
        %v1903 = vmax.f32 %v1797, 0.0
        %v1904 = vmax.f32 %v1802, 0.0
        %v1905 = vmax.f32 %v1805, 0.0
        %v1906 = vmax.f32 %v1810, 0.0
        %v1907 = vmax.f32 %v1813, 0.0
        %v1908 = vmax.f32 %v1818, 0.0
        %v1909 = vmax.f32 %v1821, 0.0
        %v1910 = vmax.f32 %v1826, 0.0
        %v1911 = vmax.f32 %v1829, 0.0
        %v1912 = vmax.f32 %v1834, 0.0
        %v1913 = vmax.f32 %v1837, 0.0
        %v1914 = vmax.f32 %v1842, 0.0
        %v1915 = vmax.f32 %v1845, 0.0
        %v1916 = vmax.f32 %v1850, 0.0
        %v1917 = vmax.f32 %v1853, 0.0
        %v1918 = vmax.f32 %v1858, 0.0
        %v1919 = vmax.f32 %v1861, 0.0
        %v1920 = vmax.f32 %v1866, 0.0
        %v1921 = vmax.f32 %v1869, 0.0
        %v1922 = vmax.f32 %v1874, 0.0
        %v1923 = vmax.f32 %v1877, 0.0
        %v1924 = vmax.f32 %v1882, 0.0
        %v1925 = vmax.f32 %v1885, 0.0
        %v1926 = vmax.f32 %v1890, 0.0
        %v1927 = vmax.f32 %v1893, 0.0
        %v1928 = vpack.c.bf16 %v1897, %v1896
        %v1929 = vpack.c.bf16 %v1899, %v1898
        %v1930 = vpack.c.bf16 %v1901, %v1900
        %v1931 = vpack.c.bf16 %v1903, %v1902
        %v1932 = vpack.c.bf16 %v1905, %v1904
        %v1933 = vpack.c.bf16 %v1907, %v1906
        %v1934 = vpack.c.bf16 %v1909, %v1908
        %v1935 = vpack.c.bf16 %v1911, %v1910
        %v1936 = vpack.c.bf16 %v1913, %v1912
        %v1937 = vpack.c.bf16 %v1915, %v1914
        %v1938 = vpack.c.bf16 %v1917, %v1916
        %v1939 = vpack.c.bf16 %v1919, %v1918
        %v1940 = vpack.c.bf16 %v1921, %v1920
        %v1941 = vpack.c.bf16 %v1923, %v1922
        %v1942 = vpack.c.bf16 %v1925, %v1924
        %v1943 = vpack.c.bf16 %v1927, %v1926
        %1944 = vmatprep.subr.bf16.mxu0 0
        %1945 = vmatpush1.bf16.msra.mxu0 %v1928
        %1946 = vmatprep.subr.bf16.mxu0 0
        %1947 = vmatpush1.bf16.msra.mxu0 %v1929
        %1948 = vmatprep.subr.bf16.mxu0 0
        %1949 = vmatpush1.bf16.msra.mxu0 %v1930
        %1950 = vmatprep.subr.bf16.mxu0 0
        %1951 = vmatpush1.bf16.msra.mxu0 %v1931
        %1952 = vmatprep.subr.bf16.mxu0 0
        %1953 = vmatpush1.bf16.msra.mxu0 %v1932
        %1954 = vmatprep.subr.bf16.mxu0 0
        %1955 = vmatpush1.bf16.msra.mxu0 %v1933
        %1956 = vmatprep.subr.bf16.mxu0 0
        %1957 = vmatpush1.bf16.msra.mxu0 %v1934
        %1958 = vmatprep.subr.bf16.mxu0 0
        %1959 = vmatpush1.bf16.msra.mxu0 %v1935
        %1960 = vmatprep.subr.bf16.mxu0 0
        %1961 = vmatpush1.bf16.msra.mxu0 %v1936
        %1962 = vmatprep.subr.bf16.mxu0 0
        %1963 = vmatpush1.bf16.msra.mxu0 %v1937
        %1964 = vmatprep.subr.bf16.mxu0 0
        %1965 = vmatpush1.bf16.msra.mxu0 %v1938
        %1966 = vmatprep.subr.bf16.mxu0 0
        %1967 = vmatpush1.bf16.msra.mxu0 %v1939
        %1968 = vmatprep.subr.bf16.mxu0 0
        %1969 = vmatpush1.bf16.msra.mxu0 %v1940
        %1970 = vmatprep.subr.bf16.mxu0 0
        %1971 = vmatpush1.bf16.msra.mxu0 %v1941
        %1972 = vmatprep.subr.bf16.mxu0 0
        %1973 = vmatpush1.bf16.msra.mxu0 %v1942
        %1974 = vmatprep.subr.bf16.mxu0 0
        %1975 = vmatpush1.bf16.msra.mxu0 %v1943
        %1976 = vmatprep.mubr.bf16.mxu0 %v1391
        %1977 = vmatmul.mubr.bf16.gmra.mrb[0].mxu0 %v1390
        %v1978 = vpop.f32.mrb[0].mxu0
        %v1979 = vadd.f32 %v1353, %v1978
        %v1980 = vpop.f32.mrb[0].mxu0
        %v1981 = vpop.f32.mrb[0].mxu0
        %v1982 = vadd.f32 %v1358, %v1981
        %v1983 = vpop.f32.mrb[0].mxu0
        %1984 = vmatprep.mubr.bf16.mxu0 %v1393
        %1985 = vmatmul.mubr.bf16.gmra.mrb[0].mxu0 %v1392
        %v1986 = vpop.f32.mrb[0].mxu0
        %v1987 = vadd.f32 %v1363, %v1986
        %v1988 = vpop.f32.mrb[0].mxu0
        %v1989 = vpop.f32.mrb[0].mxu0
        %v1990 = vadd.f32 %v1368, %v1989
        %v1991 = vpop.f32.mrb[0].mxu0
        %1992 = vmatprep.mubr.bf16.mxu0 %v1395
        %1993 = vmatmul.mubr.bf16.gmra.mrb[0].mxu0 %v1394
        %v1994 = vpop.f32.mrb[0].mxu0
        %v1995 = vadd.f32 %v1373, %v1994
        %v1996 = vpop.f32.mrb[0].mxu0
        %v1997 = vpop.f32.mrb[0].mxu0
        %v1998 = vpop.f32.mrb[0].mxu0
        %1999 = vdwg.mxu0
        %v2000 = vpack.c.bf16 %v767, %v766
        %v2001 = vpack.c.bf16 %v769, %v768
        %v2002 = vpack.c.bf16 %v770, %v770
        %v2004 = vsel %vm1137, %v2002, 0
        %2006 = vmatprep.subr.bf16.mxu0 0
        %2007 = vmatpush1.bf16.msra.mxu0 %v2000
        %2008 = vmatprep.subr.bf16.mxu0 0
        %2009 = vmatpush1.bf16.msra.mxu0 %v2001
        %2010 = vmatprep.subr.bf16.mxu0 0
        %2011 = vmatpush1.bf16.msra.mxu0 %v2004
        %2012 = vmatprep.subr.bf16.mxu0 0
        %2013 = vmatpush1.bf16.msra.mxu0 0
        %2014 = vmatprep.subr.bf16.mxu0 0
        %2015 = vmatpush1.bf16.msra.mxu0 0
        %2016 = vmatprep.subr.bf16.mxu0 0
        %2017 = vmatpush1.bf16.msra.mxu0 0
        %2018 = vmatprep.subr.bf16.mxu0 0
        %2019 = vmatpush1.bf16.msra.mxu0 0
        %2020 = vmatprep.subr.bf16.mxu0 0
        %2021 = vmatpush1.bf16.msra.mxu0 0
        %2022 = vmatprep.subr.bf16.mxu0 0
        %2023 = vmatpush1.bf16.msra.mxu0 0
        %2024 = vmatprep.subr.bf16.mxu0 0
        %2025 = vmatpush1.bf16.msra.mxu0 0
        %2026 = vmatprep.subr.bf16.mxu0 0
        %2027 = vmatpush1.bf16.msra.mxu0 0
        %2028 = vmatprep.subr.bf16.mxu0 0
        %2029 = vmatpush1.bf16.msra.mxu0 0
        %2030 = vmatprep.subr.bf16.mxu0 0
        %2031 = vmatpush1.bf16.msra.mxu0 0
        %2032 = vmatprep.subr.bf16.mxu0 0
        %2033 = vmatpush1.bf16.msra.mxu0 0
        %2034 = vmatprep.subr.bf16.mxu0 0
        %2035 = vmatpush1.bf16.msra.mxu0 0
        %2036 = vmatprep.subr.bf16.mxu0 0
        %2037 = vmatpush1.bf16.msra.mxu0 0
        %2038 = vmatprep.mubr.bf16.mxu0 0
        %2039 = vmatmul.mubr.bf16.gmra.mrb[0].mxu0 %v1090
        %v2040 = vpop.f32.mrb[0].mxu0
        %v2041 = vadd.f32 %v851, %v2040
        %v2042 = vpop.f32.mrb[0].mxu0
        %v2043 = vpop.f32.mrb[0].mxu0
        %v2044 = vadd.f32 %v856, %v2043
        %v2045 = vpop.f32.mrb[0].mxu0
        %2046 = vmatprep.mubr.bf16.mxu0 0
        %2047 = vmatmul.mubr.bf16.gmra.mrb[0].mxu0 %v1093
        %v2048 = vpop.f32.mrb[0].mxu0
        %v2049 = vadd.f32 %v861, %v2048
        %v2050 = vpop.f32.mrb[0].mxu0
        %v2051 = vpop.f32.mrb[0].mxu0
        %v2052 = vadd.f32 %v866, %v2051
        %v2053 = vpop.f32.mrb[0].mxu0
        %2054 = vmatprep.mubr.bf16.mxu0 0
        %2055 = vmatmul.mubr.bf16.gmra.mrb[0].mxu0 %v1096
        %v2056 = vpop.f32.mrb[0].mxu0
        %v2057 = vadd.f32 %v871, %v2056
        %v2058 = vpop.f32.mrb[0].mxu0
        %v2059 = vpop.f32.mrb[0].mxu0
        %v2060 = vadd.f32 %v876, %v2059
        %v2061 = vpop.f32.mrb[0].mxu0
        %2062 = vmatprep.mubr.bf16.mxu0 0
        %2063 = vmatmul.mubr.bf16.gmra.mrb[0].mxu0 %v1099
        %v2064 = vpop.f32.mrb[0].mxu0
        %v2065 = vadd.f32 %v881, %v2064
        %v2066 = vpop.f32.mrb[0].mxu0
        %v2067 = vpop.f32.mrb[0].mxu0
        %v2068 = vadd.f32 %v886, %v2067
        %v2069 = vpop.f32.mrb[0].mxu0
        %2070 = vmatprep.mubr.bf16.mxu0 0
        %2071 = vmatmul.mubr.bf16.gmra.mrb[0].mxu0 %v1102
        %v2072 = vpop.f32.mrb[0].mxu0
        %v2073 = vadd.f32 %v891, %v2072
        %v2074 = vpop.f32.mrb[0].mxu0
        %v2075 = vpop.f32.mrb[0].mxu0
        %v2076 = vadd.f32 %v896, %v2075
        %v2077 = vpop.f32.mrb[0].mxu0
        %2078 = vmatprep.mubr.bf16.mxu0 0
        %2079 = vmatmul.mubr.bf16.gmra.mrb[0].mxu0 %v1105
        %v2080 = vpop.f32.mrb[0].mxu0
        %v2081 = vadd.f32 %v901, %v2080
        %v2082 = vpop.f32.mrb[0].mxu0
        %v2083 = vpop.f32.mrb[0].mxu0
        %v2084 = vadd.f32 %v906, %v2083
        %v2085 = vpop.f32.mrb[0].mxu0
        %2086 = vmatprep.mubr.bf16.mxu0 0
        %2087 = vmatmul.mubr.bf16.gmra.mrb[0].mxu0 %v1108
        %v2088 = vpop.f32.mrb[0].mxu0
        %v2089 = vadd.f32 %v911, %v2088
        %v2090 = vpop.f32.mrb[0].mxu0
        %v2091 = vpop.f32.mrb[0].mxu0
        %v2092 = vadd.f32 %v916, %v2091
        %v2093 = vpop.f32.mrb[0].mxu0
        %2094 = vmatprep.mubr.bf16.mxu0 0
        %2095 = vmatmul.mubr.bf16.gmra.mrb[0].mxu0 %v1111
        %v2096 = vpop.f32.mrb[0].mxu0
        %v2097 = vadd.f32 %v921, %v2096
        %v2098 = vpop.f32.mrb[0].mxu0
        %v2099 = vpop.f32.mrb[0].mxu0
        %v2100 = vadd.f32 %v926, %v2099
        %v2101 = vpop.f32.mrb[0].mxu0
        %2102 = vmatprep.mubr.bf16.mxu0 0
        %2103 = vmatmul.mubr.bf16.gmra.mrb[0].mxu0 %v1114
        %v2104 = vpop.f32.mrb[0].mxu0
        %v2105 = vadd.f32 %v931, %v2104
        %v2106 = vpop.f32.mrb[0].mxu0
        %v2107 = vpop.f32.mrb[0].mxu0
        %v2108 = vadd.f32 %v936, %v2107
        %v2109 = vpop.f32.mrb[0].mxu0
        %2110 = vmatprep.mubr.bf16.mxu0 0
        %2111 = vmatmul.mubr.bf16.gmra.mrb[0].mxu0 %v1117
        %v2112 = vpop.f32.mrb[0].mxu0
        %v2113 = vadd.f32 %v941, %v2112
        %v2114 = vpop.f32.mrb[0].mxu0
        %v2115 = vpop.f32.mrb[0].mxu0
        %v2116 = vadd.f32 %v946, %v2115
        %v2117 = vpop.f32.mrb[0].mxu0
        %2118 = vmatprep.mubr.bf16.mxu0 0
        %2119 = vmatmul.mubr.bf16.gmra.mrb[0].mxu0 %v1120
        %v2120 = vpop.f32.mrb[0].mxu0
        %v2121 = vadd.f32 %v951, %v2120
        %v2122 = vpop.f32.mrb[0].mxu0
        %v2123 = vpop.f32.mrb[0].mxu0
        %v2124 = vadd.f32 %v956, %v2123
        %v2125 = vpop.f32.mrb[0].mxu0
        %2126 = vmatprep.mubr.bf16.mxu0 0
        %2127 = vmatmul.mubr.bf16.gmra.mrb[0].mxu0 %v1123
        %v2128 = vpop.f32.mrb[0].mxu0
        %v2129 = vadd.f32 %v961, %v2128
        %v2130 = vpop.f32.mrb[0].mxu0
        %v2131 = vpop.f32.mrb[0].mxu0
        %v2132 = vadd.f32 %v966, %v2131
        %v2133 = vpop.f32.mrb[0].mxu0
        %2134 = vmatprep.mubr.bf16.mxu0 0
        %2135 = vmatmul.mubr.bf16.gmra.mrb[0].mxu0 %v1126
        %v2136 = vpop.f32.mrb[0].mxu0
        %v2137 = vadd.f32 %v971, %v2136
        %v2138 = vpop.f32.mrb[0].mxu0
        %v2139 = vpop.f32.mrb[0].mxu0
        %v2140 = vadd.f32 %v976, %v2139
        %v2141 = vpop.f32.mrb[0].mxu0
        %2142 = vmatprep.mubr.bf16.mxu0 0
        %2143 = vmatmul.mubr.bf16.gmra.mrb[0].mxu0 %v1129
        %v2144 = vpop.f32.mrb[0].mxu0
        %v2145 = vadd.f32 %v981, %v2144
        %v2146 = vpop.f32.mrb[0].mxu0
        %v2147 = vpop.f32.mrb[0].mxu0
        %v2148 = vadd.f32 %v986, %v2147
        %v2149 = vpop.f32.mrb[0].mxu0
        %2150 = vmatprep.mubr.bf16.mxu0 0
        %2151 = vmatmul.mubr.bf16.gmra.mrb[0].mxu0 %v1132
        %v2152 = vpop.f32.mrb[0].mxu0
        %v2153 = vadd.f32 %v991, %v2152
        %v2154 = vpop.f32.mrb[0].mxu0
        %v2155 = vpop.f32.mrb[0].mxu0
        %v2156 = vadd.f32 %v996, %v2155
        %v2157 = vpop.f32.mrb[0].mxu0
        %2158 = vmatprep.mubr.bf16.mxu0 0
        %2159 = vmatmul.mubr.bf16.gmra.mrb[0].mxu0 %v1135
        %v2160 = vpop.f32.mrb[0].mxu0
        %v2161 = vadd.f32 %v1001, %v2160
        %v2162 = vpop.f32.mrb[0].mxu0
        %v2163 = vpop.f32.mrb[0].mxu0
        %v2164 = vadd.f32 %v1006, %v2163
        %v2165 = vpop.f32.mrb[0].mxu0
        %2166 = vdwg.mxu0
        %v2167 = vmax.f32 %v2041, 0.0
        %v2168 = vmax.f32 %v2044, 0.0
        %v2169 = vmax.f32 %v2049, 0.0
        %v2170 = vmax.f32 %v2052, 0.0
        %v2171 = vmax.f32 %v2057, 0.0
        %v2172 = vmax.f32 %v2060, 0.0
        %v2173 = vmax.f32 %v2065, 0.0
        %v2174 = vmax.f32 %v2068, 0.0
        %v2175 = vmax.f32 %v2073, 0.0
        %v2176 = vmax.f32 %v2076, 0.0
        %v2177 = vmax.f32 %v2081, 0.0
        %v2178 = vmax.f32 %v2084, 0.0
        %v2179 = vmax.f32 %v2089, 0.0
        %v2180 = vmax.f32 %v2092, 0.0
        %v2181 = vmax.f32 %v2097, 0.0
        %v2182 = vmax.f32 %v2100, 0.0
        %v2183 = vmax.f32 %v2105, 0.0
        %v2184 = vmax.f32 %v2108, 0.0
        %v2185 = vmax.f32 %v2113, 0.0
        %v2186 = vmax.f32 %v2116, 0.0
        %v2187 = vmax.f32 %v2121, 0.0
        %v2188 = vmax.f32 %v2124, 0.0
        %v2189 = vmax.f32 %v2129, 0.0
        %v2190 = vmax.f32 %v2132, 0.0
        %v2191 = vmax.f32 %v2137, 0.0
        %v2192 = vmax.f32 %v2140, 0.0
        %v2193 = vmax.f32 %v2145, 0.0
        %v2194 = vmax.f32 %v2148, 0.0
        %v2195 = vmax.f32 %v2153, 0.0
        %v2196 = vmax.f32 %v2156, 0.0
        %v2197 = vmax.f32 %v2161, 0.0
        %v2198 = vmax.f32 %v2164, 0.0
        %v2199 = vpack.c.bf16 %v2168, %v2167
        %v2200 = vpack.c.bf16 %v2170, %v2169
        %v2201 = vpack.c.bf16 %v2172, %v2171
        %v2202 = vpack.c.bf16 %v2174, %v2173
        %v2203 = vpack.c.bf16 %v2176, %v2175
        %v2204 = vpack.c.bf16 %v2178, %v2177
        %v2205 = vpack.c.bf16 %v2180, %v2179
        %v2206 = vpack.c.bf16 %v2182, %v2181
        %v2207 = vpack.c.bf16 %v2184, %v2183
        %v2208 = vpack.c.bf16 %v2186, %v2185
        %v2209 = vpack.c.bf16 %v2188, %v2187
        %v2210 = vpack.c.bf16 %v2190, %v2189
        %v2211 = vpack.c.bf16 %v2192, %v2191
        %v2212 = vpack.c.bf16 %v2194, %v2193
        %v2213 = vpack.c.bf16 %v2196, %v2195
        %v2214 = vpack.c.bf16 %v2198, %v2197
        %2215 = vmatprep.subr.bf16.mxu0 0
        %2216 = vmatpush1.bf16.msra.mxu0 %v2199
        %2217 = vmatprep.subr.bf16.mxu0 0
        %2218 = vmatpush1.bf16.msra.mxu0 %v2200
        %2219 = vmatprep.subr.bf16.mxu0 0
        %2220 = vmatpush1.bf16.msra.mxu0 %v2201
        %2221 = vmatprep.subr.bf16.mxu0 0
        %2222 = vmatpush1.bf16.msra.mxu0 %v2202
        %2223 = vmatprep.subr.bf16.mxu0 0
        %2224 = vmatpush1.bf16.msra.mxu0 %v2203
        %2225 = vmatprep.subr.bf16.mxu0 0
        %2226 = vmatpush1.bf16.msra.mxu0 %v2204
        %2227 = vmatprep.subr.bf16.mxu0 0
        %2228 = vmatpush1.bf16.msra.mxu0 %v2205
        %2229 = vmatprep.subr.bf16.mxu0 0
        %2230 = vmatpush1.bf16.msra.mxu0 %v2206
        %2231 = vmatprep.subr.bf16.mxu0 0
        %2232 = vmatpush1.bf16.msra.mxu0 %v2207
        %2233 = vmatprep.subr.bf16.mxu0 0
        %2234 = vmatpush1.bf16.msra.mxu0 %v2208
        %2235 = vmatprep.subr.bf16.mxu0 0
        %2236 = vmatpush1.bf16.msra.mxu0 %v2209
        %2237 = vmatprep.subr.bf16.mxu0 0
        %2238 = vmatpush1.bf16.msra.mxu0 %v2210
        %2239 = vmatprep.subr.bf16.mxu0 0
        %2240 = vmatpush1.bf16.msra.mxu0 %v2211
        %2241 = vmatprep.subr.bf16.mxu0 0
        %2242 = vmatpush1.bf16.msra.mxu0 %v2212
        %2243 = vmatprep.subr.bf16.mxu0 0
        %2244 = vmatpush1.bf16.msra.mxu0 %v2213
        %2245 = vmatprep.subr.bf16.mxu0 0
        %2246 = vmatpush1.bf16.msra.mxu0 %v2214
        %2247 = vmatprep.mubr.bf16.mxu0 %v1391
        %2248 = vmatmul.mubr.bf16.gmra.mrb[0].mxu0 %v1390
        %v2249 = vpop.f32.mrb[0].mxu0
        %v2250 = vadd.f32 %v1353, %v2249
        %v2251 = vpop.f32.mrb[0].mxu0
        %v2252 = vpop.f32.mrb[0].mxu0
        %v2253 = vadd.f32 %v1358, %v2252
        %v2254 = vpop.f32.mrb[0].mxu0
        %2255 = vmatprep.mubr.bf16.mxu0 %v1393
        %2256 = vmatmul.mubr.bf16.gmra.mrb[0].mxu0 %v1392
        %v2257 = vpop.f32.mrb[0].mxu0
        %v2258 = vadd.f32 %v1363, %v2257
        %v2259 = vpop.f32.mrb[0].mxu0
        %v2260 = vpop.f32.mrb[0].mxu0
        %v2261 = vadd.f32 %v1368, %v2260
        %v2262 = vpop.f32.mrb[0].mxu0
        %2263 = vmatprep.mubr.bf16.mxu0 %v1395
        %2264 = vmatmul.mubr.bf16.gmra.mrb[0].mxu0 %v1394
        %v2265 = vpop.f32.mrb[0].mxu0
        %v2266 = vadd.f32 %v1373, %v2265
        %v2267 = vpop.f32.mrb[0].mxu0
        %v2268 = vpop.f32.mrb[0].mxu0
        %v2269 = vpop.f32.mrb[0].mxu0
        %2270 = vdwg.mxu0
        %v2271 = vmul.f32 %v1437, 0.5
        %v2272 = vmul.f32 %v1440, 0.5
        %v2273 = vmul.f32 %v1445, 0.5
        %v2274 = vmul.f32 %v1448, 0.5
        %v2275 = vmul.f32 %v1453, 0.5
        %v2276 = vmul.f32 %v1708, 0.5
        %v2277 = vmul.f32 %v1711, 0.5
        %v2278 = vmul.f32 %v1716, 0.5
        %v2279 = vmul.f32 %v1719, 0.5
        %v2280 = vmul.f32 %v1724, 0.5
        %v2281 = vmul.f32 %v1979, 0.5
        %v2282 = vmul.f32 %v1982, 0.5
        %v2283 = vmul.f32 %v1987, 0.5
        %v2284 = vmul.f32 %v1990, 0.5
        %v2285 = vmul.f32 %v1995, 0.5
        %v2286 = vmul.f32 %v2250, 0.5
        %v2287 = vmul.f32 %v2253, 0.5
        %v2288 = vmul.f32 %v2258, 0.5
        %v2289 = vmul.f32 %v2261, 0.5
        %v2290 = vmul.f32 %v2266, 0.5
        %v2291 = vmul.f32 %v1437, 0.70710677
        %v2292 = vmul.f32 %v1440, 0.70710677
        %v2293 = vmul.f32 %v1445, 0.70710677
        %v2294 = vmul.f32 %v1448, 0.70710677
        %v2295 = vmul.f32 %v1453, 0.70710677
        %v2296 = vmul.f32 %v1708, 0.70710677
        %v2297 = vmul.f32 %v1711, 0.70710677
        %v2298 = vmul.f32 %v1716, 0.70710677
        %v2299 = vmul.f32 %v1719, 0.70710677
        %v2300 = vmul.f32 %v1724, 0.70710677
        %v2301 = vmul.f32 %v1979, 0.70710677
        %v2302 = vmul.f32 %v1982, 0.70710677
        %v2303 = vmul.f32 %v1987, 0.70710677
        %v2304 = vmul.f32 %v1990, 0.70710677
        %v2305 = vmul.f32 %v1995, 0.70710677
        %v2306 = vmul.f32 %v2250, 0.70710677
        %v2307 = vmul.f32 %v2253, 0.70710677
        %v2308 = vmul.f32 %v2258, 0.70710677
        %v2309 = vmul.f32 %v2261, 0.70710677
        %v2310 = vmul.f32 %v2266, 0.70710677
        %vm2311 = vcmp.ge.f32.partialorder %v2291, 0.0
        %vm2312 = vcmp.ge.f32.partialorder %v2292, 0.0
        %vm2313 = vcmp.ge.f32.partialorder %v2293, 0.0
        %vm2314 = vcmp.ge.f32.partialorder %v2294, 0.0
        %vm2315 = vcmp.ge.f32.partialorder %v2295, 0.0
        %vm2316 = vcmp.ge.f32.partialorder %v2296, 0.0
        %vm2317 = vcmp.ge.f32.partialorder %v2297, 0.0
        %vm2318 = vcmp.ge.f32.partialorder %v2298, 0.0
        %vm2319 = vcmp.ge.f32.partialorder %v2299, 0.0
        %vm2320 = vcmp.ge.f32.partialorder %v2300, 0.0
        %vm2321 = vcmp.ge.f32.partialorder %v2301, 0.0
        %vm2322 = vcmp.ge.f32.partialorder %v2302, 0.0
        %vm2323 = vcmp.ge.f32.partialorder %v2303, 0.0
        %vm2324 = vcmp.ge.f32.partialorder %v2304, 0.0
        %vm2325 = vcmp.ge.f32.partialorder %v2305, 0.0
        %vm2326 = vcmp.ge.f32.partialorder %v2306, 0.0
        %vm2327 = vcmp.ge.f32.partialorder %v2307, 0.0
        %vm2328 = vcmp.ge.f32.partialorder %v2308, 0.0
        %vm2329 = vcmp.ge.f32.partialorder %v2309, 0.0
        %vm2330 = vcmp.ge.f32.partialorder %v2310, 0.0
        %v2331 = vsel %vm2311, 1.0, -1.0
        %v2332 = vsel %vm2312, 1.0, -1.0
        %v2333 = vsel %vm2313, 1.0, -1.0
        %v2334 = vsel %vm2314, 1.0, -1.0
        %v2335 = vsel %vm2315, 1.0, -1.0
        %v2336 = vsel %vm2316, 1.0, -1.0
        %v2337 = vsel %vm2317, 1.0, -1.0
        %v2338 = vsel %vm2318, 1.0, -1.0
        %v2339 = vsel %vm2319, 1.0, -1.0
        %v2340 = vsel %vm2320, 1.0, -1.0
        %v2341 = vsel %vm2321, 1.0, -1.0
        %v2342 = vsel %vm2322, 1.0, -1.0
        %v2343 = vsel %vm2323, 1.0, -1.0
        %v2344 = vsel %vm2324, 1.0, -1.0
        %v2345 = vsel %vm2325, 1.0, -1.0
        %v2346 = vsel %vm2326, 1.0, -1.0
        %v2347 = vsel %vm2327, 1.0, -1.0
        %v2348 = vsel %vm2328, 1.0, -1.0
        %v2349 = vsel %vm2329, 1.0, -1.0
        %v2350 = vsel %vm2330, 1.0, -1.0
        %v2351 = vand.u32 2147483647, %v2291
        %v2352 = vand.u32 2147483647, %v2292
        %v2353 = vand.u32 2147483647, %v2293
        %v2354 = vand.u32 2147483647, %v2294
        %v2355 = vand.u32 2147483647, %v2295
        %v2356 = vand.u32 2147483647, %v2296
        %v2357 = vand.u32 2147483647, %v2297
        %v2358 = vand.u32 2147483647, %v2298
        %v2359 = vand.u32 2147483647, %v2299
        %v2360 = vand.u32 2147483647, %v2300
        %v2361 = vand.u32 2147483647, %v2301
        %v2362 = vand.u32 2147483647, %v2302
        %v2363 = vand.u32 2147483647, %v2303
        %v2364 = vand.u32 2147483647, %v2304
        %v2365 = vand.u32 2147483647, %v2305
        %v2366 = vand.u32 2147483647, %v2306
        %v2367 = vand.u32 2147483647, %v2307
        %v2368 = vand.u32 2147483647, %v2308
        %v2369 = vand.u32 2147483647, %v2309
        %v2370 = vand.u32 2147483647, %v2310
        %v2371 = vmul.f32 %v2351, 0.3275911
        %v2372 = vmul.f32 %v2352, 0.3275911
        %v2373 = vmul.f32 %v2353, 0.3275911
        %v2374 = vmul.f32 %v2354, 0.3275911
        %v2375 = vmul.f32 %v2355, 0.3275911
        %v2376 = vmul.f32 %v2356, 0.3275911
        %v2377 = vmul.f32 %v2357, 0.3275911
        %v2378 = vmul.f32 %v2358, 0.3275911
        %v2379 = vmul.f32 %v2359, 0.3275911
        %v2380 = vmul.f32 %v2360, 0.3275911
        %v2381 = vmul.f32 %v2361, 0.3275911
        %v2382 = vmul.f32 %v2362, 0.3275911
        %v2383 = vmul.f32 %v2363, 0.3275911
        %v2384 = vmul.f32 %v2364, 0.3275911
        %v2385 = vmul.f32 %v2365, 0.3275911
        %v2386 = vmul.f32 %v2366, 0.3275911
        %v2387 = vmul.f32 %v2367, 0.3275911
        %v2388 = vmul.f32 %v2368, 0.3275911
        %v2389 = vmul.f32 %v2369, 0.3275911
        %v2390 = vmul.f32 %v2370, 0.3275911
        %v2391 = vadd.f32 %v2371, 1.0
        %v2392 = vadd.f32 %v2372, 1.0
        %v2393 = vadd.f32 %v2373, 1.0
        %v2394 = vadd.f32 %v2374, 1.0
        %v2395 = vadd.f32 %v2375, 1.0
        %v2396 = vadd.f32 %v2376, 1.0
        %v2397 = vadd.f32 %v2377, 1.0
        %v2398 = vadd.f32 %v2378, 1.0
        %v2399 = vadd.f32 %v2379, 1.0
        %v2400 = vadd.f32 %v2380, 1.0
        %v2401 = vadd.f32 %v2381, 1.0
        %v2402 = vadd.f32 %v2382, 1.0
        %v2403 = vadd.f32 %v2383, 1.0
        %v2404 = vadd.f32 %v2384, 1.0
        %v2405 = vadd.f32 %v2385, 1.0
        %v2406 = vadd.f32 %v2386, 1.0
        %v2407 = vadd.f32 %v2387, 1.0
        %v2408 = vadd.f32 %v2388, 1.0
        %v2409 = vadd.f32 %v2389, 1.0
        %v2410 = vadd.f32 %v2390, 1.0
        %v2411 = vrcp.pop %v2391
        %v2412 = vmul.f32 1.0, %v2411
        %v2413 = vrcp.pop %v2392
        %v2414 = vmul.f32 1.0, %v2413
        %v2415 = vrcp.pop %v2393
        %v2416 = vmul.f32 1.0, %v2415
        %v2417 = vrcp.pop %v2394
        %v2418 = vmul.f32 1.0, %v2417
        %v2419 = vrcp.pop %v2395
        %v2420 = vmul.f32 1.0, %v2419
        %v2421 = vrcp.pop %v2396
        %v2422 = vmul.f32 1.0, %v2421
        %v2423 = vrcp.pop %v2397
        %v2424 = vmul.f32 1.0, %v2423
        %v2425 = vrcp.pop %v2398
        %v2426 = vmul.f32 1.0, %v2425
        %v2427 = vrcp.pop %v2399
        %v2428 = vmul.f32 1.0, %v2427
        %v2429 = vrcp.pop %v2400
        %v2430 = vmul.f32 1.0, %v2429
        %v2431 = vrcp.pop %v2401
        %v2432 = vmul.f32 1.0, %v2431
        %v2433 = vrcp.pop %v2402
        %v2434 = vmul.f32 1.0, %v2433
        %v2435 = vrcp.pop %v2403
        %v2436 = vmul.f32 1.0, %v2435
        %v2437 = vrcp.pop %v2404
        %v2438 = vmul.f32 1.0, %v2437
        %v2439 = vrcp.pop %v2405
        %v2440 = vmul.f32 1.0, %v2439
        %v2441 = vrcp.pop %v2406
        %v2442 = vmul.f32 1.0, %v2441
        %v2443 = vrcp.pop %v2407
        %v2444 = vmul.f32 1.0, %v2443
        %v2445 = vrcp.pop %v2408
        %v2446 = vmul.f32 1.0, %v2445
        %v2447 = vrcp.pop %v2409
        %v2448 = vmul.f32 1.0, %v2447
        %v2449 = vrcp.pop %v2410
        %v2450 = vmul.f32 1.0, %v2449
        %v2451 = vmul.f32 %v2412, 1.0614054
        %v2452 = vmul.f32 %v2414, 1.0614054
        %v2453 = vmul.f32 %v2416, 1.0614054
        %v2454 = vmul.f32 %v2418, 1.0614054
        %v2455 = vmul.f32 %v2420, 1.0614054
        %v2456 = vmul.f32 %v2422, 1.0614054
        %v2457 = vmul.f32 %v2424, 1.0614054
        %v2458 = vmul.f32 %v2426, 1.0614054
        %v2459 = vmul.f32 %v2428, 1.0614054
        %v2460 = vmul.f32 %v2430, 1.0614054
        %v2461 = vmul.f32 %v2432, 1.0614054
        %v2462 = vmul.f32 %v2434, 1.0614054
        %v2463 = vmul.f32 %v2436, 1.0614054
        %v2464 = vmul.f32 %v2438, 1.0614054
        %v2465 = vmul.f32 %v2440, 1.0614054
        %v2466 = vmul.f32 %v2442, 1.0614054
        %v2467 = vmul.f32 %v2444, 1.0614054
        %v2468 = vmul.f32 %v2446, 1.0614054
        %v2469 = vmul.f32 %v2448, 1.0614054
        %v2470 = vmul.f32 %v2450, 1.0614054
        %v2471 = vadd.f32 %v2451, -1.4531521
        %v2472 = vadd.f32 %v2452, -1.4531521
        %v2473 = vadd.f32 %v2453, -1.4531521
        %v2474 = vadd.f32 %v2454, -1.4531521
        %v2475 = vadd.f32 %v2455, -1.4531521
        %v2476 = vadd.f32 %v2456, -1.4531521
        %v2477 = vadd.f32 %v2457, -1.4531521
        %v2478 = vadd.f32 %v2458, -1.4531521
        %v2479 = vadd.f32 %v2459, -1.4531521
        %v2480 = vadd.f32 %v2460, -1.4531521
        %v2481 = vadd.f32 %v2461, -1.4531521
        %v2482 = vadd.f32 %v2462, -1.4531521
        %v2483 = vadd.f32 %v2463, -1.4531521
        %v2484 = vadd.f32 %v2464, -1.4531521
        %v2485 = vadd.f32 %v2465, -1.4531521
        %v2486 = vadd.f32 %v2466, -1.4531521
        %v2487 = vadd.f32 %v2467, -1.4531521
        %v2488 = vadd.f32 %v2468, -1.4531521
        %v2489 = vadd.f32 %v2469, -1.4531521
        %v2490 = vadd.f32 %v2470, -1.4531521
        %v2491 = vmul.f32 %v2471, %v2412
        %v2492 = vmul.f32 %v2472, %v2414
        %v2493 = vmul.f32 %v2473, %v2416
        %v2494 = vmul.f32 %v2474, %v2418
        %v2495 = vmul.f32 %v2475, %v2420
        %v2496 = vmul.f32 %v2476, %v2422
        %v2497 = vmul.f32 %v2477, %v2424
        %v2498 = vmul.f32 %v2478, %v2426
        %v2499 = vmul.f32 %v2479, %v2428
        %v2500 = vmul.f32 %v2480, %v2430
        %v2501 = vmul.f32 %v2481, %v2432
        %v2502 = vmul.f32 %v2482, %v2434
        %v2503 = vmul.f32 %v2483, %v2436
        %v2504 = vmul.f32 %v2484, %v2438
        %v2505 = vmul.f32 %v2485, %v2440
        %v2506 = vmul.f32 %v2486, %v2442
        %v2507 = vmul.f32 %v2487, %v2444
        %v2508 = vmul.f32 %v2488, %v2446
        %v2509 = vmul.f32 %v2489, %v2448
        %v2510 = vmul.f32 %v2490, %v2450
        %v2511 = vadd.f32 %v2491, 1.4214138
        %v2512 = vadd.f32 %v2492, 1.4214138
        %v2513 = vadd.f32 %v2493, 1.4214138
        %v2514 = vadd.f32 %v2494, 1.4214138
        %v2515 = vadd.f32 %v2495, 1.4214138
        %v2516 = vadd.f32 %v2496, 1.4214138
        %v2517 = vadd.f32 %v2497, 1.4214138
        %v2518 = vadd.f32 %v2498, 1.4214138
        %v2519 = vadd.f32 %v2499, 1.4214138
        %v2520 = vadd.f32 %v2500, 1.4214138
        %v2521 = vadd.f32 %v2501, 1.4214138
        %v2522 = vadd.f32 %v2502, 1.4214138
        %v2523 = vadd.f32 %v2503, 1.4214138
        %v2524 = vadd.f32 %v2504, 1.4214138
        %v2525 = vadd.f32 %v2505, 1.4214138
        %v2526 = vadd.f32 %v2506, 1.4214138
        %v2527 = vadd.f32 %v2507, 1.4214138
        %v2528 = vadd.f32 %v2508, 1.4214138
        %v2529 = vadd.f32 %v2509, 1.4214138
        %v2530 = vadd.f32 %v2510, 1.4214138
        %v2531 = vmul.f32 %v2511, %v2412
        %v2532 = vmul.f32 %v2512, %v2414
        %v2533 = vmul.f32 %v2513, %v2416
        %v2534 = vmul.f32 %v2514, %v2418
        %v2535 = vmul.f32 %v2515, %v2420
        %v2536 = vmul.f32 %v2516, %v2422
        %v2537 = vmul.f32 %v2517, %v2424
        %v2538 = vmul.f32 %v2518, %v2426
        %v2539 = vmul.f32 %v2519, %v2428
        %v2540 = vmul.f32 %v2520, %v2430
        %v2541 = vmul.f32 %v2521, %v2432
        %v2542 = vmul.f32 %v2522, %v2434
        %v2543 = vmul.f32 %v2523, %v2436
        %v2544 = vmul.f32 %v2524, %v2438
        %v2545 = vmul.f32 %v2525, %v2440
        %v2546 = vmul.f32 %v2526, %v2442
        %v2547 = vmul.f32 %v2527, %v2444
        %v2548 = vmul.f32 %v2528, %v2446
        %v2549 = vmul.f32 %v2529, %v2448
        %v2550 = vmul.f32 %v2530, %v2450
        %v2551 = vadd.f32 %v2531, -0.28449672
        %v2552 = vadd.f32 %v2532, -0.28449672
        %v2553 = vadd.f32 %v2533, -0.28449672
        %v2554 = vadd.f32 %v2534, -0.28449672
        %v2555 = vadd.f32 %v2535, -0.28449672
        %v2556 = vadd.f32 %v2536, -0.28449672
        %v2557 = vadd.f32 %v2537, -0.28449672
        %v2558 = vadd.f32 %v2538, -0.28449672
        %v2559 = vadd.f32 %v2539, -0.28449672
        %v2560 = vadd.f32 %v2540, -0.28449672
        %v2561 = vadd.f32 %v2541, -0.28449672
        %v2562 = vadd.f32 %v2542, -0.28449672
        %v2563 = vadd.f32 %v2543, -0.28449672
        %v2564 = vadd.f32 %v2544, -0.28449672
        %v2565 = vadd.f32 %v2545, -0.28449672
        %v2566 = vadd.f32 %v2546, -0.28449672
        %v2567 = vadd.f32 %v2547, -0.28449672
        %v2568 = vadd.f32 %v2548, -0.28449672
        %v2569 = vadd.f32 %v2549, -0.28449672
        %v2570 = vadd.f32 %v2550, -0.28449672
        %v2571 = vmul.f32 %v2551, %v2412
        %v2572 = vmul.f32 %v2552, %v2414
        %v2573 = vmul.f32 %v2553, %v2416
        %v2574 = vmul.f32 %v2554, %v2418
        %v2575 = vmul.f32 %v2555, %v2420
        %v2576 = vmul.f32 %v2556, %v2422
        %v2577 = vmul.f32 %v2557, %v2424
        %v2578 = vmul.f32 %v2558, %v2426
        %v2579 = vmul.f32 %v2559, %v2428
        %v2580 = vmul.f32 %v2560, %v2430
        %v2581 = vmul.f32 %v2561, %v2432
        %v2582 = vmul.f32 %v2562, %v2434
        %v2583 = vmul.f32 %v2563, %v2436
        %v2584 = vmul.f32 %v2564, %v2438
        %v2585 = vmul.f32 %v2565, %v2440
        %v2586 = vmul.f32 %v2566, %v2442
        %v2587 = vmul.f32 %v2567, %v2444
        %v2588 = vmul.f32 %v2568, %v2446
        %v2589 = vmul.f32 %v2569, %v2448
        %v2590 = vmul.f32 %v2570, %v2450
        %v2591 = vadd.f32 %v2571, 0.2548296
        %v2592 = vadd.f32 %v2572, 0.2548296
        %v2593 = vadd.f32 %v2573, 0.2548296
        %v2594 = vadd.f32 %v2574, 0.2548296
        %v2595 = vadd.f32 %v2575, 0.2548296
        %v2596 = vadd.f32 %v2576, 0.2548296
        %v2597 = vadd.f32 %v2577, 0.2548296
        %v2598 = vadd.f32 %v2578, 0.2548296
        %v2599 = vadd.f32 %v2579, 0.2548296
        %v2600 = vadd.f32 %v2580, 0.2548296
        %v2601 = vadd.f32 %v2581, 0.2548296
        %v2602 = vadd.f32 %v2582, 0.2548296
        %v2603 = vadd.f32 %v2583, 0.2548296
        %v2604 = vadd.f32 %v2584, 0.2548296
        %v2605 = vadd.f32 %v2585, 0.2548296
        %v2606 = vadd.f32 %v2586, 0.2548296
        %v2607 = vadd.f32 %v2587, 0.2548296
        %v2608 = vadd.f32 %v2588, 0.2548296
        %v2609 = vadd.f32 %v2589, 0.2548296
        %v2610 = vadd.f32 %v2590, 0.2548296
        %v2611 = vmul.f32 %v2591, %v2412
        %v2612 = vmul.f32 %v2592, %v2414
        %v2613 = vmul.f32 %v2593, %v2416
        %v2614 = vmul.f32 %v2594, %v2418
        %v2615 = vmul.f32 %v2595, %v2420
        %v2616 = vmul.f32 %v2596, %v2422
        %v2617 = vmul.f32 %v2597, %v2424
        %v2618 = vmul.f32 %v2598, %v2426
        %v2619 = vmul.f32 %v2599, %v2428
        %v2620 = vmul.f32 %v2600, %v2430
        %v2621 = vmul.f32 %v2601, %v2432
        %v2622 = vmul.f32 %v2602, %v2434
        %v2623 = vmul.f32 %v2603, %v2436
        %v2624 = vmul.f32 %v2604, %v2438
        %v2625 = vmul.f32 %v2605, %v2440
        %v2626 = vmul.f32 %v2606, %v2442
        %v2627 = vmul.f32 %v2607, %v2444
        %v2628 = vmul.f32 %v2608, %v2446
        %v2629 = vmul.f32 %v2609, %v2448
        %v2630 = vmul.f32 %v2610, %v2450
        %v2631 = vmul.f32 %v2351, %v2351
        %v2632 = vmul.f32 %v2352, %v2352
        %v2633 = vmul.f32 %v2353, %v2353
        %v2634 = vmul.f32 %v2354, %v2354
        %v2635 = vmul.f32 %v2355, %v2355
        %v2636 = vmul.f32 %v2356, %v2356
        %v2637 = vmul.f32 %v2357, %v2357
        %v2638 = vmul.f32 %v2358, %v2358
        %v2639 = vmul.f32 %v2359, %v2359
        %v2640 = vmul.f32 %v2360, %v2360
        %v2641 = vmul.f32 %v2361, %v2361
        %v2642 = vmul.f32 %v2362, %v2362
        %v2643 = vmul.f32 %v2363, %v2363
        %v2644 = vmul.f32 %v2364, %v2364
        %v2645 = vmul.f32 %v2365, %v2365
        %v2646 = vmul.f32 %v2366, %v2366
        %v2647 = vmul.f32 %v2367, %v2367
        %v2648 = vmul.f32 %v2368, %v2368
        %v2649 = vmul.f32 %v2369, %v2369
        %v2650 = vmul.f32 %v2370, %v2370
        %v2651 = vsub.f32 0.0, %v2631
        %v2652 = vsub.f32 0.0, %v2632
        %v2653 = vsub.f32 0.0, %v2633
        %v2654 = vsub.f32 0.0, %v2634
        %v2655 = vsub.f32 0.0, %v2635
        %v2656 = vsub.f32 0.0, %v2636
        %v2657 = vsub.f32 0.0, %v2637
        %v2658 = vsub.f32 0.0, %v2638
        %v2659 = vsub.f32 0.0, %v2639
        %v2660 = vsub.f32 0.0, %v2640
        %v2661 = vsub.f32 0.0, %v2641
        %v2662 = vsub.f32 0.0, %v2642
        %v2663 = vsub.f32 0.0, %v2643
        %v2664 = vsub.f32 0.0, %v2644
        %v2665 = vsub.f32 0.0, %v2645
        %v2666 = vsub.f32 0.0, %v2646
        %v2667 = vsub.f32 0.0, %v2647
        %v2668 = vsub.f32 0.0, %v2648
        %v2669 = vsub.f32 0.0, %v2649
        %v2670 = vsub.f32 0.0, %v2650
        %v2671 = vmul.f32 %v2651, 1.442695
        %v2672 = vpow.pop %v2671
        %v2673 = vmul.f32 %v2652, 1.442695
        %v2674 = vpow.pop %v2673
        %v2675 = vmul.f32 %v2653, 1.442695
        %v2676 = vpow.pop %v2675
        %v2677 = vmul.f32 %v2654, 1.442695
        %v2678 = vpow.pop %v2677
        %v2679 = vmul.f32 %v2655, 1.442695
        %v2680 = vpow.pop %v2679
        %v2681 = vmul.f32 %v2656, 1.442695
        %v2682 = vpow.pop %v2681
        %v2683 = vmul.f32 %v2657, 1.442695
        %v2684 = vpow.pop %v2683
        %v2685 = vmul.f32 %v2658, 1.442695
        %v2686 = vpow.pop %v2685
        %v2687 = vmul.f32 %v2659, 1.442695
        %v2688 = vpow.pop %v2687
        %v2689 = vmul.f32 %v2660, 1.442695
        %v2690 = vpow.pop %v2689
        %v2691 = vmul.f32 %v2661, 1.442695
        %v2692 = vpow.pop %v2691
        %v2693 = vmul.f32 %v2662, 1.442695
        %v2694 = vpow.pop %v2693
        %v2695 = vmul.f32 %v2663, 1.442695
        %v2696 = vpow.pop %v2695
        %v2697 = vmul.f32 %v2664, 1.442695
        %v2698 = vpow.pop %v2697
        %v2699 = vmul.f32 %v2665, 1.442695
        %v2700 = vpow.pop %v2699
        %v2701 = vmul.f32 %v2666, 1.442695
        %v2702 = vpow.pop %v2701
        %v2703 = vmul.f32 %v2667, 1.442695
        %v2704 = vpow.pop %v2703
        %v2705 = vmul.f32 %v2668, 1.442695
        %v2706 = vpow.pop %v2705
        %v2707 = vmul.f32 %v2669, 1.442695
        %v2708 = vpow.pop %v2707
        %v2709 = vmul.f32 %v2670, 1.442695
        %v2710 = vpow.pop %v2709
        %v2711 = vmul.f32 %v2611, %v2672
        %v2712 = vmul.f32 %v2612, %v2674
        %v2713 = vmul.f32 %v2613, %v2676
        %v2714 = vmul.f32 %v2614, %v2678
        %v2715 = vmul.f32 %v2615, %v2680
        %v2716 = vmul.f32 %v2616, %v2682
        %v2717 = vmul.f32 %v2617, %v2684
        %v2718 = vmul.f32 %v2618, %v2686
        %v2719 = vmul.f32 %v2619, %v2688
        %v2720 = vmul.f32 %v2620, %v2690
        %v2721 = vmul.f32 %v2621, %v2692
        %v2722 = vmul.f32 %v2622, %v2694
        %v2723 = vmul.f32 %v2623, %v2696
        %v2724 = vmul.f32 %v2624, %v2698
        %v2725 = vmul.f32 %v2625, %v2700
        %v2726 = vmul.f32 %v2626, %v2702
        %v2727 = vmul.f32 %v2627, %v2704
        %v2728 = vmul.f32 %v2628, %v2706
        %v2729 = vmul.f32 %v2629, %v2708
        %v2730 = vmul.f32 %v2630, %v2710
        %v2731 = vsub.f32 1.0, %v2711
        %v2732 = vsub.f32 1.0, %v2712
        %v2733 = vsub.f32 1.0, %v2713
        %v2734 = vsub.f32 1.0, %v2714
        %v2735 = vsub.f32 1.0, %v2715
        %v2736 = vsub.f32 1.0, %v2716
        %v2737 = vsub.f32 1.0, %v2717
        %v2738 = vsub.f32 1.0, %v2718
        %v2739 = vsub.f32 1.0, %v2719
        %v2740 = vsub.f32 1.0, %v2720
        %v2741 = vsub.f32 1.0, %v2721
        %v2742 = vsub.f32 1.0, %v2722
        %v2743 = vsub.f32 1.0, %v2723
        %v2744 = vsub.f32 1.0, %v2724
        %v2745 = vsub.f32 1.0, %v2725
        %v2746 = vsub.f32 1.0, %v2726
        %v2747 = vsub.f32 1.0, %v2727
        %v2748 = vsub.f32 1.0, %v2728
        %v2749 = vsub.f32 1.0, %v2729
        %v2750 = vsub.f32 1.0, %v2730
        %v2751 = vmul.f32 %v2331, %v2731
        %v2752 = vmul.f32 %v2332, %v2732
        %v2753 = vmul.f32 %v2333, %v2733
        %v2754 = vmul.f32 %v2334, %v2734
        %v2755 = vmul.f32 %v2335, %v2735
        %v2756 = vmul.f32 %v2336, %v2736
        %v2757 = vmul.f32 %v2337, %v2737
        %v2758 = vmul.f32 %v2338, %v2738
        %v2759 = vmul.f32 %v2339, %v2739
        %v2760 = vmul.f32 %v2340, %v2740
        %v2761 = vmul.f32 %v2341, %v2741
        %v2762 = vmul.f32 %v2342, %v2742
        %v2763 = vmul.f32 %v2343, %v2743
        %v2764 = vmul.f32 %v2344, %v2744
        %v2765 = vmul.f32 %v2345, %v2745
        %v2766 = vmul.f32 %v2346, %v2746
        %v2767 = vmul.f32 %v2347, %v2747
        %v2768 = vmul.f32 %v2348, %v2748
        %v2769 = vmul.f32 %v2349, %v2749
        %v2770 = vmul.f32 %v2350, %v2750
        %v2771 = vadd.f32 %v2751, 1.0
        %v2772 = vadd.f32 %v2752, 1.0
        %v2773 = vadd.f32 %v2753, 1.0
        %v2774 = vadd.f32 %v2754, 1.0
        %v2775 = vadd.f32 %v2755, 1.0
        %v2776 = vadd.f32 %v2756, 1.0
        %v2777 = vadd.f32 %v2757, 1.0
        %v2778 = vadd.f32 %v2758, 1.0
        %v2779 = vadd.f32 %v2759, 1.0
        %v2780 = vadd.f32 %v2760, 1.0
        %v2781 = vadd.f32 %v2761, 1.0
        %v2782 = vadd.f32 %v2762, 1.0
        %v2783 = vadd.f32 %v2763, 1.0
        %v2784 = vadd.f32 %v2764, 1.0
        %v2785 = vadd.f32 %v2765, 1.0
        %v2786 = vadd.f32 %v2766, 1.0
        %v2787 = vadd.f32 %v2767, 1.0
        %v2788 = vadd.f32 %v2768, 1.0
        %v2789 = vadd.f32 %v2769, 1.0
        %v2790 = vadd.f32 %v2770, 1.0
        %v2791 = vmul.f32 %v2271, %v2771
        %v2792 = vmul.f32 %v2272, %v2772
        %v2793 = vmul.f32 %v2273, %v2773
        %v2794 = vmul.f32 %v2274, %v2774
        %v2795 = vmul.f32 %v2275, %v2775
        %v2796 = vmul.f32 %v2276, %v2776
        %v2797 = vmul.f32 %v2277, %v2777
        %v2798 = vmul.f32 %v2278, %v2778
        %v2799 = vmul.f32 %v2279, %v2779
        %v2800 = vmul.f32 %v2280, %v2780
        %v2801 = vmul.f32 %v2281, %v2781
        %v2802 = vmul.f32 %v2282, %v2782
        %v2803 = vmul.f32 %v2283, %v2783
        %v2804 = vmul.f32 %v2284, %v2784
        %v2805 = vmul.f32 %v2285, %v2785
        %v2806 = vmul.f32 %v2286, %v2786
        %v2807 = vmul.f32 %v2287, %v2787
        %v2808 = vmul.f32 %v2288, %v2788
        %v2809 = vmul.f32 %v2289, %v2789
        %v2810 = vmul.f32 %v2290, %v2790
        %v2811 = vpack.c.bf16 %v756, %v755
        %v2812 = vpack.c.bf16 %v758, %v757
        %v2813 = vpack.c.bf16 %v760, %v759
        %v2814 = vpack.c.bf16 %v766, %v765
        %v2815 = vpack.c.bf16 %v768, %v767
        %v2816 = vpack.c.bf16 %v770, %v769
        %v2817 = vld [vmem:[%s7] sm:$0xff]
        %v2818 = vld [vmem:[%s7 + $0x8] sm:$0xff]
        %v2819 = vld [vmem:[%s7 + $0x10] sm:$0xff]
        %v2820 = vld [vmem:[%s7 + $0x18] sm:$0xff]
        %v2821 = vld [vmem:[%s7 + $0x20] sm:$0xff]
        %v2822 = vld [vmem:[%s7 + $0x28] sm:$0xff]
        %v2823 = vld [vmem:[%s7 + $0x30] sm:$0xff]
        %v2824 = vld [vmem:[%s7 + $0x38] sm:$0xff]
        %v2825 = vld [vmem:[%s7 + $0x40] sm:$0xff]
        %v2826 = vld [vmem:[%s7 + $0x48] sm:$0xff]
        %v2827 = vld [vmem:[%s7 + $0x50] sm:$0xff]
        %v2828 = vld [vmem:[%s7 + $0x58] sm:$0xff]
        %v2829 = vld [vmem:[%s7 + $0x60] sm:$0xff]
        %v2830 = vld [vmem:[%s7 + $0x68] sm:$0xff]
        %v2831 = vld [vmem:[%s7 + $0x70] sm:$0xff]
        %v2832 = vld [vmem:[%s7 + $0x78] sm:$0xff]
        %v2833 = vld [vmem:[%s8] sm:$0x3]
        %v2835 = vlaneseq
        %v2836 = vshrl.u32 %v2835, 7
        %v2837 = vsub.s32 0, %v2836
        %v2838 = vrot.slane %v2833, %v2837
        %v2839 = vlaneseq
        %v2840 = vshrl.u32 %v2839, 7
        %v2841 = vsub.s32 1, %v2840
        %v2842 = vrot.slane %v2833, %v2841
        %v2861 = vunpack.c.l.b16 %v2817
        %v2862 = vunpack.c.h.b16 %v2817
        %v2863 = vunpack.c.l.b16 %v2818
        %v2864 = vunpack.c.h.b16 %v2818
        %v2865 = vunpack.c.l.b16 %v2819
        %v2866 = vunpack.c.h.b16 %v2819
        %v2867 = vunpack.c.l.b16 %v2820
        %v2868 = vunpack.c.h.b16 %v2820
        %v2869 = vunpack.c.l.b16 %v2821
        %v2870 = vunpack.c.h.b16 %v2821
        %v2871 = vunpack.c.l.b16 %v2822
        %v2872 = vunpack.c.h.b16 %v2822
        %v2873 = vunpack.c.l.b16 %v2823
        %v2874 = vunpack.c.h.b16 %v2823
        %v2875 = vunpack.c.l.b16 %v2824
        %v2876 = vunpack.c.h.b16 %v2824
        %v2877 = vunpack.c.l.b16 %v2825
        %v2878 = vunpack.c.h.b16 %v2825
        %v2879 = vunpack.c.l.b16 %v2826
        %v2880 = vunpack.c.h.b16 %v2826
        %v2881 = vunpack.c.l.b16 %v2827
        %v2882 = vunpack.c.h.b16 %v2827
        %v2883 = vunpack.c.l.b16 %v2828
        %v2884 = vunpack.c.h.b16 %v2828
        %v2885 = vunpack.c.l.b16 %v2829
        %v2886 = vunpack.c.h.b16 %v2829
        %v2887 = vunpack.c.l.b16 %v2830
        %v2888 = vunpack.c.h.b16 %v2830
        %v2889 = vunpack.c.l.b16 %v2831
        %v2890 = vunpack.c.h.b16 %v2831
        %v2891 = vunpack.c.l.b16 %v2832
        %v2892 = vunpack.c.h.b16 %v2832
        %v2893 = vpack.c.b16 %v2863, %v2861
        %v2894 = vpack.c.b16 %v2864, %v2862
        %v2895 = vpack.c.b16 %v2867, %v2865
        %v2896 = vpack.c.b16 %v2868, %v2866
        %v2897 = vpack.c.b16 %v2871, %v2869
        %v2898 = vpack.c.b16 %v2872, %v2870
        %v2899 = vpack.c.b16 %v2875, %v2873
        %v2900 = vpack.c.b16 %v2876, %v2874
        %v2901 = vpack.c.b16 %v2879, %v2877
        %v2902 = vpack.c.b16 %v2880, %v2878
        %v2903 = vpack.c.b16 %v2883, %v2881
        %v2904 = vpack.c.b16 %v2884, %v2882
        %v2905 = vpack.c.b16 %v2887, %v2885
        %v2906 = vpack.c.b16 %v2888, %v2886
        %v2907 = vpack.c.b16 %v2891, %v2889
        %v2908 = vpack.c.b16 %v2892, %v2890
        %2925 = vmatprep.subr.bf16.mxu0 %v2894
        %2926 = vmatpush1.bf16.msra.mxu0 %v2893
        %2927 = vmatprep.subr.bf16.mxu0 %v2896
        %2928 = vmatpush1.bf16.msra.mxu0 %v2895
        %2929 = vmatprep.subr.bf16.mxu0 %v2898
        %2930 = vmatpush1.bf16.msra.mxu0 %v2897
        %2931 = vmatprep.subr.bf16.mxu0 %v2900
        %2932 = vmatpush1.bf16.msra.mxu0 %v2899
        %2933 = vmatprep.subr.bf16.mxu0 %v2902
        %2934 = vmatpush1.bf16.msra.mxu0 %v2901
        %2935 = vmatprep.subr.bf16.mxu0 %v2904
        %2936 = vmatpush1.bf16.msra.mxu0 %v2903
        %2937 = vmatprep.subr.bf16.mxu0 %v2906
        %2938 = vmatpush1.bf16.msra.mxu0 %v2905
        %2939 = vmatprep.subr.bf16.mxu0 %v2908
        %2940 = vmatpush1.bf16.msra.mxu0 %v2907
        %2941 = vmatprep.subr.bf16.mxu0 0
        %2942 = vmatpush1.bf16.msra.mxu0 0
        %2943 = vmatprep.subr.bf16.mxu0 0
        %2944 = vmatpush1.bf16.msra.mxu0 0
        %2945 = vmatprep.subr.bf16.mxu0 0
        %2946 = vmatpush1.bf16.msra.mxu0 0
        %2947 = vmatprep.subr.bf16.mxu0 0
        %2948 = vmatpush1.bf16.msra.mxu0 0
        %2949 = vmatprep.subr.bf16.mxu0 0
        %2950 = vmatpush1.bf16.msra.mxu0 0
        %2951 = vmatprep.subr.bf16.mxu0 0
        %2952 = vmatpush1.bf16.msra.mxu0 0
        %2953 = vmatprep.subr.bf16.mxu0 0
        %2954 = vmatpush1.bf16.msra.mxu0 0
        %2955 = vmatprep.subr.bf16.mxu0 0
        %2956 = vmatpush1.bf16.msra.mxu0 0
        %2957 = vmatprep.mubr.bf16.mxu0 0
        %2958 = vmatmul.mubr.bf16.gmra.mrb[0].mxu0 %v845
        %v2959 = vpop.f32.mrb[0].mxu0
        %v2960 = vadd.f32 %v2838, %v2959
        %v2961 = vpop.f32.mrb[0].mxu0
        %v2962 = vadd.f32 %v2842, %v2961
        %v2963 = vpop.f32.mrb[0].mxu0
        %v2964 = vadd.f32 %v2838, %v2963
        %v2965 = vpop.f32.mrb[0].mxu0
        %v2966 = vadd.f32 %v2842, %v2965
        %2967 = vmatprep.mubr.bf16.mxu0 0
        %2968 = vmatmul.mubr.bf16.gmra.mrb[0].mxu0 %v846
        %v2969 = vpop.f32.mrb[0].mxu0
        %v2970 = vadd.f32 %v2838, %v2969
        %v2971 = vpop.f32.mrb[0].mxu0
        %v2972 = vadd.f32 %v2842, %v2971
        %v2973 = vpop.f32.mrb[0].mxu0
        %v2974 = vadd.f32 %v2838, %v2973
        %v2975 = vpop.f32.mrb[0].mxu0
        %v2976 = vadd.f32 %v2842, %v2975
        %2977 = vmatprep.mubr.bf16.mxu0 0
        %2978 = vmatmul.mubr.bf16.gmra.mrb[0].mxu0 %v2811
        %v2979 = vpop.f32.mrb[0].mxu0
        %v2980 = vadd.f32 %v2838, %v2979
        %v2981 = vpop.f32.mrb[0].mxu0
        %v2982 = vadd.f32 %v2842, %v2981
        %v2983 = vpop.f32.mrb[0].mxu0
        %v2984 = vadd.f32 %v2838, %v2983
        %v2985 = vpop.f32.mrb[0].mxu0
        %v2986 = vadd.f32 %v2842, %v2985
        %2987 = vmatprep.mubr.bf16.mxu0 0
        %2988 = vmatmul.mubr.bf16.gmra.mrb[0].mxu0 %v2812
        %v2989 = vpop.f32.mrb[0].mxu0
        %v2990 = vadd.f32 %v2838, %v2989
        %v2991 = vpop.f32.mrb[0].mxu0
        %v2992 = vadd.f32 %v2842, %v2991
        %v2993 = vpop.f32.mrb[0].mxu0
        %v2994 = vadd.f32 %v2838, %v2993
        %v2995 = vpop.f32.mrb[0].mxu0
        %v2996 = vadd.f32 %v2842, %v2995
        %2997 = vmatprep.mubr.bf16.mxu0 0
        %2998 = vmatmul.mubr.bf16.gmra.mrb[0].mxu0 %v2813
        %v2999 = vpop.f32.mrb[0].mxu0
        %v3000 = vadd.f32 %v2838, %v2999
        %v3001 = vpop.f32.mrb[0].mxu0
        %v3002 = vadd.f32 %v2842, %v3001
        %v3003 = vpop.f32.mrb[0].mxu0
        %v3004 = vadd.f32 %v2838, %v3003
        %v3005 = vpop.f32.mrb[0].mxu0
        %v3006 = vadd.f32 %v2842, %v3005
        %3007 = vmatprep.mubr.bf16.mxu0 0
        %3008 = vmatmul.mubr.bf16.gmra.mrb[0].mxu0 %v1729
        %v3009 = vpop.f32.mrb[0].mxu0
        %v3010 = vadd.f32 %v2838, %v3009
        %v3011 = vpop.f32.mrb[0].mxu0
        %v3012 = vadd.f32 %v2842, %v3011
        %v3013 = vpop.f32.mrb[0].mxu0
        %v3014 = vadd.f32 %v2838, %v3013
        %v3015 = vpop.f32.mrb[0].mxu0
        %v3016 = vadd.f32 %v2842, %v3015
        %3017 = vmatprep.mubr.bf16.mxu0 0
        %3018 = vmatmul.mubr.bf16.gmra.mrb[0].mxu0 %v1730
        %v3019 = vpop.f32.mrb[0].mxu0
        %v3020 = vadd.f32 %v2838, %v3019
        %v3021 = vpop.f32.mrb[0].mxu0
        %v3022 = vadd.f32 %v2842, %v3021
        %v3023 = vpop.f32.mrb[0].mxu0
        %v3024 = vadd.f32 %v2838, %v3023
        %v3025 = vpop.f32.mrb[0].mxu0
        %v3026 = vadd.f32 %v2842, %v3025
        %3027 = vmatprep.mubr.bf16.mxu0 0
        %3028 = vmatmul.mubr.bf16.gmra.mrb[0].mxu0 %v2814
        %v3029 = vpop.f32.mrb[0].mxu0
        %v3030 = vadd.f32 %v2838, %v3029
        %v3031 = vpop.f32.mrb[0].mxu0
        %v3032 = vadd.f32 %v2842, %v3031
        %v3033 = vpop.f32.mrb[0].mxu0
        %v3034 = vadd.f32 %v2838, %v3033
        %v3035 = vpop.f32.mrb[0].mxu0
        %v3036 = vadd.f32 %v2842, %v3035
        %3037 = vmatprep.mubr.bf16.mxu0 0
        %3038 = vmatmul.mubr.bf16.gmra.mrb[0].mxu0 %v2815
        %v3039 = vpop.f32.mrb[0].mxu0
        %v3040 = vadd.f32 %v2838, %v3039
        %v3041 = vpop.f32.mrb[0].mxu0
        %v3042 = vadd.f32 %v2842, %v3041
        %v3043 = vpop.f32.mrb[0].mxu0
        %v3044 = vadd.f32 %v2838, %v3043
        %v3045 = vpop.f32.mrb[0].mxu0
        %v3046 = vadd.f32 %v2842, %v3045
        %3047 = vmatprep.mubr.bf16.mxu0 0
        %3048 = vmatmul.mubr.bf16.gmra.mrb[0].mxu0 %v2816
        %v3049 = vpop.f32.mrb[0].mxu0
        %v3050 = vadd.f32 %v2838, %v3049
        %v3051 = vpop.f32.mrb[0].mxu0
        %v3052 = vadd.f32 %v2842, %v3051
        %v3053 = vpop.f32.mrb[0].mxu0
        %v3054 = vadd.f32 %v2838, %v3053
        %v3055 = vpop.f32.mrb[0].mxu0
        %v3056 = vadd.f32 %v2842, %v3055
        %3057 = vdwg.mxu0
        %v3058 = vmax.f32 %v2960, 0.0
        %v3059 = vmax.f32 %v2962, 0.0
        %v3060 = vmax.f32 %v2964, 0.0
        %v3061 = vmax.f32 %v2966, 0.0
        %v3062 = vmax.f32 %v2970, 0.0
        %v3063 = vmax.f32 %v2972, 0.0
        %v3064 = vmax.f32 %v2974, 0.0
        %v3065 = vmax.f32 %v2976, 0.0
        %v3066 = vmax.f32 %v2980, 0.0
        %v3067 = vmax.f32 %v2982, 0.0
        %v3068 = vmax.f32 %v2984, 0.0
        %v3069 = vmax.f32 %v2986, 0.0
        %v3070 = vmax.f32 %v2990, 0.0
        %v3071 = vmax.f32 %v2992, 0.0
        %v3072 = vmax.f32 %v2994, 0.0
        %v3073 = vmax.f32 %v2996, 0.0
        %v3074 = vmax.f32 %v3000, 0.0
        %v3075 = vmax.f32 %v3002, 0.0
        %v3076 = vmax.f32 %v3004, 0.0
        %v3077 = vmax.f32 %v3006, 0.0
        %v3078 = vmax.f32 %v3010, 0.0
        %v3079 = vmax.f32 %v3012, 0.0
        %v3080 = vmax.f32 %v3014, 0.0
        %v3081 = vmax.f32 %v3016, 0.0
        %v3082 = vmax.f32 %v3020, 0.0
        %v3083 = vmax.f32 %v3022, 0.0
        %v3084 = vmax.f32 %v3024, 0.0
        %v3085 = vmax.f32 %v3026, 0.0
        %v3086 = vmax.f32 %v3030, 0.0
        %v3087 = vmax.f32 %v3032, 0.0
        %v3088 = vmax.f32 %v3034, 0.0
        %v3089 = vmax.f32 %v3036, 0.0
        %v3090 = vmax.f32 %v3040, 0.0
        %v3091 = vmax.f32 %v3042, 0.0
        %v3092 = vmax.f32 %v3044, 0.0
        %v3093 = vmax.f32 %v3046, 0.0
        %v3094 = vmax.f32 %v3050, 0.0
        %v3095 = vmax.f32 %v3052, 0.0
        %v3096 = vmax.f32 %v3054, 0.0
        %v3097 = vmax.f32 %v3056, 0.0
        %v3098 = vpack.c.bf16 %v3060, %v3058
        %v3099 = vpack.c.bf16 %v3061, %v3059
        %v3100 = vpack.c.bf16 %v3064, %v3062
        %v3101 = vpack.c.bf16 %v3065, %v3063
        %v3102 = vpack.c.bf16 %v3068, %v3066
        %v3103 = vpack.c.bf16 %v3069, %v3067
        %v3104 = vpack.c.bf16 %v3072, %v3070
        %v3105 = vpack.c.bf16 %v3073, %v3071
        %v3106 = vpack.c.bf16 %v3076, %v3074
        %v3107 = vpack.c.bf16 %v3077, %v3075
        %v3108 = vpack.c.bf16 %v3080, %v3078
        %v3109 = vpack.c.bf16 %v3081, %v3079
        %v3110 = vpack.c.bf16 %v3084, %v3082
        %v3111 = vpack.c.bf16 %v3085, %v3083
        %v3112 = vpack.c.bf16 %v3088, %v3086
        %v3113 = vpack.c.bf16 %v3089, %v3087
        %v3114 = vpack.c.bf16 %v3092, %v3090
        %v3115 = vpack.c.bf16 %v3093, %v3091
        %v3116 = vpack.c.bf16 %v3096, %v3094
        %v3117 = vpack.c.bf16 %v3097, %v3095
        %v3118 = vld [vmem:[#allocation5] sm:$0xf]
        %v3119 = vld [vmem:[#allocation5 + $0x4] sm:$0xf]
        %v3120 = vld [vmem:[#allocation5 + $0x8] sm:$0xf]
        %v3121 = vld [vmem:[#allocation5 + $0xc] sm:$0xf]
        %v3122 = vld [vmem:[#allocation5 + $0x10] sm:$0xf]
        %v3123 = vld [vmem:[#allocation5 + $0x14] sm:$0xf]
        %v3124 = vld [vmem:[#allocation5 + $0x18] sm:$0xf]
        %v3125 = vld [vmem:[#allocation5 + $0x1c] sm:$0xf]
        %v3126 = vld [vmem:[#allocation5 + $0x20] sm:$0xf]
        %v3127 = vld [vmem:[#allocation5 + $0x24] sm:$0xf]
        %v3128 = vld [vmem:[#allocation5 + $0x28] sm:$0xf]
        %v3129 = vld [vmem:[#allocation5 + $0x2c] sm:$0xf]
        %v3130 = vld [vmem:[#allocation5 + $0x30] sm:$0xf]
        %v3131 = vld [vmem:[#allocation5 + $0x34] sm:$0xf]
        %v3132 = vld [vmem:[#allocation5 + $0x38] sm:$0xf]
        %v3133 = vld [vmem:[#allocation5 + $0x3c] sm:$0xf]
        %v3134 = vld [vmem:[#allocation5 + $0x40] sm:$0xf]
        %v3135 = vld [vmem:[#allocation5 + $0x44] sm:$0xf]
        %v3136 = vld [vmem:[#allocation5 + $0x48] sm:$0xf]
        %v3137 = vld [vmem:[#allocation5 + $0x4c] sm:$0xf]
        %v3138 = vld [vmem:[#allocation5 + $0x50] sm:$0xf]
        %v3139 = vld [vmem:[#allocation5 + $0x54] sm:$0xf]
        %v3140 = vld [vmem:[#allocation5 + $0x58] sm:$0xf]
        %v3141 = vld [vmem:[#allocation5 + $0x5c] sm:$0xf]
        %v3142 = vld [vmem:[#allocation5 + $0x60] sm:$0xf]
        %v3143 = vld [vmem:[#allocation5 + $0x64] sm:$0xf]
        %v3144 = vld [vmem:[#allocation5 + $0x68] sm:$0xf]
        %v3145 = vld [vmem:[#allocation5 + $0x6c] sm:$0xf]
        %v3146 = vld [vmem:[#allocation5 + $0x70] sm:$0xf]
        %v3147 = vld [vmem:[#allocation5 + $0x74] sm:$0xf]
        %v3148 = vld [vmem:[#allocation5 + $0x78] sm:$0xf]
        %v3149 = vld [vmem:[#allocation5 + $0x7c] sm:$0xf]
        %v3150 = vld [vmem:[%s10] sm:$0x1]
        %v3152 = vlaneseq
        %v3153 = vshrl.u32 %v3152, 7
        %v3154 = vsub.s32 0, %v3153
        %v3155 = vrot.slane %v3150, %v3154
        %v3189 = vunpack.c.l.b16 %v3118
        %v3190 = vunpack.c.l.b16 %v3119
        %v3191 = vunpack.c.l.b16 %v3120
        %v3192 = vunpack.c.l.b16 %v3121
        %v3193 = vunpack.c.l.b16 %v3122
        %v3194 = vunpack.c.l.b16 %v3123
        %v3195 = vunpack.c.l.b16 %v3124
        %v3196 = vunpack.c.l.b16 %v3125
        %v3197 = vunpack.c.l.b16 %v3126
        %v3198 = vunpack.c.l.b16 %v3127
        %v3199 = vunpack.c.l.b16 %v3128
        %v3200 = vunpack.c.l.b16 %v3129
        %v3201 = vunpack.c.l.b16 %v3130
        %v3202 = vunpack.c.l.b16 %v3131
        %v3203 = vunpack.c.l.b16 %v3132
        %v3204 = vunpack.c.l.b16 %v3133
        %v3205 = vunpack.c.l.b16 %v3134
        %v3206 = vunpack.c.l.b16 %v3135
        %v3207 = vunpack.c.l.b16 %v3136
        %v3208 = vunpack.c.l.b16 %v3137
        %v3209 = vunpack.c.l.b16 %v3138
        %v3210 = vunpack.c.l.b16 %v3139
        %v3211 = vunpack.c.l.b16 %v3140
        %v3212 = vunpack.c.l.b16 %v3141
        %v3213 = vunpack.c.l.b16 %v3142
        %v3214 = vunpack.c.l.b16 %v3143
        %v3215 = vunpack.c.l.b16 %v3144
        %v3216 = vunpack.c.l.b16 %v3145
        %v3217 = vunpack.c.l.b16 %v3146
        %v3218 = vunpack.c.l.b16 %v3147
        %v3219 = vunpack.c.l.b16 %v3148
        %v3220 = vunpack.c.l.b16 %v3149
        %v3221 = vpack.c.b16 %v3190, %v3189
        %v3222 = vpack.c.b16 %v3192, %v3191
        %v3223 = vpack.c.b16 %v3194, %v3193
        %v3224 = vpack.c.b16 %v3196, %v3195
        %v3225 = vpack.c.b16 %v3198, %v3197
        %v3226 = vpack.c.b16 %v3200, %v3199
        %v3227 = vpack.c.b16 %v3202, %v3201
        %v3228 = vpack.c.b16 %v3204, %v3203
        %v3229 = vpack.c.b16 %v3206, %v3205
        %v3230 = vpack.c.b16 %v3208, %v3207
        %v3231 = vpack.c.b16 %v3210, %v3209
        %v3232 = vpack.c.b16 %v3212, %v3211
        %v3233 = vpack.c.b16 %v3214, %v3213
        %v3234 = vpack.c.b16 %v3216, %v3215
        %v3235 = vpack.c.b16 %v3218, %v3217
        %v3236 = vpack.c.b16 %v3220, %v3219
        %3253 = vmatprep.subr.bf16.mxu0 0
        %3254 = vmatpush1.bf16.msra.mxu0 %v3221
        %3255 = vmatprep.subr.bf16.mxu0 0
        %3256 = vmatpush1.bf16.msra.mxu0 %v3222
        %3257 = vmatprep.subr.bf16.mxu0 0
        %3258 = vmatpush1.bf16.msra.mxu0 %v3223
        %3259 = vmatprep.subr.bf16.mxu0 0
        %3260 = vmatpush1.bf16.msra.mxu0 %v3224
        %3261 = vmatprep.subr.bf16.mxu0 0
        %3262 = vmatpush1.bf16.msra.mxu0 %v3225
        %3263 = vmatprep.subr.bf16.mxu0 0
        %3264 = vmatpush1.bf16.msra.mxu0 %v3226
        %3265 = vmatprep.subr.bf16.mxu0 0
        %3266 = vmatpush1.bf16.msra.mxu0 %v3227
        %3267 = vmatprep.subr.bf16.mxu0 0
        %3268 = vmatpush1.bf16.msra.mxu0 %v3228
        %3269 = vmatprep.subr.bf16.mxu0 0
        %3270 = vmatpush1.bf16.msra.mxu0 %v3229
        %3271 = vmatprep.subr.bf16.mxu0 0
        %3272 = vmatpush1.bf16.msra.mxu0 %v3230
        %3273 = vmatprep.subr.bf16.mxu0 0
        %3274 = vmatpush1.bf16.msra.mxu0 %v3231
        %3275 = vmatprep.subr.bf16.mxu0 0
        %3276 = vmatpush1.bf16.msra.mxu0 %v3232
        %3277 = vmatprep.subr.bf16.mxu0 0
        %3278 = vmatpush1.bf16.msra.mxu0 %v3233
        %3279 = vmatprep.subr.bf16.mxu0 0
        %3280 = vmatpush1.bf16.msra.mxu0 %v3234
        %3281 = vmatprep.subr.bf16.mxu0 0
        %3282 = vmatpush1.bf16.msra.mxu0 %v3235
        %3283 = vmatprep.subr.bf16.mxu0 0
        %3284 = vmatpush1.bf16.msra.mxu0 %v3236
        %3285 = vmatprep.mubr.bf16.mxu0 %v3099
        %3286 = vmatmul.mubr.bf16.gmra.mrb[0].mxu0 %v3098
        %v3287 = vpop.f32.mrb[0].mxu0
        %v3288 = vadd.f32 %v3155, %v3287
        %v3289 = vpop.f32.mrb[0].mxu0
        %v3290 = vpop.f32.mrb[0].mxu0
        %v3291 = vadd.f32 %v3155, %v3290
        %v3292 = vpop.f32.mrb[0].mxu0
        %3293 = vmatprep.mubr.bf16.mxu0 %v3101
        %3294 = vmatmul.mubr.bf16.gmra.mrb[0].mxu0 %v3100
        %v3295 = vpop.f32.mrb[0].mxu0
        %v3296 = vadd.f32 %v3155, %v3295
        %v3297 = vpop.f32.mrb[0].mxu0
        %v3298 = vpop.f32.mrb[0].mxu0
        %v3299 = vadd.f32 %v3155, %v3298
        %v3300 = vpop.f32.mrb[0].mxu0
        %3301 = vmatprep.mubr.bf16.mxu0 %v3103
        %3302 = vmatmul.mubr.bf16.gmra.mrb[0].mxu0 %v3102
        %v3303 = vpop.f32.mrb[0].mxu0
        %v3304 = vadd.f32 %v3155, %v3303
        %v3305 = vpop.f32.mrb[0].mxu0
        %v3306 = vpop.f32.mrb[0].mxu0
        %v3307 = vadd.f32 %v3155, %v3306
        %v3308 = vpop.f32.mrb[0].mxu0
        %3309 = vmatprep.mubr.bf16.mxu0 %v3105
        %3310 = vmatmul.mubr.bf16.gmra.mrb[0].mxu0 %v3104
        %v3311 = vpop.f32.mrb[0].mxu0
        %v3312 = vadd.f32 %v3155, %v3311
        %v3313 = vpop.f32.mrb[0].mxu0
        %v3314 = vpop.f32.mrb[0].mxu0
        %v3315 = vadd.f32 %v3155, %v3314
        %v3316 = vpop.f32.mrb[0].mxu0
        %3317 = vmatprep.mubr.bf16.mxu0 %v3107
        %3318 = vmatmul.mubr.bf16.gmra.mrb[0].mxu0 %v3106
        %v3319 = vpop.f32.mrb[0].mxu0
        %v3320 = vadd.f32 %v3155, %v3319
        %v3321 = vpop.f32.mrb[0].mxu0
        %v3322 = vpop.f32.mrb[0].mxu0
        %v3323 = vadd.f32 %v3155, %v3322
        %v3324 = vpop.f32.mrb[0].mxu0
        %3325 = vmatprep.mubr.bf16.mxu0 %v3109
        %3326 = vmatmul.mubr.bf16.gmra.mrb[0].mxu0 %v3108
        %v3327 = vpop.f32.mrb[0].mxu0
        %v3328 = vadd.f32 %v3155, %v3327
        %v3329 = vpop.f32.mrb[0].mxu0
        %v3330 = vpop.f32.mrb[0].mxu0
        %v3331 = vadd.f32 %v3155, %v3330
        %v3332 = vpop.f32.mrb[0].mxu0
        %3333 = vmatprep.mubr.bf16.mxu0 %v3111
        %3334 = vmatmul.mubr.bf16.gmra.mrb[0].mxu0 %v3110
        %v3335 = vpop.f32.mrb[0].mxu0
        %v3336 = vadd.f32 %v3155, %v3335
        %v3337 = vpop.f32.mrb[0].mxu0
        %v3338 = vpop.f32.mrb[0].mxu0
        %v3339 = vadd.f32 %v3155, %v3338
        %v3340 = vpop.f32.mrb[0].mxu0
        %3341 = vmatprep.mubr.bf16.mxu0 %v3113
        %3342 = vmatmul.mubr.bf16.gmra.mrb[0].mxu0 %v3112
        %v3343 = vpop.f32.mrb[0].mxu0
        %v3344 = vadd.f32 %v3155, %v3343
        %v3345 = vpop.f32.mrb[0].mxu0
        %v3346 = vpop.f32.mrb[0].mxu0
        %v3347 = vadd.f32 %v3155, %v3346
        %v3348 = vpop.f32.mrb[0].mxu0
        %3349 = vmatprep.mubr.bf16.mxu0 %v3115
        %3350 = vmatmul.mubr.bf16.gmra.mrb[0].mxu0 %v3114
        %v3351 = vpop.f32.mrb[0].mxu0
        %v3352 = vadd.f32 %v3155, %v3351
        %v3353 = vpop.f32.mrb[0].mxu0
        %v3354 = vpop.f32.mrb[0].mxu0
        %v3355 = vadd.f32 %v3155, %v3354
        %v3356 = vpop.f32.mrb[0].mxu0
        %3357 = vmatprep.mubr.bf16.mxu0 %v3117
        %3358 = vmatmul.mubr.bf16.gmra.mrb[0].mxu0 %v3116
        %v3359 = vpop.f32.mrb[0].mxu0
        %v3360 = vadd.f32 %v3155, %v3359
        %v3361 = vpop.f32.mrb[0].mxu0
        %v3362 = vpop.f32.mrb[0].mxu0
        %v3363 = vadd.f32 %v3155, %v3362
        %v3364 = vpop.f32.mrb[0].mxu0
        %3365 = vdwg.mxu0
        %v3366 = vmul.f32 %v3288, %v2791
        %v3367 = vmul.f32 %v3291, %v2792
        %v3368 = vmul.f32 %v3296, %v2793
        %v3369 = vmul.f32 %v3299, %v2794
        %v3370 = vmul.f32 %v3304, %v2795
        %v3371 = vmul.f32 %v3307, %v2796
        %v3372 = vmul.f32 %v3312, %v2797
        %v3373 = vmul.f32 %v3315, %v2798
        %v3374 = vmul.f32 %v3320, %v2799
        %v3375 = vmul.f32 %v3323, %v2800
        %v3376 = vmul.f32 %v3328, %v2801
        %v3377 = vmul.f32 %v3331, %v2802
        %v3378 = vmul.f32 %v3336, %v2803
        %v3379 = vmul.f32 %v3339, %v2804
        %v3380 = vmul.f32 %v3344, %v2805
        %v3381 = vmul.f32 %v3347, %v2806
        %v3382 = vmul.f32 %v3352, %v2807
        %v3383 = vmul.f32 %v3355, %v2808
        %v3384 = vmul.f32 %v3360, %v2809
        %v3385 = vmul.f32 %v3363, %v2810
        %v3386 = vld [vmem:[%s11] sm:$0x1]
        %v3387 = vld [vmem:[%s12] sm:$0x1]
        %3388 = vadd.xlane.f32.xlu0 %v3366
        %v3389 = vpop.xlane.xlu0 %3388
        %3390 = vadd.xlane.f32.xlu0 %v3367
        %v3391 = vpop.xlane.xlu0 %3390
        %3392 = vadd.xlane.f32.xlu0 %v3368
        %v3393 = vpop.xlane.xlu0 %3392
        %3394 = vadd.xlane.f32.xlu0 %v3369
        %v3395 = vpop.xlane.xlu0 %3394
        %3396 = vadd.xlane.f32.xlu0 %v3370
        %v3397 = vpop.xlane.xlu0 %3396
        %3398 = vadd.xlane.f32.xlu0 %v3371
        %v3399 = vpop.xlane.xlu0 %3398
        %3400 = vadd.xlane.f32.xlu0 %v3372
        %v3401 = vpop.xlane.xlu0 %3400
        %3402 = vadd.xlane.f32.xlu0 %v3373
        %v3403 = vpop.xlane.xlu0 %3402
        %3404 = vadd.xlane.f32.xlu0 %v3374
        %v3405 = vpop.xlane.xlu0 %3404
        %3406 = vadd.xlane.f32.xlu0 %v3375
        %v3407 = vpop.xlane.xlu0 %3406
        %3408 = vadd.xlane.f32.xlu0 %v3376
        %v3409 = vpop.xlane.xlu0 %3408
        %3410 = vadd.xlane.f32.xlu0 %v3377
        %v3411 = vpop.xlane.xlu0 %3410
        %3412 = vadd.xlane.f32.xlu0 %v3378
        %v3413 = vpop.xlane.xlu0 %3412
        %3414 = vadd.xlane.f32.xlu0 %v3379
        %v3415 = vpop.xlane.xlu0 %3414
        %3416 = vadd.xlane.f32.xlu0 %v3380
        %v3417 = vpop.xlane.xlu0 %3416
        %3418 = vadd.xlane.f32.xlu0 %v3381
        %v3419 = vpop.xlane.xlu0 %3418
        %3420 = vadd.xlane.f32.xlu0 %v3382
        %v3421 = vpop.xlane.xlu0 %3420
        %3422 = vadd.xlane.f32.xlu0 %v3383
        %v3423 = vpop.xlane.xlu0 %3422
        %3424 = vadd.xlane.f32.xlu0 %v3384
        %v3425 = vpop.xlane.xlu0 %3424
        %3426 = vadd.xlane.f32.xlu0 %v3385
        %v3427 = vpop.xlane.xlu0 %3426
        %v3428 = vmul.f32 %v3389, %v538
        %v3429 = vmul.f32 %v3391, %v538
        %v3430 = vmul.f32 %v3393, %v538
        %v3431 = vmul.f32 %v3395, %v538
        %v3432 = vmul.f32 %v3397, %v538
        %v3433 = vmul.f32 %v3399, %v538
        %v3434 = vmul.f32 %v3401, %v538
        %v3435 = vmul.f32 %v3403, %v538
        %v3436 = vmul.f32 %v3405, %v538
        %v3437 = vmul.f32 %v3407, %v538
        %v3438 = vmul.f32 %v3409, %v538
        %v3439 = vmul.f32 %v3411, %v538
        %v3440 = vmul.f32 %v3413, %v538
        %v3441 = vmul.f32 %v3415, %v538
        %v3442 = vmul.f32 %v3417, %v538
        %v3443 = vmul.f32 %v3419, %v538
        %v3444 = vmul.f32 %v3421, %v538
        %v3445 = vmul.f32 %v3423, %v538
        %v3446 = vmul.f32 %v3425, %v538
        %v3447 = vmul.f32 %v3427, %v538
        %v3448 = vsub.f32 %v3366, %v3428
        %v3449 = vsub.f32 %v3367, %v3429
        %v3450 = vsub.f32 %v3368, %v3430
        %v3451 = vsub.f32 %v3369, %v3431
        %v3452 = vsub.f32 %v3370, %v3432
        %v3453 = vsub.f32 %v3371, %v3433
        %v3454 = vsub.f32 %v3372, %v3434
        %v3455 = vsub.f32 %v3373, %v3435
        %v3456 = vsub.f32 %v3374, %v3436
        %v3457 = vsub.f32 %v3375, %v3437
        %v3458 = vsub.f32 %v3376, %v3438
        %v3459 = vsub.f32 %v3377, %v3439
        %v3460 = vsub.f32 %v3378, %v3440
        %v3461 = vsub.f32 %v3379, %v3441
        %v3462 = vsub.f32 %v3380, %v3442
        %v3463 = vsub.f32 %v3381, %v3443
        %v3464 = vsub.f32 %v3382, %v3444
        %v3465 = vsub.f32 %v3383, %v3445
        %v3466 = vsub.f32 %v3384, %v3446
        %v3467 = vsub.f32 %v3385, %v3447
        %v3468 = vmul.f32 %v3448, %v3448
        %v3469 = vmul.f32 %v3449, %v3449
        %v3470 = vmul.f32 %v3450, %v3450
        %v3471 = vmul.f32 %v3451, %v3451
        %v3472 = vmul.f32 %v3452, %v3452
        %v3473 = vmul.f32 %v3453, %v3453
        %v3474 = vmul.f32 %v3454, %v3454
        %v3475 = vmul.f32 %v3455, %v3455
        %v3476 = vmul.f32 %v3456, %v3456
        %v3477 = vmul.f32 %v3457, %v3457
        %v3478 = vmul.f32 %v3458, %v3458
        %v3479 = vmul.f32 %v3459, %v3459
        %v3480 = vmul.f32 %v3460, %v3460
        %v3481 = vmul.f32 %v3461, %v3461
        %v3482 = vmul.f32 %v3462, %v3462
        %v3483 = vmul.f32 %v3463, %v3463
        %v3484 = vmul.f32 %v3464, %v3464
        %v3485 = vmul.f32 %v3465, %v3465
        %v3486 = vmul.f32 %v3466, %v3466
        %v3487 = vmul.f32 %v3467, %v3467
        %3488 = vadd.xlane.f32.xlu0 %v3468
        %v3489 = vpop.xlane.xlu0 %3488
        %3490 = vadd.xlane.f32.xlu0 %v3469
        %v3491 = vpop.xlane.xlu0 %3490
        %3492 = vadd.xlane.f32.xlu0 %v3470
        %v3493 = vpop.xlane.xlu0 %3492
        %3494 = vadd.xlane.f32.xlu0 %v3471
        %v3495 = vpop.xlane.xlu0 %3494
        %3496 = vadd.xlane.f32.xlu0 %v3472
        %v3497 = vpop.xlane.xlu0 %3496
        %3498 = vadd.xlane.f32.xlu0 %v3473
        %v3499 = vpop.xlane.xlu0 %3498
        %3500 = vadd.xlane.f32.xlu0 %v3474
        %v3501 = vpop.xlane.xlu0 %3500
        %3502 = vadd.xlane.f32.xlu0 %v3475
        %v3503 = vpop.xlane.xlu0 %3502
        %3504 = vadd.xlane.f32.xlu0 %v3476
        %v3505 = vpop.xlane.xlu0 %3504
        %3506 = vadd.xlane.f32.xlu0 %v3477
        %v3507 = vpop.xlane.xlu0 %3506
        %3508 = vadd.xlane.f32.xlu0 %v3478
        %v3509 = vpop.xlane.xlu0 %3508
        %3510 = vadd.xlane.f32.xlu0 %v3479
        %v3511 = vpop.xlane.xlu0 %3510
        %3512 = vadd.xlane.f32.xlu0 %v3480
        %v3513 = vpop.xlane.xlu0 %3512
        %3514 = vadd.xlane.f32.xlu0 %v3481
        %v3515 = vpop.xlane.xlu0 %3514
        %3516 = vadd.xlane.f32.xlu0 %v3482
        %v3517 = vpop.xlane.xlu0 %3516
        %3518 = vadd.xlane.f32.xlu0 %v3483
        %v3519 = vpop.xlane.xlu0 %3518
        %3520 = vadd.xlane.f32.xlu0 %v3484
        %v3521 = vpop.xlane.xlu0 %3520
        %3522 = vadd.xlane.f32.xlu0 %v3485
        %v3523 = vpop.xlane.xlu0 %3522
        %3524 = vadd.xlane.f32.xlu0 %v3486
        %v3525 = vpop.xlane.xlu0 %3524
        %3526 = vadd.xlane.f32.xlu0 %v3487
        %v3527 = vpop.xlane.xlu0 %3526
        %v3528 = vmul.f32 %v3489, %v538
        %v3529 = vmul.f32 %v3491, %v538
        %v3530 = vmul.f32 %v3493, %v538
        %v3531 = vmul.f32 %v3495, %v538
        %v3532 = vmul.f32 %v3497, %v538
        %v3533 = vmul.f32 %v3499, %v538
        %v3534 = vmul.f32 %v3501, %v538
        %v3535 = vmul.f32 %v3503, %v538
        %v3536 = vmul.f32 %v3505, %v538
        %v3537 = vmul.f32 %v3507, %v538
        %v3538 = vmul.f32 %v3509, %v538
        %v3539 = vmul.f32 %v3511, %v538
        %v3540 = vmul.f32 %v3513, %v538
        %v3541 = vmul.f32 %v3515, %v538
        %v3542 = vmul.f32 %v3517, %v538
        %v3543 = vmul.f32 %v3519, %v538
        %v3544 = vmul.f32 %v3521, %v538
        %v3545 = vmul.f32 %v3523, %v538
        %v3546 = vmul.f32 %v3525, %v538
        %v3547 = vmul.f32 %v3527, %v538
        %v3548 = vadd.f32 %v3528, 1e-05
        %v3549 = vadd.f32 %v3529, 1e-05
        %v3550 = vadd.f32 %v3530, 1e-05
        %v3551 = vadd.f32 %v3531, 1e-05
        %v3552 = vadd.f32 %v3532, 1e-05
        %v3553 = vadd.f32 %v3533, 1e-05
        %v3554 = vadd.f32 %v3534, 1e-05
        %v3555 = vadd.f32 %v3535, 1e-05
        %v3556 = vadd.f32 %v3536, 1e-05
        %v3557 = vadd.f32 %v3537, 1e-05
        %v3558 = vadd.f32 %v3538, 1e-05
        %v3559 = vadd.f32 %v3539, 1e-05
        %v3560 = vadd.f32 %v3540, 1e-05
        %v3561 = vadd.f32 %v3541, 1e-05
        %v3562 = vadd.f32 %v3542, 1e-05
        %v3563 = vadd.f32 %v3543, 1e-05
        %v3564 = vadd.f32 %v3544, 1e-05
        %v3565 = vadd.f32 %v3545, 1e-05
        %v3566 = vadd.f32 %v3546, 1e-05
        %v3567 = vadd.f32 %v3547, 1e-05
        %v3568 = vrsqrt.pop %v3548
        %v3569 = vrsqrt.pop %v3549
        %v3570 = vrsqrt.pop %v3550
        %v3571 = vrsqrt.pop %v3551
        %v3572 = vrsqrt.pop %v3552
        %v3573 = vrsqrt.pop %v3553
        %v3574 = vrsqrt.pop %v3554
        %v3575 = vrsqrt.pop %v3555
        %v3576 = vrsqrt.pop %v3556
        %v3577 = vrsqrt.pop %v3557
        %v3578 = vrsqrt.pop %v3558
        %v3579 = vrsqrt.pop %v3559
        %v3580 = vrsqrt.pop %v3560
        %v3581 = vrsqrt.pop %v3561
        %v3582 = vrsqrt.pop %v3562
        %v3583 = vrsqrt.pop %v3563
        %v3584 = vrsqrt.pop %v3564
        %v3585 = vrsqrt.pop %v3565
        %v3586 = vrsqrt.pop %v3566
        %v3587 = vrsqrt.pop %v3567
        %v3588 = vmul.f32 %v3448, %v3568
        %v3589 = vmul.f32 %v3449, %v3569
        %v3590 = vmul.f32 %v3450, %v3570
        %v3591 = vmul.f32 %v3451, %v3571
        %v3592 = vmul.f32 %v3452, %v3572
        %v3593 = vmul.f32 %v3453, %v3573
        %v3594 = vmul.f32 %v3454, %v3574
        %v3595 = vmul.f32 %v3455, %v3575
        %v3596 = vmul.f32 %v3456, %v3576
        %v3597 = vmul.f32 %v3457, %v3577
        %v3598 = vmul.f32 %v3458, %v3578
        %v3599 = vmul.f32 %v3459, %v3579
        %v3600 = vmul.f32 %v3460, %v3580
        %v3601 = vmul.f32 %v3461, %v3581
        %v3602 = vmul.f32 %v3462, %v3582
        %v3603 = vmul.f32 %v3463, %v3583
        %v3604 = vmul.f32 %v3464, %v3584
        %v3605 = vmul.f32 %v3465, %v3585
        %v3606 = vmul.f32 %v3466, %v3586
        %v3607 = vmul.f32 %v3467, %v3587
        %v3609 = vlaneseq
        %v3610 = vshrl.u32 %v3609, 7
        %v3611 = vsub.s32 0, %v3610
        %v3612 = vrot.slane %v3386, %v3611
        %v3614 = vmul.f32 %v3588, %v3612
        %v3615 = vmul.f32 %v3589, %v3612
        %v3616 = vmul.f32 %v3590, %v3612
        %v3617 = vmul.f32 %v3591, %v3612
        %v3618 = vmul.f32 %v3592, %v3612
        %v3619 = vmul.f32 %v3593, %v3612
        %v3620 = vmul.f32 %v3594, %v3612
        %v3621 = vmul.f32 %v3595, %v3612
        %v3622 = vmul.f32 %v3596, %v3612
        %v3623 = vmul.f32 %v3597, %v3612
        %v3624 = vmul.f32 %v3598, %v3612
        %v3625 = vmul.f32 %v3599, %v3612
        %v3626 = vmul.f32 %v3600, %v3612
        %v3627 = vmul.f32 %v3601, %v3612
        %v3628 = vmul.f32 %v3602, %v3612
        %v3629 = vmul.f32 %v3603, %v3612
        %v3630 = vmul.f32 %v3604, %v3612
        %v3631 = vmul.f32 %v3605, %v3612
        %v3632 = vmul.f32 %v3606, %v3612
        %v3633 = vmul.f32 %v3607, %v3612
        %v3635 = vlaneseq
        %v3636 = vshrl.u32 %v3635, 7
        %v3637 = vsub.s32 0, %v3636
        %v3638 = vrot.slane %v3387, %v3637
        %v3640 = vadd.f32 %v3614, %v3638
        %v3641 = vadd.f32 %v3615, %v3638
        %v3642 = vadd.f32 %v3616, %v3638
        %v3643 = vadd.f32 %v3617, %v3638
        %v3644 = vadd.f32 %v3618, %v3638
        %v3645 = vadd.f32 %v3619, %v3638
        %v3646 = vadd.f32 %v3620, %v3638
        %v3647 = vadd.f32 %v3621, %v3638
        %v3648 = vadd.f32 %v3622, %v3638
        %v3649 = vadd.f32 %v3623, %v3638
        %v3650 = vadd.f32 %v3624, %v3638
        %v3651 = vadd.f32 %v3625, %v3638
        %v3652 = vadd.f32 %v3626, %v3638
        %v3653 = vadd.f32 %v3627, %v3638
        %v3654 = vadd.f32 %v3628, %v3638
        %v3655 = vadd.f32 %v3629, %v3638
        %v3656 = vadd.f32 %v3630, %v3638
        %v3657 = vadd.f32 %v3631, %v3638
        %v3658 = vadd.f32 %v3632, %v3638
        %v3659 = vadd.f32 %v3633, %v3638
        %v3660 = vsub.f32 0.0, %v3640
        %v3661 = vsub.f32 0.0, %v3641
        %v3662 = vsub.f32 0.0, %v3642
        %v3663 = vsub.f32 0.0, %v3643
        %v3664 = vsub.f32 0.0, %v3644
        %v3665 = vsub.f32 0.0, %v3645
        %v3666 = vsub.f32 0.0, %v3646
        %v3667 = vsub.f32 0.0, %v3647
        %v3668 = vsub.f32 0.0, %v3648
        %v3669 = vsub.f32 0.0, %v3649
        %v3670 = vsub.f32 0.0, %v3650
        %v3671 = vsub.f32 0.0, %v3651
        %v3672 = vsub.f32 0.0, %v3652
        %v3673 = vsub.f32 0.0, %v3653
        %v3674 = vsub.f32 0.0, %v3654
        %v3675 = vsub.f32 0.0, %v3655
        %v3676 = vsub.f32 0.0, %v3656
        %v3677 = vsub.f32 0.0, %v3657
        %v3678 = vsub.f32 0.0, %v3658
        %v3679 = vsub.f32 0.0, %v3659
        %v3680 = vmul.f32 %v3660, 1.442695
        %v3681 = vpow.pop %v3680
        %v3682 = vmul.f32 %v3661, 1.442695
        %v3683 = vpow.pop %v3682
        %v3684 = vmul.f32 %v3662, 1.442695
        %v3685 = vpow.pop %v3684
        %v3686 = vmul.f32 %v3663, 1.442695
        %v3687 = vpow.pop %v3686
        %v3688 = vmul.f32 %v3664, 1.442695
        %v3689 = vpow.pop %v3688
        %v3690 = vmul.f32 %v3665, 1.442695
        %v3691 = vpow.pop %v3690
        %v3692 = vmul.f32 %v3666, 1.442695
        %v3693 = vpow.pop %v3692
        %v3694 = vmul.f32 %v3667, 1.442695
        %v3695 = vpow.pop %v3694
        %v3696 = vmul.f32 %v3668, 1.442695
        %v3697 = vpow.pop %v3696
        %v3698 = vmul.f32 %v3669, 1.442695
        %v3699 = vpow.pop %v3698
        %v3700 = vmul.f32 %v3670, 1.442695
        %v3701 = vpow.pop %v3700
        %v3702 = vmul.f32 %v3671, 1.442695
        %v3703 = vpow.pop %v3702
        %v3704 = vmul.f32 %v3672, 1.442695
        %v3705 = vpow.pop %v3704
        %v3706 = vmul.f32 %v3673, 1.442695
        %v3707 = vpow.pop %v3706
        %v3708 = vmul.f32 %v3674, 1.442695
        %v3709 = vpow.pop %v3708
        %v3710 = vmul.f32 %v3675, 1.442695
        %v3711 = vpow.pop %v3710
        %v3712 = vmul.f32 %v3676, 1.442695
        %v3713 = vpow.pop %v3712
        %v3714 = vmul.f32 %v3677, 1.442695
        %v3715 = vpow.pop %v3714
        %v3716 = vmul.f32 %v3678, 1.442695
        %v3717 = vpow.pop %v3716
        %v3718 = vmul.f32 %v3679, 1.442695
        %v3719 = vpow.pop %v3718
        %v3720 = vadd.f32 %v3681, 1.0
        %v3721 = vadd.f32 %v3683, 1.0
        %v3722 = vadd.f32 %v3685, 1.0
        %v3723 = vadd.f32 %v3687, 1.0
        %v3724 = vadd.f32 %v3689, 1.0
        %v3725 = vadd.f32 %v3691, 1.0
        %v3726 = vadd.f32 %v3693, 1.0
        %v3727 = vadd.f32 %v3695, 1.0
        %v3728 = vadd.f32 %v3697, 1.0
        %v3729 = vadd.f32 %v3699, 1.0
        %v3730 = vadd.f32 %v3701, 1.0
        %v3731 = vadd.f32 %v3703, 1.0
        %v3732 = vadd.f32 %v3705, 1.0
        %v3733 = vadd.f32 %v3707, 1.0
        %v3734 = vadd.f32 %v3709, 1.0
        %v3735 = vadd.f32 %v3711, 1.0
        %v3736 = vadd.f32 %v3713, 1.0
        %v3737 = vadd.f32 %v3715, 1.0
        %v3738 = vadd.f32 %v3717, 1.0
        %v3739 = vadd.f32 %v3719, 1.0
        %v3740 = vrcp.pop %v3720
        %v3741 = vrcp.pop %v3721
        %v3742 = vrcp.pop %v3722
        %v3743 = vrcp.pop %v3723
        %v3744 = vrcp.pop %v3724
        %v3745 = vrcp.pop %v3725
        %v3746 = vrcp.pop %v3726
        %v3747 = vrcp.pop %v3727
        %v3748 = vrcp.pop %v3728
        %v3749 = vrcp.pop %v3729
        %v3750 = vrcp.pop %v3730
        %v3751 = vrcp.pop %v3731
        %v3752 = vrcp.pop %v3732
        %v3753 = vrcp.pop %v3733
        %v3754 = vrcp.pop %v3734
        %v3755 = vrcp.pop %v3735
        %v3756 = vrcp.pop %v3736
        %v3757 = vrcp.pop %v3737
        %v3758 = vrcp.pop %v3738
        %v3759 = vrcp.pop %v3739
        %v3760 = vmul.f32 %v3640, %v3740
        %v3761 = vmul.f32 %v3641, %v3741
        %v3762 = vmul.f32 %v3642, %v3742
        %v3763 = vmul.f32 %v3643, %v3743
        %v3764 = vmul.f32 %v3644, %v3744
        %v3765 = vmul.f32 %v3645, %v3745
        %v3766 = vmul.f32 %v3646, %v3746
        %v3767 = vmul.f32 %v3647, %v3747
        %v3768 = vmul.f32 %v3648, %v3748
        %v3769 = vmul.f32 %v3649, %v3749
        %v3770 = vmul.f32 %v3650, %v3750
        %v3771 = vmul.f32 %v3651, %v3751
        %v3772 = vmul.f32 %v3652, %v3752
        %v3773 = vmul.f32 %v3653, %v3753
        %v3774 = vmul.f32 %v3654, %v3754
        %v3775 = vmul.f32 %v3655, %v3755
        %v3776 = vmul.f32 %v3656, %v3756
        %v3777 = vmul.f32 %v3657, %v3757
        %v3778 = vmul.f32 %v3658, %v3758
        %v3779 = vmul.f32 %v3659, %v3759
        %v3780 = vadd.f32 %v3760, %v476
        %v3781 = vadd.f32 %v3761, %v477
        %v3782 = vadd.f32 %v3762, %v478
        %v3783 = vadd.f32 %v3763, %v479
        %v3784 = vadd.f32 %v3764, %v480
        %v3785 = vadd.f32 %v3765, %v481
        %v3786 = vadd.f32 %v3766, %v482
        %v3787 = vadd.f32 %v3767, %v483
        %v3788 = vadd.f32 %v3768, %v484
        %v3789 = vadd.f32 %v3769, %v485
        %v3790 = vadd.f32 %v3770, %v486
        %v3791 = vadd.f32 %v3771, %v487
        %v3792 = vadd.f32 %v3772, %v488
        %v3793 = vadd.f32 %v3773, %v489
        %v3794 = vadd.f32 %v3774, %v490
        %v3795 = vadd.f32 %v3775, %v491
        %v3796 = vadd.f32 %v3776, %v492
        %v3797 = vadd.f32 %v3777, %v493
        %v3798 = vadd.f32 %v3778, %v494
        %v3799 = vadd.f32 %v3779, %v495
        %3800 = vst [vmem:[%s466] sm:$0xff] %v3780
        %3801 = vst [vmem:[%s466 + $0x8] sm:$0xff] %v3781
        %3802 = vst [vmem:[%s466 + $0x10] sm:$0xff] %v3782
        %3803 = vst [vmem:[%s466 + $0x18] sm:$0xff] %v3783
        %3804 = vst [vmem:[%s466 + $0x20] sm:$0xff] %v3784
        %3805 = vst [vmem:[%s466 + $0x28] sm:$0xff] %v3785
        %3806 = vst [vmem:[%s466 + $0x30] sm:$0xff] %v3786
        %3807 = vst [vmem:[%s466 + $0x38] sm:$0xff] %v3787
        %3808 = vst [vmem:[%s466 + $0x40] sm:$0xff] %v3788
        %3809 = vst [vmem:[%s466 + $0x48] sm:$0xff] %v3789
        %3810 = vst [vmem:[%s466 + $0x50] sm:$0xff] %v3790
        %3811 = vst [vmem:[%s466 + $0x58] sm:$0xff] %v3791
        %3812 = vst [vmem:[%s466 + $0x60] sm:$0xff] %v3792
        %3813 = vst [vmem:[%s466 + $0x68] sm:$0xff] %v3793
        %3814 = vst [vmem:[%s466 + $0x70] sm:$0xff] %v3794
        %3815 = vst [vmem:[%s466 + $0x78] sm:$0xff] %v3795
        %3816 = vst [vmem:[%s466 + $0x80] sm:$0xff] %v3796
        %3817 = vst [vmem:[%s466 + $0x88] sm:$0xff] %v3797
        %3818 = vst [vmem:[%s466 + $0x90] sm:$0xff] %v3798
        %3819 = vst [vmem:[%s466 + $0x98] sm:$0xff] %v3799
        %s3820 = sand.u32 %s315, 1
        %s3821 = scalar_lea.sflag [#allocation4], %s3820
        %s3822 = sand.u32 %s315, 1
        %s3823 = smul.addr %s3822, 160
        %s3824 = scalar_lea.vmem [#allocation7], %s3823
        // Predicated region
        $region81: #{tpu_custom_call.1} parent=71 // pred_check
          %p3825 = pneg %p325
        $region82: #{tpu_custom_call.1} parent=71 // pred_check_branch
          %3827 = sbr.rel (%p3825) target = $region84
        $region83: #{tpu_custom_call.1} parent=71 // pred_region
          %s3828 = smul.u32 4, %s29
          %s3830 = ssub.s32 2560, 2560
          %3831 = vsyncadd %s3821, %s3830
          %s3832 = smul.addr %s3828, 5
          %s3833 = smul.addr %s3832, 128
          %s3834 = scalar_lea.hbm %s13, %s3833
          %s3835 = sshll.u32 %s3824, 4
          %s3836 = int_to_ptr.vmem [resolvable:$true] %s3835
          %3841 = dma.vmem_to_hbm [thread:$0]  %s3836, 2560, %s3834, %s3821, 128, 128, 8
        $region84: #{tpu_custom_call.1} parent=71 // pred_fallthru
          _
      $region72: #{tpu_custom_call.1} parent=5 // pred_fallthru
        _
      %p3842 = scmp.le.s32.totalorder 2, %s24
      // Predicated region
      $region85: #{tpu_custom_call.1} parent=5 // pred_check
        %p3843 = pneg %p3842
      $region86: #{tpu_custom_call.1} parent=5 // pred_check_branch
        %3845 = sbr.rel (%p3843) target = $region88
      $region87: #{tpu_custom_call.1} parent=5 // pred_region
        %s3846 = ssub.s32 %s24, 2
        // Predicated region
        $region89: #{tpu_custom_call.1} parent=87 // pred_check
          %p3847 = pneg %p331
        $region90: #{tpu_custom_call.1} parent=87 // pred_check_branch
          %3849 = sbr.rel (%p3847) target = $region92
        $region91: #{tpu_custom_call.1} parent=87 // pred_region
          %s3850 = sand.u32 %s316, 1
          %s3851 = scalar_lea.sflag [#allocation4], %s3850
          %s3852 = sand.u32 %s316, 1
          %s3853 = smul.addr %s3852, 160
          %s3854 = scalar_lea.vmem [#allocation7], %s3853
          %3855 = dma.done %s3851, 2560
        $region92: #{tpu_custom_call.1} parent=87 // pred_fallthru
          _
      $region88: #{tpu_custom_call.1} parent=5 // pred_fallthru
        _
    $region6: #{tpu_custom_call.1} parent=1 // loop_footer
      %s28 = sadd.s32 1, %s24
    $region7: #{tpu_custom_call.1} parent=1 // loop_footer_branch
      %23 = sbr.rel target = $region3
    $region8: #{tpu_custom_call.1} parent=1 // loop_exit
      _
    %3856 = vsyncpa [#allocation3], 1
    %s3857 = scalar_lea.sflag [#allocation3], 1
    %3858 = vsyncpa %s3857, 1
    %3859 = vsyncpa [#allocation6], 1
    %3860 = vsyncpa [#allocation4], 1
    %s3861 = scalar_lea.sflag [#allocation4], 1
    %3862 = vsyncpa %s3861, 1

</llo_original>
